<compile_context>
chip_gen: v7x
topology: tpu7x:2x2x1
jax: 0.10.0
libtpu: 0.0.40
codegen_flags: <defaults>
</compile_context>

<pallas_src>
import jax
import jax.numpy as jnp
from jax import lax
from jax.experimental import pallas as pl
from jax.experimental.pallas import tpu as pltpu


# ----- small static shapes implied by the module's forward -----
B = 2            # batch_size
SRC_LEN = 8      # src_len
TRG_LEN = 8      # trg_len
EMB = 32         # embedding dim (encoder & decoder)
HID = 32         # LSTM hidden dim
G4 = 4 * HID     # fused gate width (i, f, g, o)
SRC_VOCAB = 64
TRG_VOCAB = 128  # decoder.embedding.num_embeddings == output_dim


def _seq2seq_kernel(tf_ref, src_ref, trg_ref,
                    eg_enc_ref, whh_enc_ref, b_enc_ref,
                    eg_dec_ref, whh_dec_ref, b_dec_ref,
                    wout_ref, bout_ref,
                    out_ref, xg_scratch):
    """Whole encoder->decoder recurrence in one kernel invocation.

    tf_ref : (TRG_LEN,)      int32 SMEM  teacher-forcing flags per step
    src_ref: (B, SRC_LEN)    int32 SMEM  source token ids
    trg_ref: (B, TRG_LEN)    int32 SMEM  target token ids
    eg_*   : folded input-side gate tables (vocab, 4H), i/f/o cols pre-scaled 0.5
    whh_*  : recurrent gate weights (HID, 4H), i/f/o cols pre-scaled 0.5
    """
    whh_enc = whh_enc_ref[...]
    whh_dec = whh_dec_ref[...]
    eg_dec = eg_dec_ref[...]
    wout = wout_ref[...]
    # Hoist bias broadcasts once (JAX does not CSE broadcast_in_dim, and the
    # loops below are fully unrolled).
    b_dec_b = jnp.broadcast_to(b_dec_ref[...], (B, G4))
    bout_b = jnp.broadcast_to(bout_ref[...], (B, TRG_VOCAB))
    iota_v = lax.broadcasted_iota(jnp.int32, (B, TRG_VOCAB), 1)

    # outputs start as zeros; t=0 slice stays zero, exactly like the torch code
    out_ref[...] = jnp.zeros((B, TRG_LEN, TRG_VOCAB), jnp.float32)

    # ---- precompute every input-side gate contribution (off the recurrence) --
    # Encoder: one-hot(src) @ (emb_src @ Wih_enc) + b_enc, time-major rows t*B+b
    n_src = SRC_LEN * B
    row_src = lax.broadcasted_iota(jnp.int32, (n_src, 1), 0)
    src_col = jnp.zeros((n_src, 1), jnp.int32)
    for t in range(SRC_LEN):
        for b in range(B):
            src_col = jnp.where(row_src == (t * B + b), src_ref[b, t], src_col)
    onehot_src = (src_col == lax.broadcasted_iota(
        jnp.int32, (n_src, SRC_VOCAB), 1)).astype(jnp.float32)
    pre_enc = (jnp.dot(onehot_src, eg_enc_ref[...],
                       preferred_element_type=jnp.float32)
               + jnp.broadcast_to(b_enc_ref[...], (n_src, G4)))   # (16, 4H)

    # Decoder teacher-forced inputs: one-hot(trg) @ (emb_trg @ Wih_dec) + b_dec
    n_trg = TRG_LEN * B
    row_trg = lax.broadcasted_iota(jnp.int32, (n_trg, 1), 0)
    trg_col = jnp.zeros((n_trg, 1), jnp.int32)
    for t in range(TRG_LEN):
        for b in range(B):
            trg_col = jnp.where(row_trg == (t * B + b), trg_ref[b, t], trg_col)
    onehot_trg = (trg_col == lax.broadcasted_iota(
        jnp.int32, (n_trg, TRG_VOCAB), 1)).astype(jnp.float32)
    xg_tf = (jnp.dot(onehot_trg, eg_dec, preferred_element_type=jnp.float32)
             + jnp.broadcast_to(b_dec_ref[...], (n_trg, G4)))     # (16, 4H)

    def lstm_step(x_gates, h, c, whh):
        # i/f/o columns of every gate weight were pre-scaled by 0.5 at param
        # prep, so ONE tanh covers sigmoid (0.5*tanh(z/2)+0.5) and the g-gate
        # tanh in a single EUP push.  Gate order: i, f, g, o (PyTorch).
        gates = x_gates + jnp.dot(h, whh, preferred_element_type=jnp.float32)
        tg = jnp.tanh(gates)
        i = 0.5 * tg[:, 0 * HID:1 * HID] + 0.5
        f = 0.5 * tg[:, 1 * HID:2 * HID] + 0.5
        g = tg[:, 2 * HID:3 * HID]
        o = 0.5 * tg[:, 3 * HID:4 * HID] + 0.5
        c_new = f * c + i * g
        h_new = o * jnp.tanh(c_new)
        return h_new, c_new

    # ---------------- encoder (fully unrolled) ----------------
    h = jnp.zeros((B, HID), jnp.float32)
    c = jnp.zeros((B, HID), jnp.float32)
    for t in range(SRC_LEN):
        h, c = lstm_step(pre_enc[t * B:(t + 1) * B, :], h, c, whh_enc)

    # ---------------- decoder with teacher forcing (fully unrolled) ----------
    xg = xg_tf[0:B, :]                                   # input = trg[:, 0]
    for t in range(1, TRG_LEN):
        h, c = lstm_step(xg, h, c, whh_dec)
        logits = jnp.dot(h, wout, preferred_element_type=jnp.float32) + bout_b
        out_ref[:, pl.ds(t, 1), :] = logits[:, None, :]

        if t < TRG_LEN - 1:   # last step's next-input is never used
            @pl.when(tf_ref[t] == 0)
            def _():
                # Greedy top-1 (first max index, like torch.argmax) + one-hot
                # gate lookup — only when teacher forcing is OFF.
                maxv = jnp.max(logits, axis=1, keepdims=True)
                top1 = jnp.min(jnp.where(logits == maxv, iota_v, TRG_VOCAB),
                               axis=1, keepdims=True)            # (B, 1) int32
                onehot = (top1 == iota_v).astype(jnp.float32)
                xg_scratch[...] = (jnp.dot(onehot, eg_dec,
                                           preferred_element_type=jnp.float32)
                                   + b_dec_b)

            @pl.when(tf_ref[t] != 0)
            def _():
                # teacher forcing: precomputed row, no argmax / one-hot work
                xg_scratch[...] = xg_tf[t * B:(t + 1) * B, :]

            xg = xg_scratch[...]


def prepare_params(p):
    """One-time parameter folding (NOT per forward call):
       - emb @ Wih tables (encoder & decoder) so the input-side gate
         contribution is a single one-hot matmul,
       - i/f/o gate columns pre-scaled by 0.5 for the single-tanh activation."""
    hp = lax.Precision.HIGHEST
    gate_scale = jnp.concatenate(
        [jnp.full((1, 2 * HID), 0.5, jnp.float32),   # i, f
         jnp.ones((1, HID), jnp.float32),            # g
         jnp.full((1, HID), 0.5, jnp.float32)],      # o
        axis=1)
    eg_enc = jnp.dot(p["emb_src"], p["wih_enc"], precision=hp) * gate_scale
    eg_dec = jnp.dot(p["emb_trg"], p["wih_dec"], precision=hp) * gate_scale
    return {
        "eg_enc": eg_enc.astype(jnp.float32),                       # (64, 4H)
        "whh_enc": (p["whh_enc"] * gate_scale).astype(jnp.float32),
        "b_enc": (p["b_enc"] * gate_scale).astype(jnp.float32),
        "eg_dec": eg_dec.astype(jnp.float32),                       # (128, 4H)
        "whh_dec": (p["whh_dec"] * gate_scale).astype(jnp.float32),
        "b_dec": (p["b_dec"] * gate_scale).astype(jnp.float32),
        "w_out": p["w_out"].astype(jnp.float32),
        "b_out": p["b_out"].astype(jnp.float32),
    }


def seq2seq_forward(prep, src_tok, trg_tok, tf_flags):
    """src_tok: (B, SRC_LEN) int32; trg_tok: (B, TRG_LEN) int32;
    tf_flags: (TRG_LEN,) int32 (deterministic stand-in for per-step
    random.random() < teacher_forcing_ratio).
    Returns (B, TRG_LEN, TRG_VOCAB) float32, matching the PyTorch forward."""
    smem = pl.BlockSpec(memory_space=pltpu.MemorySpace.SMEM)
    vmem = pl.BlockSpec(memory_space=pltpu.MemorySpace.VMEM)
    return pl.pallas_call(
        _seq2seq_kernel,
        out_shape=jax.ShapeDtypeStruct((B, TRG_LEN, TRG_VOCAB), jnp.float32),
        in_specs=[smem, smem, smem] + [vmem] * 8,
        out_specs=vmem,
        scratch_shapes=[pltpu.VMEM((B, G4), jnp.float32)],
    )(tf_flags, src_tok, trg_tok,
      prep["eg_enc"], prep["whh_enc"], prep["b_enc"],
      prep["eg_dec"], prep["whh_dec"], prep["b_dec"],
      prep["w_out"], prep["b_out"])


def init_params(key):
    ks = jax.random.split(key, 12)
    k = 1.0 / float(jnp.sqrt(HID))

    def u(kk, shape):
        return jax.random.uniform(kk, shape, jnp.float32, -k, k)

    return {
        "emb_src": jax.random.normal(ks[0], (SRC_VOCAB, EMB), jnp.float32),
        "emb_trg": jax.random.normal(ks[1], (TRG_VOCAB, EMB), jnp.float32),
        "wih_enc": u(ks[2], (EMB, G4)),
        "whh_enc": u(ks[3], (HID, G4)),
        "b_enc":   u(ks[4], (1, G4)) + u(ks[5], (1, G4)),   # b_ih + b_hh
        "wih_dec": u(ks[6], (EMB, G4)),
        "whh_dec": u(ks[7], (HID, G4)),
        "b_dec":   u(ks[8], (1, G4)) + u(ks[9], (1, G4)),   # b_ih + b_hh
        "w_out":   u(ks[10], (HID, TRG_VOCAB)),
        "b_out":   u(ks[11], (1, TRG_VOCAB)),
    }


def reference_forward(params, src, trg, tf_flags):
    """Pure-JAX reference of the PyTorch forward (unfolded params)."""
    hp = lax.Precision.HIGHEST

    def cell(x, h, c, wih, whh, b):
        gates = (jnp.dot(x, wih, precision=hp)
                 + jnp.dot(h, whh, precision=hp) + b)
        i = jax.nn.sigmoid(gates[:, 0 * HID:1 * HID])
        f = jax.nn.sigmoid(gates[:, 1 * HID:2 * HID])
        g = jnp.tanh(gates[:, 2 * HID:3 * HID])
        o = jax.nn.sigmoid(gates[:, 3 * HID:4 * HID])
        c = f * c + i * g
        return o * jnp.tanh(c), c

    h = jnp.zeros((B, HID), jnp.float32)
    c = jnp.zeros((B, HID), jnp.float32)
    for t in range(SRC_LEN):
        x = params["emb_src"][src[:, t]]
        h, c = cell(x, h, c, params["wih_enc"], params["whh_enc"], params["b_enc"])
    outputs = jnp.zeros((B, TRG_LEN, TRG_VOCAB), jnp.float32)
    inp = trg[:, 0]
    for t in range(1, TRG_LEN):
        x = params["emb_trg"][inp]
        h, c = cell(x, h, c, params["wih_dec"], params["whh_dec"], params["b_dec"])
        logits = jnp.dot(h, params["w_out"], precision=hp) + params["b_out"]
        outputs = outputs.at[:, t, :].set(logits)
        top1 = jnp.argmax(logits, axis=1).astype(jnp.int32)
        inp = jnp.where(tf_flags[t] != 0, trg[:, t], top1)
    return outputs


if __name__ == "__main__":
    key = jax.random.PRNGKey(0)
    pk, sk, tk, fk = jax.random.split(key, 4)
    params = init_params(pk)
    prep = prepare_params(params)          # one-time weight folding

    src = jax.random.randint(sk, (B, SRC_LEN), 0, SRC_VOCAB, jnp.int32)
    trg = jax.random.randint(tk, (B, TRG_LEN), 0, TRG_VOCAB, jnp.int32)
    # Deterministic replacement for the Python `random.random()` per decode step.
    tf_flags = (jax.random.uniform(fk, (TRG_LEN,)) < 0.5).astype(jnp.int32)

    # Numerical check vs. a pure-JAX reference with teacher forcing always ON
    # (decouples the check from argmax tie-break / greedy-feedback sensitivity).
    tf_all = jnp.ones((TRG_LEN,), jnp.int32)
    out_tf = jax.block_until_ready(seq2seq_forward(prep, src, trg, tf_all))
    ref_tf = reference_forward(params, src, trg, tf_all)
    max_diff = float(jnp.max(jnp.abs(out_tf - ref_tf)))
    assert bool(jnp.allclose(out_tf, ref_tf, rtol=5e-3, atol=5e-3)), max_diff

    # TODO(synk): translate() greedy-decoding helper (string tokenization) has no
    # Pallas equivalent and is omitted; only the tensor forward pass is implemented.
    out = jax.block_until_ready(seq2seq_forward(prep, src, trg, tf_flags))

    assert out.shape == (B, TRG_LEN, TRG_VOCAB)
    assert out.dtype == jnp.float32
    assert bool(jnp.all(jnp.isfinite(out)))
    assert bool(jnp.all(out[:, 0, :] == 0.0))  # t=0 slot stays zero, as in torch
    print("KERNEL_OK")
</pallas_src>

<mosaic_0001>
module attributes {stable_mosaic.version = 11 : i64} {
  func.func @_seq2seq_kernel(%arg0: memref<8xi32, #tpu.memory_space<smem>>, %arg1: memref<2x8xi32, #tpu.memory_space<smem>>, %arg2: memref<2x8xi32, #tpu.memory_space<smem>>, %arg3: memref<64x128xf32, #tpu.memory_space<vmem>>, %arg4: memref<32x128xf32, #tpu.memory_space<vmem>>, %arg5: memref<1x128xf32, #tpu.memory_space<vmem>>, %arg6: memref<128x128xf32, #tpu.memory_space<vmem>>, %arg7: memref<32x128xf32, #tpu.memory_space<vmem>>, %arg8: memref<1x128xf32, #tpu.memory_space<vmem>>, %arg9: memref<32x128xf32, #tpu.memory_space<vmem>>, %arg10: memref<1x128xf32, #tpu.memory_space<vmem>>, %arg11: memref<2x8x128xf32, #tpu.memory_space<vmem>>, %arg12: memref<2x128xf32, #tpu.memory_space<vmem>>) attributes {dimension_semantics = [], scalar_prefetch = 0 : i64, scratch_operands = 1 : i64, tpu.core_type = #tpu.core_type<tc>} {
    %c0 = arith.constant 0 : index
    %c0_0 = arith.constant 0 : index
    %0 = vector.load %arg4[%c0, %c0_0] : memref<32x128xf32, #tpu.memory_space<vmem>>, vector<32x128xf32>
    %c0_1 = arith.constant 0 : index
    %c0_2 = arith.constant 0 : index
    %1 = vector.load %arg7[%c0_1, %c0_2] : memref<32x128xf32, #tpu.memory_space<vmem>>, vector<32x128xf32>
    %c0_3 = arith.constant 0 : index
    %c0_4 = arith.constant 0 : index
    %2 = vector.load %arg6[%c0_3, %c0_4] : memref<128x128xf32, #tpu.memory_space<vmem>>, vector<128x128xf32>
    %c0_5 = arith.constant 0 : index
    %c0_6 = arith.constant 0 : index
    %3 = vector.load %arg9[%c0_5, %c0_6] : memref<32x128xf32, #tpu.memory_space<vmem>>, vector<32x128xf32>
    %c0_7 = arith.constant 0 : index
    %c0_8 = arith.constant 0 : index
    %4 = vector.load %arg8[%c0_7, %c0_8] : memref<1x128xf32, #tpu.memory_space<vmem>>, vector<1x128xf32>
    %5 = vector.shape_cast %4 : vector<1x128xf32> to vector<1x128xf32>
    %6 = vector.broadcast %5 : vector<1x128xf32> to vector<2x128xf32>
    %c0_9 = arith.constant 0 : index
    %c0_10 = arith.constant 0 : index
    %7 = vector.load %arg10[%c0_9, %c0_10] : memref<1x128xf32, #tpu.memory_space<vmem>>, vector<1x128xf32>
    %8 = vector.shape_cast %7 : vector<1x128xf32> to vector<1x128xf32>
    %9 = vector.broadcast %8 : vector<1x128xf32> to vector<2x128xf32>
    %10 = tpu.iota {dimensions = array<i32: 1>} : vector<2x128xi32>
    %cst = arith.constant 0.000000e+00 : f32
    %11 = vector.broadcast %cst : f32 to vector<2x8x128xf32>
    %c0_11 = arith.constant 0 : index
    %c0_12 = arith.constant 0 : index
    %c0_13 = arith.constant 0 : index
    %12 = vector.load %arg11[%c0_11, %c0_12, %c0_13] : memref<2x8x128xf32, #tpu.memory_space<vmem>>, vector<2x8x128xf32>
    tpu.vector_store %arg11[%c0_11, %c0_12, %c0_13], %11 {strides = array<i32>} : memref<2x8x128xf32, #tpu.memory_space<vmem>>, vector<2x8x128xf32>,
    %13 = tpu.iota {dimensions = array<i32: 0>} : vector<16x1xi32>
    %c0_i32 = arith.constant 0 : i32
    %14 = vector.broadcast %c0_i32 : i32 to vector<16x1xi32>
    %c0_i32_14 = arith.constant 0 : i32
    %15 = vector.broadcast %c0_i32_14 : i32 to vector<16x1xi32>
    %16 = arith.cmpi eq, %13, %15 : vector<16x1xi32>
    %c0_15 = arith.constant 0 : index
    %c0_16 = arith.constant 0 : index
    %17 = memref.load %arg1[%c0_15, %c0_16] : memref<2x8xi32, #tpu.memory_space<smem>>
    %18 = vector.broadcast %17 : i32 to vector<16x1xi32>
    %19 = arith.select %16, %18, %14 : vector<16x1xi1>, vector<16x1xi32>
    %c1_i32 = arith.constant 1 : i32
    %20 = vector.broadcast %c1_i32 : i32 to vector<16x1xi32>
    %21 = arith.cmpi eq, %13, %20 : vector<16x1xi32>
    %c1 = arith.constant 1 : index
    %c0_17 = arith.constant 0 : index
    %22 = memref.load %arg1[%c1, %c0_17] : memref<2x8xi32, #tpu.memory_space<smem>>
    %23 = vector.broadcast %22 : i32 to vector<16x1xi32>
    %24 = arith.select %21, %23, %19 : vector<16x1xi1>, vector<16x1xi32>
    %c2_i32 = arith.constant 2 : i32
    %25 = vector.broadcast %c2_i32 : i32 to vector<16x1xi32>
    %26 = arith.cmpi eq, %13, %25 : vector<16x1xi32>
    %c0_18 = arith.constant 0 : index
    %c1_19 = arith.constant 1 : index
    %27 = memref.load %arg1[%c0_18, %c1_19] : memref<2x8xi32, #tpu.memory_space<smem>>
    %28 = vector.broadcast %27 : i32 to vector<16x1xi32>
    %29 = arith.select %26, %28, %24 : vector<16x1xi1>, vector<16x1xi32>
    %c3_i32 = arith.constant 3 : i32
    %30 = vector.broadcast %c3_i32 : i32 to vector<16x1xi32>
    %31 = arith.cmpi eq, %13, %30 : vector<16x1xi32>
    %c1_20 = arith.constant 1 : index
    %c1_21 = arith.constant 1 : index
    %32 = memref.load %arg1[%c1_20, %c1_21] : memref<2x8xi32, #tpu.memory_space<smem>>
    %33 = vector.broadcast %32 : i32 to vector<16x1xi32>
    %34 = arith.select %31, %33, %29 : vector<16x1xi1>, vector<16x1xi32>
    %c4_i32 = arith.constant 4 : i32
    %35 = vector.broadcast %c4_i32 : i32 to vector<16x1xi32>
    %36 = arith.cmpi eq, %13, %35 : vector<16x1xi32>
    %c0_22 = arith.constant 0 : index
    %c2 = arith.constant 2 : index
    %37 = memref.load %arg1[%c0_22, %c2] : memref<2x8xi32, #tpu.memory_space<smem>>
    %38 = vector.broadcast %37 : i32 to vector<16x1xi32>
    %39 = arith.select %36, %38, %34 : vector<16x1xi1>, vector<16x1xi32>
    %c5_i32 = arith.constant 5 : i32
    %40 = vector.broadcast %c5_i32 : i32 to vector<16x1xi32>
    %41 = arith.cmpi eq, %13, %40 : vector<16x1xi32>
    %c1_23 = arith.constant 1 : index
    %c2_24 = arith.constant 2 : index
    %42 = memref.load %arg1[%c1_23, %c2_24] : memref<2x8xi32, #tpu.memory_space<smem>>
    %43 = vector.broadcast %42 : i32 to vector<16x1xi32>
    %44 = arith.select %41, %43, %39 : vector<16x1xi1>, vector<16x1xi32>
    %c6_i32 = arith.constant 6 : i32
    %45 = vector.broadcast %c6_i32 : i32 to vector<16x1xi32>
    %46 = arith.cmpi eq, %13, %45 : vector<16x1xi32>
    %c0_25 = arith.constant 0 : index
    %c3 = arith.constant 3 : index
    %47 = memref.load %arg1[%c0_25, %c3] : memref<2x8xi32, #tpu.memory_space<smem>>
    %48 = vector.broadcast %47 : i32 to vector<16x1xi32>
    %49 = arith.select %46, %48, %44 : vector<16x1xi1>, vector<16x1xi32>
    %c7_i32 = arith.constant 7 : i32
    %50 = vector.broadcast %c7_i32 : i32 to vector<16x1xi32>
    %51 = arith.cmpi eq, %13, %50 : vector<16x1xi32>
    %c1_26 = arith.constant 1 : index
    %c3_27 = arith.constant 3 : index
    %52 = memref.load %arg1[%c1_26, %c3_27] : memref<2x8xi32, #tpu.memory_space<smem>>
    %53 = vector.broadcast %52 : i32 to vector<16x1xi32>
    %54 = arith.select %51, %53, %49 : vector<16x1xi1>, vector<16x1xi32>
    %c8_i32 = arith.constant 8 : i32
    %55 = vector.broadcast %c8_i32 : i32 to vector<16x1xi32>
    %56 = arith.cmpi eq, %13, %55 : vector<16x1xi32>
    %c0_28 = arith.constant 0 : index
    %c4 = arith.constant 4 : index
    %57 = memref.load %arg1[%c0_28, %c4] : memref<2x8xi32, #tpu.memory_space<smem>>
    %58 = vector.broadcast %57 : i32 to vector<16x1xi32>
    %59 = arith.select %56, %58, %54 : vector<16x1xi1>, vector<16x1xi32>
    %c9_i32 = arith.constant 9 : i32
    %60 = vector.broadcast %c9_i32 : i32 to vector<16x1xi32>
    %61 = arith.cmpi eq, %13, %60 : vector<16x1xi32>
    %c1_29 = arith.constant 1 : index
    %c4_30 = arith.constant 4 : index
    %62 = memref.load %arg1[%c1_29, %c4_30] : memref<2x8xi32, #tpu.memory_space<smem>>
    %63 = vector.broadcast %62 : i32 to vector<16x1xi32>
    %64 = arith.select %61, %63, %59 : vector<16x1xi1>, vector<16x1xi32>
    %c10_i32 = arith.constant 10 : i32
    %65 = vector.broadcast %c10_i32 : i32 to vector<16x1xi32>
    %66 = arith.cmpi eq, %13, %65 : vector<16x1xi32>
    %c0_31 = arith.constant 0 : index
    %c5 = arith.constant 5 : index
    %67 = memref.load %arg1[%c0_31, %c5] : memref<2x8xi32, #tpu.memory_space<smem>>
    %68 = vector.broadcast %67 : i32 to vector<16x1xi32>
    %69 = arith.select %66, %68, %64 : vector<16x1xi1>, vector<16x1xi32>
    %c11_i32 = arith.constant 11 : i32
    %70 = vector.broadcast %c11_i32 : i32 to vector<16x1xi32>
    %71 = arith.cmpi eq, %13, %70 : vector<16x1xi32>
    %c1_32 = arith.constant 1 : index
    %c5_33 = arith.constant 5 : index
    %72 = memref.load %arg1[%c1_32, %c5_33] : memref<2x8xi32, #tpu.memory_space<smem>>
    %73 = vector.broadcast %72 : i32 to vector<16x1xi32>
    %74 = arith.select %71, %73, %69 : vector<16x1xi1>, vector<16x1xi32>
    %c12_i32 = arith.constant 12 : i32
    %75 = vector.broadcast %c12_i32 : i32 to vector<16x1xi32>
    %76 = arith.cmpi eq, %13, %75 : vector<16x1xi32>
    %c0_34 = arith.constant 0 : index
    %c6 = arith.constant 6 : index
    %77 = memref.load %arg1[%c0_34, %c6] : memref<2x8xi32, #tpu.memory_space<smem>>
    %78 = vector.broadcast %77 : i32 to vector<16x1xi32>
    %79 = arith.select %76, %78, %74 : vector<16x1xi1>, vector<16x1xi32>
    %c13_i32 = arith.constant 13 : i32
    %80 = vector.broadcast %c13_i32 : i32 to vector<16x1xi32>
    %81 = arith.cmpi eq, %13, %80 : vector<16x1xi32>
    %c1_35 = arith.constant 1 : index
    %c6_36 = arith.constant 6 : index
    %82 = memref.load %arg1[%c1_35, %c6_36] : memref<2x8xi32, #tpu.memory_space<smem>>
    %83 = vector.broadcast %82 : i32 to vector<16x1xi32>
    %84 = arith.select %81, %83, %79 : vector<16x1xi1>, vector<16x1xi32>
    %c14_i32 = arith.constant 14 : i32
    %85 = vector.broadcast %c14_i32 : i32 to vector<16x1xi32>
    %86 = arith.cmpi eq, %13, %85 : vector<16x1xi32>
    %c0_37 = arith.constant 0 : index
    %c7 = arith.constant 7 : index
    %87 = memref.load %arg1[%c0_37, %c7] : memref<2x8xi32, #tpu.memory_space<smem>>
    %88 = vector.broadcast %87 : i32 to vector<16x1xi32>
    %89 = arith.select %86, %88, %84 : vector<16x1xi1>, vector<16x1xi32>
    %c15_i32 = arith.constant 15 : i32
    %90 = vector.broadcast %c15_i32 : i32 to vector<16x1xi32>
    %91 = arith.cmpi eq, %13, %90 : vector<16x1xi32>
    %c1_38 = arith.constant 1 : index
    %c7_39 = arith.constant 7 : index
    %92 = memref.load %arg1[%c1_38, %c7_39] : memref<2x8xi32, #tpu.memory_space<smem>>
    %93 = vector.broadcast %92 : i32 to vector<16x1xi32>
    %94 = arith.select %91, %93, %89 : vector<16x1xi1>, vector<16x1xi32>
    %95 = tpu.iota {dimensions = array<i32: 1>} : vector<16x64xi32>
    %96 = vector.broadcast %94 : vector<16x1xi32> to vector<16x64xi32>
    %97 = arith.cmpi eq, %96, %95 : vector<16x64xi32>
    %98 = arith.extui %97 : vector<16x64xi1> to vector<16x64xi32>
    %99 = arith.sitofp %98 : vector<16x64xi32> to vector<16x64xf32>
    %c0_40 = arith.constant 0 : index
    %c0_41 = arith.constant 0 : index
    %100 = vector.load %arg3[%c0_40, %c0_41] : memref<64x128xf32, #tpu.memory_space<vmem>>, vector<64x128xf32>
    %cst_42 = arith.constant dense<0.000000e+00> : vector<16x128xf32>
    %101 = tpu.matmul %99, %100, %cst_42 {dimension_numbers = #tpu.dot_dimension_numbers<[1], [0], [0], [1], [0, 0, 1, 1], [], []>} : vector<16x64xf32>, vector<64x128xf32>, vector<16x128xf32> -> vector<16x128xf32>
    %c0_43 = arith.constant 0 : index
    %c0_44 = arith.constant 0 : index
    %102 = vector.load %arg5[%c0_43, %c0_44] : memref<1x128xf32, #tpu.memory_space<vmem>>, vector<1x128xf32>
    %103 = vector.shape_cast %102 : vector<1x128xf32> to vector<1x128xf32>
    %104 = vector.broadcast %103 : vector<1x128xf32> to vector<16x128xf32>
    %105 = arith.addf %101, %104 : vector<16x128xf32>
    %106 = tpu.iota {dimensions = array<i32: 0>} : vector<16x1xi32>
    %c0_i32_45 = arith.constant 0 : i32
    %107 = vector.broadcast %c0_i32_45 : i32 to vector<16x1xi32>
    %c0_i32_46 = arith.constant 0 : i32
    %108 = vector.broadcast %c0_i32_46 : i32 to vector<16x1xi32>
    %109 = arith.cmpi eq, %106, %108 : vector<16x1xi32>
    %c0_47 = arith.constant 0 : index
    %c0_48 = arith.constant 0 : index
    %110 = memref.load %arg2[%c0_47, %c0_48] : memref<2x8xi32, #tpu.memory_space<smem>>
    %111 = vector.broadcast %110 : i32 to vector<16x1xi32>
    %112 = arith.select %109, %111, %107 : vector<16x1xi1>, vector<16x1xi32>
    %c1_i32_49 = arith.constant 1 : i32
    %113 = vector.broadcast %c1_i32_49 : i32 to vector<16x1xi32>
    %114 = arith.cmpi eq, %106, %113 : vector<16x1xi32>
    %c1_50 = arith.constant 1 : index
    %c0_51 = arith.constant 0 : index
    %115 = memref.load %arg2[%c1_50, %c0_51] : memref<2x8xi32, #tpu.memory_space<smem>>
    %116 = vector.broadcast %115 : i32 to vector<16x1xi32>
    %117 = arith.select %114, %116, %112 : vector<16x1xi1>, vector<16x1xi32>
    %c2_i32_52 = arith.constant 2 : i32
    %118 = vector.broadcast %c2_i32_52 : i32 to vector<16x1xi32>
    %119 = arith.cmpi eq, %106, %118 : vector<16x1xi32>
    %c0_53 = arith.constant 0 : index
    %c1_54 = arith.constant 1 : index
    %120 = memref.load %arg2[%c0_53, %c1_54] : memref<2x8xi32, #tpu.memory_space<smem>>
    %121 = vector.broadcast %120 : i32 to vector<16x1xi32>
    %122 = arith.select %119, %121, %117 : vector<16x1xi1>, vector<16x1xi32>
    %c3_i32_55 = arith.constant 3 : i32
    %123 = vector.broadcast %c3_i32_55 : i32 to vector<16x1xi32>
    %124 = arith.cmpi eq, %106, %123 : vector<16x1xi32>
    %c1_56 = arith.constant 1 : index
    %c1_57 = arith.constant 1 : index
    %125 = memref.load %arg2[%c1_56, %c1_57] : memref<2x8xi32, #tpu.memory_space<smem>>
    %126 = vector.broadcast %125 : i32 to vector<16x1xi32>
    %127 = arith.select %124, %126, %122 : vector<16x1xi1>, vector<16x1xi32>
    %c4_i32_58 = arith.constant 4 : i32
    %128 = vector.broadcast %c4_i32_58 : i32 to vector<16x1xi32>
    %129 = arith.cmpi eq, %106, %128 : vector<16x1xi32>
    %c0_59 = arith.constant 0 : index
    %c2_60 = arith.constant 2 : index
    %130 = memref.load %arg2[%c0_59, %c2_60] : memref<2x8xi32, #tpu.memory_space<smem>>
    %131 = vector.broadcast %130 : i32 to vector<16x1xi32>
    %132 = arith.select %129, %131, %127 : vector<16x1xi1>, vector<16x1xi32>
    %c5_i32_61 = arith.constant 5 : i32
    %133 = vector.broadcast %c5_i32_61 : i32 to vector<16x1xi32>
    %134 = arith.cmpi eq, %106, %133 : vector<16x1xi32>
    %c1_62 = arith.constant 1 : index
    %c2_63 = arith.constant 2 : index
    %135 = memref.load %arg2[%c1_62, %c2_63] : memref<2x8xi32, #tpu.memory_space<smem>>
    %136 = vector.broadcast %135 : i32 to vector<16x1xi32>
    %137 = arith.select %134, %136, %132 : vector<16x1xi1>, vector<16x1xi32>
    %c6_i32_64 = arith.constant 6 : i32
    %138 = vector.broadcast %c6_i32_64 : i32 to vector<16x1xi32>
    %139 = arith.cmpi eq, %106, %138 : vector<16x1xi32>
    %c0_65 = arith.constant 0 : index
    %c3_66 = arith.constant 3 : index
    %140 = memref.load %arg2[%c0_65, %c3_66] : memref<2x8xi32, #tpu.memory_space<smem>>
    %141 = vector.broadcast %140 : i32 to vector<16x1xi32>
    %142 = arith.select %139, %141, %137 : vector<16x1xi1>, vector<16x1xi32>
    %c7_i32_67 = arith.constant 7 : i32
    %143 = vector.broadcast %c7_i32_67 : i32 to vector<16x1xi32>
    %144 = arith.cmpi eq, %106, %143 : vector<16x1xi32>
    %c1_68 = arith.constant 1 : index
    %c3_69 = arith.constant 3 : index
    %145 = memref.load %arg2[%c1_68, %c3_69] : memref<2x8xi32, #tpu.memory_space<smem>>
    %146 = vector.broadcast %145 : i32 to vector<16x1xi32>
    %147 = arith.select %144, %146, %142 : vector<16x1xi1>, vector<16x1xi32>
    %c8_i32_70 = arith.constant 8 : i32
    %148 = vector.broadcast %c8_i32_70 : i32 to vector<16x1xi32>
    %149 = arith.cmpi eq, %106, %148 : vector<16x1xi32>
    %c0_71 = arith.constant 0 : index
    %c4_72 = arith.constant 4 : index
    %150 = memref.load %arg2[%c0_71, %c4_72] : memref<2x8xi32, #tpu.memory_space<smem>>
    %151 = vector.broadcast %150 : i32 to vector<16x1xi32>
    %152 = arith.select %149, %151, %147 : vector<16x1xi1>, vector<16x1xi32>
    %c9_i32_73 = arith.constant 9 : i32
    %153 = vector.broadcast %c9_i32_73 : i32 to vector<16x1xi32>
    %154 = arith.cmpi eq, %106, %153 : vector<16x1xi32>
    %c1_74 = arith.constant 1 : index
    %c4_75 = arith.constant 4 : index
    %155 = memref.load %arg2[%c1_74, %c4_75] : memref<2x8xi32, #tpu.memory_space<smem>>
    %156 = vector.broadcast %155 : i32 to vector<16x1xi32>
    %157 = arith.select %154, %156, %152 : vector<16x1xi1>, vector<16x1xi32>
    %c10_i32_76 = arith.constant 10 : i32
    %158 = vector.broadcast %c10_i32_76 : i32 to vector<16x1xi32>
    %159 = arith.cmpi eq, %106, %158 : vector<16x1xi32>
    %c0_77 = arith.constant 0 : index
    %c5_78 = arith.constant 5 : index
    %160 = memref.load %arg2[%c0_77, %c5_78] : memref<2x8xi32, #tpu.memory_space<smem>>
    %161 = vector.broadcast %160 : i32 to vector<16x1xi32>
    %162 = arith.select %159, %161, %157 : vector<16x1xi1>, vector<16x1xi32>
    %c11_i32_79 = arith.constant 11 : i32
    %163 = vector.broadcast %c11_i32_79 : i32 to vector<16x1xi32>
    %164 = arith.cmpi eq, %106, %163 : vector<16x1xi32>
    %c1_80 = arith.constant 1 : index
    %c5_81 = arith.constant 5 : index
    %165 = memref.load %arg2[%c1_80, %c5_81] : memref<2x8xi32, #tpu.memory_space<smem>>
    %166 = vector.broadcast %165 : i32 to vector<16x1xi32>
    %167 = arith.select %164, %166, %162 : vector<16x1xi1>, vector<16x1xi32>
    %c12_i32_82 = arith.constant 12 : i32
    %168 = vector.broadcast %c12_i32_82 : i32 to vector<16x1xi32>
    %169 = arith.cmpi eq, %106, %168 : vector<16x1xi32>
    %c0_83 = arith.constant 0 : index
    %c6_84 = arith.constant 6 : index
    %170 = memref.load %arg2[%c0_83, %c6_84] : memref<2x8xi32, #tpu.memory_space<smem>>
    %171 = vector.broadcast %170 : i32 to vector<16x1xi32>
    %172 = arith.select %169, %171, %167 : vector<16x1xi1>, vector<16x1xi32>
    %c13_i32_85 = arith.constant 13 : i32
    %173 = vector.broadcast %c13_i32_85 : i32 to vector<16x1xi32>
    %174 = arith.cmpi eq, %106, %173 : vector<16x1xi32>
    %c1_86 = arith.constant 1 : index
    %c6_87 = arith.constant 6 : index
    %175 = memref.load %arg2[%c1_86, %c6_87] : memref<2x8xi32, #tpu.memory_space<smem>>
    %176 = vector.broadcast %175 : i32 to vector<16x1xi32>
    %177 = arith.select %174, %176, %172 : vector<16x1xi1>, vector<16x1xi32>
    %c14_i32_88 = arith.constant 14 : i32
    %178 = vector.broadcast %c14_i32_88 : i32 to vector<16x1xi32>
    %179 = arith.cmpi eq, %106, %178 : vector<16x1xi32>
    %c0_89 = arith.constant 0 : index
    %c7_90 = arith.constant 7 : index
    %180 = memref.load %arg2[%c0_89, %c7_90] : memref<2x8xi32, #tpu.memory_space<smem>>
    %181 = vector.broadcast %180 : i32 to vector<16x1xi32>
    %182 = arith.select %179, %181, %177 : vector<16x1xi1>, vector<16x1xi32>
    %c15_i32_91 = arith.constant 15 : i32
    %183 = vector.broadcast %c15_i32_91 : i32 to vector<16x1xi32>
    %184 = arith.cmpi eq, %106, %183 : vector<16x1xi32>
    %c1_92 = arith.constant 1 : index
    %c7_93 = arith.constant 7 : index
    %185 = memref.load %arg2[%c1_92, %c7_93] : memref<2x8xi32, #tpu.memory_space<smem>>
    %186 = vector.broadcast %185 : i32 to vector<16x1xi32>
    %187 = arith.select %184, %186, %182 : vector<16x1xi1>, vector<16x1xi32>
    %188 = tpu.iota {dimensions = array<i32: 1>} : vector<16x128xi32>
    %189 = vector.broadcast %187 : vector<16x1xi32> to vector<16x128xi32>
    %190 = arith.cmpi eq, %189, %188 : vector<16x128xi32>
    %191 = arith.extui %190 : vector<16x128xi1> to vector<16x128xi32>
    %192 = arith.sitofp %191 : vector<16x128xi32> to vector<16x128xf32>
    %cst_94 = arith.constant dense<0.000000e+00> : vector<16x128xf32>
    %193 = tpu.matmul %192, %2, %cst_94 {dimension_numbers = #tpu.dot_dimension_numbers<[1], [0], [0], [1], [0, 0, 1, 1], [], []>} : vector<16x128xf32>, vector<128x128xf32>, vector<16x128xf32> -> vector<16x128xf32>
    %c0_95 = arith.constant 0 : index
    %c0_96 = arith.constant 0 : index
    %194 = vector.load %arg8[%c0_95, %c0_96] : memref<1x128xf32, #tpu.memory_space<vmem>>, vector<1x128xf32>
    %195 = vector.shape_cast %194 : vector<1x128xf32> to vector<1x128xf32>
    %196 = vector.broadcast %195 : vector<1x128xf32> to vector<16x128xf32>
    %197 = arith.addf %193, %196 : vector<16x128xf32>
    %cst_97 = arith.constant 0.000000e+00 : f32
    %198 = vector.broadcast %cst_97 : f32 to vector<2x32xf32>
    %cst_98 = arith.constant 0.000000e+00 : f32
    %199 = vector.broadcast %cst_98 : f32 to vector<2x32xf32>
    %200 = vector.extract_strided_slice %105 {offsets = [0, 0], sizes = [2, 128], strides = [1, 1]} : vector<16x128xf32> to vector<2x128xf32>
    %cst_99 = arith.constant dense<0.000000e+00> : vector<2x128xf32>
    %201 = tpu.matmul %198, %0, %cst_99 {dimension_numbers = #tpu.dot_dimension_numbers<[1], [0], [0], [1], [0, 0, 1, 1], [], []>} : vector<2x32xf32>, vector<32x128xf32>, vector<2x128xf32> -> vector<2x128xf32>
    %202 = arith.addf %200, %201 : vector<2x128xf32>
    %203 = math.tanh %202 : vector<2x128xf32>
    %204 = vector.extract_strided_slice %203 {offsets = [0, 0], sizes = [2, 32], strides = [1, 1]} : vector<2x128xf32> to vector<2x32xf32>
    %cst_100 = arith.constant 5.000000e-01 : f32
    %205 = vector.broadcast %cst_100 : f32 to vector<2x32xf32>
    %206 = arith.mulf %205, %204 : vector<2x32xf32>
    %cst_101 = arith.constant 5.000000e-01 : f32
    %207 = vector.broadcast %cst_101 : f32 to vector<2x32xf32>
    %208 = arith.addf %206, %207 : vector<2x32xf32>
    %209 = vector.extract_strided_slice %203 {offsets = [0, 32], sizes = [2, 32], strides = [1, 1]} : vector<2x128xf32> to vector<2x32xf32>
    %cst_102 = arith.constant 5.000000e-01 : f32
    %210 = vector.broadcast %cst_102 : f32 to vector<2x32xf32>
    %211 = arith.mulf %210, %209 : vector<2x32xf32>
    %cst_103 = arith.constant 5.000000e-01 : f32
    %212 = vector.broadcast %cst_103 : f32 to vector<2x32xf32>
    %213 = arith.addf %211, %212 : vector<2x32xf32>
    %214 = vector.extract_strided_slice %203 {offsets = [0, 64], sizes = [2, 32], strides = [1, 1]} : vector<2x128xf32> to vector<2x32xf32>
    %215 = vector.extract_strided_slice %203 {offsets = [0, 96], sizes = [2, 32], strides = [1, 1]} : vector<2x128xf32> to vector<2x32xf32>
    %cst_104 = arith.constant 5.000000e-01 : f32
    %216 = vector.broadcast %cst_104 : f32 to vector<2x32xf32>
    %217 = arith.mulf %216, %215 : vector<2x32xf32>
    %cst_105 = arith.constant 5.000000e-01 : f32
    %218 = vector.broadcast %cst_105 : f32 to vector<2x32xf32>
    %219 = arith.addf %217, %218 : vector<2x32xf32>
    %220 = arith.mulf %213, %199 : vector<2x32xf32>
    %221 = arith.mulf %208, %214 : vector<2x32xf32>
    %222 = arith.addf %220, %221 : vector<2x32xf32>
    %223 = math.tanh %222 : vector<2x32xf32>
    %224 = arith.mulf %219, %223 : vector<2x32xf32>
    %225 = vector.extract_strided_slice %105 {offsets = [2, 0], sizes = [2, 128], strides = [1, 1]} : vector<16x128xf32> to vector<2x128xf32>
    %cst_106 = arith.constant dense<0.000000e+00> : vector<2x128xf32>
    %226 = tpu.matmul %224, %0, %cst_106 {dimension_numbers = #tpu.dot_dimension_numbers<[1], [0], [0], [1], [0, 0, 1, 1], [], []>} : vector<2x32xf32>, vector<32x128xf32>, vector<2x128xf32> -> vector<2x128xf32>
    %227 = arith.addf %225, %226 : vector<2x128xf32>
    %228 = math.tanh %227 : vector<2x128xf32>
    %229 = vector.extract_strided_slice %228 {offsets = [0, 0], sizes = [2, 32], strides = [1, 1]} : vector<2x128xf32> to vector<2x32xf32>
    %cst_107 = arith.constant 5.000000e-01 : f32
    %230 = vector.broadcast %cst_107 : f32 to vector<2x32xf32>
    %231 = arith.mulf %230, %229 : vector<2x32xf32>
    %cst_108 = arith.constant 5.000000e-01 : f32
    %232 = vector.broadcast %cst_108 : f32 to vector<2x32xf32>
    %233 = arith.addf %231, %232 : vector<2x32xf32>
    %234 = vector.extract_strided_slice %228 {offsets = [0, 32], sizes = [2, 32], strides = [1, 1]} : vector<2x128xf32> to vector<2x32xf32>
    %cst_109 = arith.constant 5.000000e-01 : f32
    %235 = vector.broadcast %cst_109 : f32 to vector<2x32xf32>
    %236 = arith.mulf %235, %234 : vector<2x32xf32>
    %cst_110 = arith.constant 5.000000e-01 : f32
    %237 = vector.broadcast %cst_110 : f32 to vector<2x32xf32>
    %238 = arith.addf %236, %237 : vector<2x32xf32>
    %239 = vector.extract_strided_slice %228 {offsets = [0, 64], sizes = [2, 32], strides = [1, 1]} : vector<2x128xf32> to vector<2x32xf32>
    %240 = vector.extract_strided_slice %228 {offsets = [0, 96], sizes = [2, 32], strides = [1, 1]} : vector<2x128xf32> to vector<2x32xf32>
    %cst_111 = arith.constant 5.000000e-01 : f32
    %241 = vector.broadcast %cst_111 : f32 to vector<2x32xf32>
    %242 = arith.mulf %241, %240 : vector<2x32xf32>
    %cst_112 = arith.constant 5.000000e-01 : f32
    %243 = vector.broadcast %cst_112 : f32 to vector<2x32xf32>
    %244 = arith.addf %242, %243 : vector<2x32xf32>
    %245 = arith.mulf %238, %222 : vector<2x32xf32>
    %246 = arith.mulf %233, %239 : vector<2x32xf32>
    %247 = arith.addf %245, %246 : vector<2x32xf32>
    %248 = math.tanh %247 : vector<2x32xf32>
    %249 = arith.mulf %244, %248 : vector<2x32xf32>
    %250 = vector.extract_strided_slice %105 {offsets = [4, 0], sizes = [2, 128], strides = [1, 1]} : vector<16x128xf32> to vector<2x128xf32>
    %cst_113 = arith.constant dense<0.000000e+00> : vector<2x128xf32>
    %251 = tpu.matmul %249, %0, %cst_113 {dimension_numbers = #tpu.dot_dimension_numbers<[1], [0], [0], [1], [0, 0, 1, 1], [], []>} : vector<2x32xf32>, vector<32x128xf32>, vector<2x128xf32> -> vector<2x128xf32>
    %252 = arith.addf %250, %251 : vector<2x128xf32>
    %253 = math.tanh %252 : vector<2x128xf32>
    %254 = vector.extract_strided_slice %253 {offsets = [0, 0], sizes = [2, 32], strides = [1, 1]} : vector<2x128xf32> to vector<2x32xf32>
    %cst_114 = arith.constant 5.000000e-01 : f32
    %255 = vector.broadcast %cst_114 : f32 to vector<2x32xf32>
    %256 = arith.mulf %255, %254 : vector<2x32xf32>
    %cst_115 = arith.constant 5.000000e-01 : f32
    %257 = vector.broadcast %cst_115 : f32 to vector<2x32xf32>
    %258 = arith.addf %256, %257 : vector<2x32xf32>
    %259 = vector.extract_strided_slice %253 {offsets = [0, 32], sizes = [2, 32], strides = [1, 1]} : vector<2x128xf32> to vector<2x32xf32>
    %cst_116 = arith.constant 5.000000e-01 : f32
    %260 = vector.broadcast %cst_116 : f32 to vector<2x32xf32>
    %261 = arith.mulf %260, %259 : vector<2x32xf32>
    %cst_117 = arith.constant 5.000000e-01 : f32
    %262 = vector.broadcast %cst_117 : f32 to vector<2x32xf32>
    %263 = arith.addf %261, %262 : vector<2x32xf32>
    %264 = vector.extract_strided_slice %253 {offsets = [0, 64], sizes = [2, 32], strides = [1, 1]} : vector<2x128xf32> to vector<2x32xf32>
    %265 = vector.extract_strided_slice %253 {offsets = [0, 96], sizes = [2, 32], strides = [1, 1]} : vector<2x128xf32> to vector<2x32xf32>
    %cst_118 = arith.constant 5.000000e-01 : f32
    %266 = vector.broadcast %cst_118 : f32 to vector<2x32xf32>
    %267 = arith.mulf %266, %265 : vector<2x32xf32>
    %cst_119 = arith.constant 5.000000e-01 : f32
    %268 = vector.broadcast %cst_119 : f32 to vector<2x32xf32>
    %269 = arith.addf %267, %268 : vector<2x32xf32>
    %270 = arith.mulf %263, %247 : vector<2x32xf32>
    %271 = arith.mulf %258, %264 : vector<2x32xf32>
    %272 = arith.addf %270, %271 : vector<2x32xf32>
    %273 = math.tanh %272 : vector<2x32xf32>
    %274 = arith.mulf %269, %273 : vector<2x32xf32>
    %275 = vector.extract_strided_slice %105 {offsets = [6, 0], sizes = [2, 128], strides = [1, 1]} : vector<16x128xf32> to vector<2x128xf32>
    %cst_120 = arith.constant dense<0.000000e+00> : vector<2x128xf32>
    %276 = tpu.matmul %274, %0, %cst_120 {dimension_numbers = #tpu.dot_dimension_numbers<[1], [0], [0], [1], [0, 0, 1, 1], [], []>} : vector<2x32xf32>, vector<32x128xf32>, vector<2x128xf32> -> vector<2x128xf32>
    %277 = arith.addf %275, %276 : vector<2x128xf32>
    %278 = math.tanh %277 : vector<2x128xf32>
    %279 = vector.extract_strided_slice %278 {offsets = [0, 0], sizes = [2, 32], strides = [1, 1]} : vector<2x128xf32> to vector<2x32xf32>
    %cst_121 = arith.constant 5.000000e-01 : f32
    %280 = vector.broadcast %cst_121 : f32 to vector<2x32xf32>
    %281 = arith.mulf %280, %279 : vector<2x32xf32>
    %cst_122 = arith.constant 5.000000e-01 : f32
    %282 = vector.broadcast %cst_122 : f32 to vector<2x32xf32>
    %283 = arith.addf %281, %282 : vector<2x32xf32>
    %284 = vector.extract_strided_slice %278 {offsets = [0, 32], sizes = [2, 32], strides = [1, 1]} : vector<2x128xf32> to vector<2x32xf32>
    %cst_123 = arith.constant 5.000000e-01 : f32
    %285 = vector.broadcast %cst_123 : f32 to vector<2x32xf32>
    %286 = arith.mulf %285, %284 : vector<2x32xf32>
    %cst_124 = arith.constant 5.000000e-01 : f32
    %287 = vector.broadcast %cst_124 : f32 to vector<2x32xf32>
    %288 = arith.addf %286, %287 : vector<2x32xf32>
    %289 = vector.extract_strided_slice %278 {offsets = [0, 64], sizes = [2, 32], strides = [1, 1]} : vector<2x128xf32> to vector<2x32xf32>
    %290 = vector.extract_strided_slice %278 {offsets = [0, 96], sizes = [2, 32], strides = [1, 1]} : vector<2x128xf32> to vector<2x32xf32>
    %cst_125 = arith.constant 5.000000e-01 : f32
    %291 = vector.broadcast %cst_125 : f32 to vector<2x32xf32>
    %292 = arith.mulf %291, %290 : vector<2x32xf32>
    %cst_126 = arith.constant 5.000000e-01 : f32
    %293 = vector.broadcast %cst_126 : f32 to vector<2x32xf32>
    %294 = arith.addf %292, %293 : vector<2x32xf32>
    %295 = arith.mulf %288, %272 : vector<2x32xf32>
    %296 = arith.mulf %283, %289 : vector<2x32xf32>
    %297 = arith.addf %295, %296 : vector<2x32xf32>
    %298 = math.tanh %297 : vector<2x32xf32>
    %299 = arith.mulf %294, %298 : vector<2x32xf32>
    %300 = vector.extract_strided_slice %105 {offsets = [8, 0], sizes = [2, 128], strides = [1, 1]} : vector<16x128xf32> to vector<2x128xf32>
    %cst_127 = arith.constant dense<0.000000e+00> : vector<2x128xf32>
    %301 = tpu.matmul %299, %0, %cst_127 {dimension_numbers = #tpu.dot_dimension_numbers<[1], [0], [0], [1], [0, 0, 1, 1], [], []>} : vector<2x32xf32>, vector<32x128xf32>, vector<2x128xf32> -> vector<2x128xf32>
    %302 = arith.addf %300, %301 : vector<2x128xf32>
    %303 = math.tanh %302 : vector<2x128xf32>
    %304 = vector.extract_strided_slice %303 {offsets = [0, 0], sizes = [2, 32], strides = [1, 1]} : vector<2x128xf32> to vector<2x32xf32>
    %cst_128 = arith.constant 5.000000e-01 : f32
    %305 = vector.broadcast %cst_128 : f32 to vector<2x32xf32>
    %306 = arith.mulf %305, %304 : vector<2x32xf32>
    %cst_129 = arith.constant 5.000000e-01 : f32
    %307 = vector.broadcast %cst_129 : f32 to vector<2x32xf32>
    %308 = arith.addf %306, %307 : vector<2x32xf32>
    %309 = vector.extract_strided_slice %303 {offsets = [0, 32], sizes = [2, 32], strides = [1, 1]} : vector<2x128xf32> to vector<2x32xf32>
    %cst_130 = arith.constant 5.000000e-01 : f32
    %310 = vector.broadcast %cst_130 : f32 to vector<2x32xf32>
    %311 = arith.mulf %310, %309 : vector<2x32xf32>
    %cst_131 = arith.constant 5.000000e-01 : f32
    %312 = vector.broadcast %cst_131 : f32 to vector<2x32xf32>
    %313 = arith.addf %311, %312 : vector<2x32xf32>
    %314 = vector.extract_strided_slice %303 {offsets = [0, 64], sizes = [2, 32], strides = [1, 1]} : vector<2x128xf32> to vector<2x32xf32>
    %315 = vector.extract_strided_slice %303 {offsets = [0, 96], sizes = [2, 32], strides = [1, 1]} : vector<2x128xf32> to vector<2x32xf32>
    %cst_132 = arith.constant 5.000000e-01 : f32
    %316 = vector.broadcast %cst_132 : f32 to vector<2x32xf32>
    %317 = arith.mulf %316, %315 : vector<2x32xf32>
    %cst_133 = arith.constant 5.000000e-01 : f32
    %318 = vector.broadcast %cst_133 : f32 to vector<2x32xf32>
    %319 = arith.addf %317, %318 : vector<2x32xf32>
    %320 = arith.mulf %313, %297 : vector<2x32xf32>
    %321 = arith.mulf %308, %314 : vector<2x32xf32>
    %322 = arith.addf %320, %321 : vector<2x32xf32>
    %323 = math.tanh %322 : vector<2x32xf32>
    %324 = arith.mulf %319, %323 : vector<2x32xf32>
    %325 = vector.extract_strided_slice %105 {offsets = [10, 0], sizes = [2, 128], strides = [1, 1]} : vector<16x128xf32> to vector<2x128xf32>
    %cst_134 = arith.constant dense<0.000000e+00> : vector<2x128xf32>
    %326 = tpu.matmul %324, %0, %cst_134 {dimension_numbers = #tpu.dot_dimension_numbers<[1], [0], [0], [1], [0, 0, 1, 1], [], []>} : vector<2x32xf32>, vector<32x128xf32>, vector<2x128xf32> -> vector<2x128xf32>
    %327 = arith.addf %325, %326 : vector<2x128xf32>
    %328 = math.tanh %327 : vector<2x128xf32>
    %329 = vector.extract_strided_slice %328 {offsets = [0, 0], sizes = [2, 32], strides = [1, 1]} : vector<2x128xf32> to vector<2x32xf32>
    %cst_135 = arith.constant 5.000000e-01 : f32
    %330 = vector.broadcast %cst_135 : f32 to vector<2x32xf32>
    %331 = arith.mulf %330, %329 : vector<2x32xf32>
    %cst_136 = arith.constant 5.000000e-01 : f32
    %332 = vector.broadcast %cst_136 : f32 to vector<2x32xf32>
    %333 = arith.addf %331, %332 : vector<2x32xf32>
    %334 = vector.extract_strided_slice %328 {offsets = [0, 32], sizes = [2, 32], strides = [1, 1]} : vector<2x128xf32> to vector<2x32xf32>
    %cst_137 = arith.constant 5.000000e-01 : f32
    %335 = vector.broadcast %cst_137 : f32 to vector<2x32xf32>
    %336 = arith.mulf %335, %334 : vector<2x32xf32>
    %cst_138 = arith.constant 5.000000e-01 : f32
    %337 = vector.broadcast %cst_138 : f32 to vector<2x32xf32>
    %338 = arith.addf %336, %337 : vector<2x32xf32>
    %339 = vector.extract_strided_slice %328 {offsets = [0, 64], sizes = [2, 32], strides = [1, 1]} : vector<2x128xf32> to vector<2x32xf32>
    %340 = vector.extract_strided_slice %328 {offsets = [0, 96], sizes = [2, 32], strides = [1, 1]} : vector<2x128xf32> to vector<2x32xf32>
    %cst_139 = arith.constant 5.000000e-01 : f32
    %341 = vector.broadcast %cst_139 : f32 to vector<2x32xf32>
    %342 = arith.mulf %341, %340 : vector<2x32xf32>
    %cst_140 = arith.constant 5.000000e-01 : f32
    %343 = vector.broadcast %cst_140 : f32 to vector<2x32xf32>
    %344 = arith.addf %342, %343 : vector<2x32xf32>
    %345 = arith.mulf %338, %322 : vector<2x32xf32>
    %346 = arith.mulf %333, %339 : vector<2x32xf32>
    %347 = arith.addf %345, %346 : vector<2x32xf32>
    %348 = math.tanh %347 : vector<2x32xf32>
    %349 = arith.mulf %344, %348 : vector<2x32xf32>
    %350 = vector.extract_strided_slice %105 {offsets = [12, 0], sizes = [2, 128], strides = [1, 1]} : vector<16x128xf32> to vector<2x128xf32>
    %cst_141 = arith.constant dense<0.000000e+00> : vector<2x128xf32>
    %351 = tpu.matmul %349, %0, %cst_141 {dimension_numbers = #tpu.dot_dimension_numbers<[1], [0], [0], [1], [0, 0, 1, 1], [], []>} : vector<2x32xf32>, vector<32x128xf32>, vector<2x128xf32> -> vector<2x128xf32>
    %352 = arith.addf %350, %351 : vector<2x128xf32>
    %353 = math.tanh %352 : vector<2x128xf32>
    %354 = vector.extract_strided_slice %353 {offsets = [0, 0], sizes = [2, 32], strides = [1, 1]} : vector<2x128xf32> to vector<2x32xf32>
    %cst_142 = arith.constant 5.000000e-01 : f32
    %355 = vector.broadcast %cst_142 : f32 to vector<2x32xf32>
    %356 = arith.mulf %355, %354 : vector<2x32xf32>
    %cst_143 = arith.constant 5.000000e-01 : f32
    %357 = vector.broadcast %cst_143 : f32 to vector<2x32xf32>
    %358 = arith.addf %356, %357 : vector<2x32xf32>
    %359 = vector.extract_strided_slice %353 {offsets = [0, 32], sizes = [2, 32], strides = [1, 1]} : vector<2x128xf32> to vector<2x32xf32>
    %cst_144 = arith.constant 5.000000e-01 : f32
    %360 = vector.broadcast %cst_144 : f32 to vector<2x32xf32>
    %361 = arith.mulf %360, %359 : vector<2x32xf32>
    %cst_145 = arith.constant 5.000000e-01 : f32
    %362 = vector.broadcast %cst_145 : f32 to vector<2x32xf32>
    %363 = arith.addf %361, %362 : vector<2x32xf32>
    %364 = vector.extract_strided_slice %353 {offsets = [0, 64], sizes = [2, 32], strides = [1, 1]} : vector<2x128xf32> to vector<2x32xf32>
    %365 = vector.extract_strided_slice %353 {offsets = [0, 96], sizes = [2, 32], strides = [1, 1]} : vector<2x128xf32> to vector<2x32xf32>
    %cst_146 = arith.constant 5.000000e-01 : f32
    %366 = vector.broadcast %cst_146 : f32 to vector<2x32xf32>
    %367 = arith.mulf %366, %365 : vector<2x32xf32>
    %cst_147 = arith.constant 5.000000e-01 : f32
    %368 = vector.broadcast %cst_147 : f32 to vector<2x32xf32>
    %369 = arith.addf %367, %368 : vector<2x32xf32>
    %370 = arith.mulf %363, %347 : vector<2x32xf32>
    %371 = arith.mulf %358, %364 : vector<2x32xf32>
    %372 = arith.addf %370, %371 : vector<2x32xf32>
    %373 = math.tanh %372 : vector<2x32xf32>
    %374 = arith.mulf %369, %373 : vector<2x32xf32>
    %375 = vector.extract_strided_slice %105 {offsets = [14, 0], sizes = [2, 128], strides = [1, 1]} : vector<16x128xf32> to vector<2x128xf32>
    %cst_148 = arith.constant dense<0.000000e+00> : vector<2x128xf32>
    %376 = tpu.matmul %374, %0, %cst_148 {dimension_numbers = #tpu.dot_dimension_numbers<[1], [0], [0], [1], [0, 0, 1, 1], [], []>} : vector<2x32xf32>, vector<32x128xf32>, vector<2x128xf32> -> vector<2x128xf32>
    %377 = arith.addf %375, %376 : vector<2x128xf32>
    %378 = math.tanh %377 : vector<2x128xf32>
    %379 = vector.extract_strided_slice %378 {offsets = [0, 0], sizes = [2, 32], strides = [1, 1]} : vector<2x128xf32> to vector<2x32xf32>
    %cst_149 = arith.constant 5.000000e-01 : f32
    %380 = vector.broadcast %cst_149 : f32 to vector<2x32xf32>
    %381 = arith.mulf %380, %379 : vector<2x32xf32>
    %cst_150 = arith.constant 5.000000e-01 : f32
    %382 = vector.broadcast %cst_150 : f32 to vector<2x32xf32>
    %383 = arith.addf %381, %382 : vector<2x32xf32>
    %384 = vector.extract_strided_slice %378 {offsets = [0, 32], sizes = [2, 32], strides = [1, 1]} : vector<2x128xf32> to vector<2x32xf32>
    %cst_151 = arith.constant 5.000000e-01 : f32
    %385 = vector.broadcast %cst_151 : f32 to vector<2x32xf32>
    %386 = arith.mulf %385, %384 : vector<2x32xf32>
    %cst_152 = arith.constant 5.000000e-01 : f32
    %387 = vector.broadcast %cst_152 : f32 to vector<2x32xf32>
    %388 = arith.addf %386, %387 : vector<2x32xf32>
    %389 = vector.extract_strided_slice %378 {offsets = [0, 64], sizes = [2, 32], strides = [1, 1]} : vector<2x128xf32> to vector<2x32xf32>
    %390 = vector.extract_strided_slice %378 {offsets = [0, 96], sizes = [2, 32], strides = [1, 1]} : vector<2x128xf32> to vector<2x32xf32>
    %cst_153 = arith.constant 5.000000e-01 : f32
    %391 = vector.broadcast %cst_153 : f32 to vector<2x32xf32>
    %392 = arith.mulf %391, %390 : vector<2x32xf32>
    %cst_154 = arith.constant 5.000000e-01 : f32
    %393 = vector.broadcast %cst_154 : f32 to vector<2x32xf32>
    %394 = arith.addf %392, %393 : vector<2x32xf32>
    %395 = arith.mulf %388, %372 : vector<2x32xf32>
    %396 = arith.mulf %383, %389 : vector<2x32xf32>
    %397 = arith.addf %395, %396 : vector<2x32xf32>
    %398 = math.tanh %397 : vector<2x32xf32>
    %399 = arith.mulf %394, %398 : vector<2x32xf32>
    %400 = vector.extract_strided_slice %197 {offsets = [0, 0], sizes = [2, 128], strides = [1, 1]} : vector<16x128xf32> to vector<2x128xf32>
    %cst_155 = arith.constant dense<0.000000e+00> : vector<2x128xf32>
    %401 = tpu.matmul %399, %1, %cst_155 {dimension_numbers = #tpu.dot_dimension_numbers<[1], [0], [0], [1], [0, 0, 1, 1], [], []>} : vector<2x32xf32>, vector<32x128xf32>, vector<2x128xf32> -> vector<2x128xf32>
    %402 = arith.addf %400, %401 : vector<2x128xf32>
    %403 = math.tanh %402 : vector<2x128xf32>
    %404 = vector.extract_strided_slice %403 {offsets = [0, 0], sizes = [2, 32], strides = [1, 1]} : vector<2x128xf32> to vector<2x32xf32>
    %cst_156 = arith.constant 5.000000e-01 : f32
    %405 = vector.broadcast %cst_156 : f32 to vector<2x32xf32>
    %406 = arith.mulf %405, %404 : vector<2x32xf32>
    %cst_157 = arith.constant 5.000000e-01 : f32
    %407 = vector.broadcast %cst_157 : f32 to vector<2x32xf32>
    %408 = arith.addf %406, %407 : vector<2x32xf32>
    %409 = vector.extract_strided_slice %403 {offsets = [0, 32], sizes = [2, 32], strides = [1, 1]} : vector<2x128xf32> to vector<2x32xf32>
    %cst_158 = arith.constant 5.000000e-01 : f32
    %410 = vector.broadcast %cst_158 : f32 to vector<2x32xf32>
    %411 = arith.mulf %410, %409 : vector<2x32xf32>
    %cst_159 = arith.constant 5.000000e-01 : f32
    %412 = vector.broadcast %cst_159 : f32 to vector<2x32xf32>
    %413 = arith.addf %411, %412 : vector<2x32xf32>
    %414 = vector.extract_strided_slice %403 {offsets = [0, 64], sizes = [2, 32], strides = [1, 1]} : vector<2x128xf32> to vector<2x32xf32>
    %415 = vector.extract_strided_slice %403 {offsets = [0, 96], sizes = [2, 32], strides = [1, 1]} : vector<2x128xf32> to vector<2x32xf32>
    %cst_160 = arith.constant 5.000000e-01 : f32
    %416 = vector.broadcast %cst_160 : f32 to vector<2x32xf32>
    %417 = arith.mulf %416, %415 : vector<2x32xf32>
    %cst_161 = arith.constant 5.000000e-01 : f32
    %418 = vector.broadcast %cst_161 : f32 to vector<2x32xf32>
    %419 = arith.addf %417, %418 : vector<2x32xf32>
    %420 = arith.mulf %413, %397 : vector<2x32xf32>
    %421 = arith.mulf %408, %414 : vector<2x32xf32>
    %422 = arith.addf %420, %421 : vector<2x32xf32>
    %423 = math.tanh %422 : vector<2x32xf32>
    %424 = arith.mulf %419, %423 : vector<2x32xf32>
    %cst_162 = arith.constant dense<0.000000e+00> : vector<2x128xf32>
    %425 = tpu.matmul %424, %3, %cst_162 {dimension_numbers = #tpu.dot_dimension_numbers<[1], [0], [0], [1], [0, 0, 1, 1], [], []>} : vector<2x32xf32>, vector<32x128xf32>, vector<2x128xf32> -> vector<2x128xf32>
    %426 = arith.addf %425, %9 : vector<2x128xf32>
    %427 = vector.shape_cast %426 : vector<2x128xf32> to vector<2x1x128xf32>
    %c0_163 = arith.constant 0 : index
    %c1_164 = arith.constant 1 : index
    %c0_165 = arith.constant 0 : index
    %428 = vector.load %arg11[%c0_163, %c1_164, %c0_165] : memref<2x8x128xf32, #tpu.memory_space<vmem>>, vector<2x1x128xf32>
    tpu.vector_store %arg11[%c0_163, %c1_164, %c0_165], %427 {strides = array<i32>} : memref<2x8x128xf32, #tpu.memory_space<vmem>>, vector<2x1x128xf32>,
    %c1_166 = arith.constant 1 : index
    %429 = memref.load %arg0[%c1_166] : memref<8xi32, #tpu.memory_space<smem>>
    %c0_i32_167 = arith.constant 0 : i32
    %430 = arith.cmpi eq, %429, %c0_i32_167 : i32
    %431 = arith.extui %430 : i1 to i32
    %c0_i32_168 = arith.constant 0 : i32
    %432 = arith.cmpi ne, %431, %c0_i32_168 : i32
    scf.if %432 {
      %cst_280 = arith.constant dense<0xFF800000> : vector<2xf32>
      %651 = vector.multi_reduction <maximumf>, %426, %cst_280 [1] : vector<2x128xf32> to vector<2xf32>
      %652 = vector.shape_cast %651 : vector<2xf32> to vector<2x1xf32>
      %653 = vector.broadcast %652 : vector<2x1xf32> to vector<2x128xf32>
      %654 = arith.cmpf oeq, %426, %653 : vector<2x128xf32>
      %c128_i32 = arith.constant 128 : i32
      %655 = vector.broadcast %c128_i32 : i32 to vector<2x128xi32>
      %656 = arith.select %654, %10, %655 : vector<2x128xi1>, vector<2x128xi32>
      %cst_281 = arith.constant dense<2147483647> : vector<2xi32>
      %657 = vector.multi_reduction <minsi>, %656, %cst_281 [1] : vector<2x128xi32> to vector<2xi32>
      %658 = vector.shape_cast %657 : vector<2xi32> to vector<2x1xi32>
      %659 = vector.broadcast %658 : vector<2x1xi32> to vector<2x128xi32>
      %660 = arith.cmpi eq, %659, %10 : vector<2x128xi32>
      %661 = arith.extui %660 : vector<2x128xi1> to vector<2x128xi32>
      %662 = arith.sitofp %661 : vector<2x128xi32> to vector<2x128xf32>
      %cst_282 = arith.constant dense<0.000000e+00> : vector<2x128xf32>
      %663 = tpu.matmul %662, %2, %cst_282 {dimension_numbers = #tpu.dot_dimension_numbers<[1], [0], [0], [1], [0, 0, 1, 1], [], []>} : vector<2x128xf32>, vector<128x128xf32>, vector<2x128xf32> -> vector<2x128xf32>
      %664 = arith.addf %663, %6 : vector<2x128xf32>
      %c0_283 = arith.constant 0 : index
      %c0_284 = arith.constant 0 : index
      %665 = vector.load %arg12[%c0_283, %c0_284] : memref<2x128xf32, #tpu.memory_space<vmem>>, vector<2x128xf32>
      tpu.vector_store %arg12[%c0_283, %c0_284], %664 {strides = array<i32>} : memref<2x128xf32, #tpu.memory_space<vmem>>, vector<2x128xf32>,
    } else {
    }
    %c1_169 = arith.constant 1 : index
    %433 = memref.load %arg0[%c1_169] : memref<8xi32, #tpu.memory_space<smem>>
    %c0_i32_170 = arith.constant 0 : i32
    %434 = arith.cmpi ne, %433, %c0_i32_170 : i32
    %435 = arith.extui %434 : i1 to i32
    %c0_i32_171 = arith.constant 0 : i32
    %436 = arith.cmpi ne, %435, %c0_i32_171 : i32
    scf.if %436 {
      %651 = vector.extract_strided_slice %197 {offsets = [2, 0], sizes = [2, 128], strides = [1, 1]} : vector<16x128xf32> to vector<2x128xf32>
      %c0_280 = arith.constant 0 : index
      %c0_281 = arith.constant 0 : index
      %652 = vector.load %arg12[%c0_280, %c0_281] : memref<2x128xf32, #tpu.memory_space<vmem>>, vector<2x128xf32>
      tpu.vector_store %arg12[%c0_280, %c0_281], %651 {strides = array<i32>} : memref<2x128xf32, #tpu.memory_space<vmem>>, vector<2x128xf32>,
    } else {
    }
    %c0_172 = arith.constant 0 : index
    %c0_173 = arith.constant 0 : index
    %437 = vector.load %arg12[%c0_172, %c0_173] : memref<2x128xf32, #tpu.memory_space<vmem>>, vector<2x128xf32>
    %cst_174 = arith.constant dense<0.000000e+00> : vector<2x128xf32>
    %438 = tpu.matmul %424, %1, %cst_174 {dimension_numbers = #tpu.dot_dimension_numbers<[1], [0], [0], [1], [0, 0, 1, 1], [], []>} : vector<2x32xf32>, vector<32x128xf32>, vector<2x128xf32> -> vector<2x128xf32>
    %439 = arith.addf %437, %438 : vector<2x128xf32>
    %440 = math.tanh %439 : vector<2x128xf32>
    %441 = vector.extract_strided_slice %440 {offsets = [0, 0], sizes = [2, 32], strides = [1, 1]} : vector<2x128xf32> to vector<2x32xf32>
    %cst_175 = arith.constant 5.000000e-01 : f32
    %442 = vector.broadcast %cst_175 : f32 to vector<2x32xf32>
    %443 = arith.mulf %442, %441 : vector<2x32xf32>
    %cst_176 = arith.constant 5.000000e-01 : f32
    %444 = vector.broadcast %cst_176 : f32 to vector<2x32xf32>
    %445 = arith.addf %443, %444 : vector<2x32xf32>
    %446 = vector.extract_strided_slice %440 {offsets = [0, 32], sizes = [2, 32], strides = [1, 1]} : vector<2x128xf32> to vector<2x32xf32>
    %cst_177 = arith.constant 5.000000e-01 : f32
    %447 = vector.broadcast %cst_177 : f32 to vector<2x32xf32>
    %448 = arith.mulf %447, %446 : vector<2x32xf32>
    %cst_178 = arith.constant 5.000000e-01 : f32
    %449 = vector.broadcast %cst_178 : f32 to vector<2x32xf32>
    %450 = arith.addf %448, %449 : vector<2x32xf32>
    %451 = vector.extract_strided_slice %440 {offsets = [0, 64], sizes = [2, 32], strides = [1, 1]} : vector<2x128xf32> to vector<2x32xf32>
    %452 = vector.extract_strided_slice %440 {offsets = [0, 96], sizes = [2, 32], strides = [1, 1]} : vector<2x128xf32> to vector<2x32xf32>
    %cst_179 = arith.constant 5.000000e-01 : f32
    %453 = vector.broadcast %cst_179 : f32 to vector<2x32xf32>
    %454 = arith.mulf %453, %452 : vector<2x32xf32>
    %cst_180 = arith.constant 5.000000e-01 : f32
    %455 = vector.broadcast %cst_180 : f32 to vector<2x32xf32>
    %456 = arith.addf %454, %455 : vector<2x32xf32>
    %457 = arith.mulf %450, %422 : vector<2x32xf32>
    %458 = arith.mulf %445, %451 : vector<2x32xf32>
    %459 = arith.addf %457, %458 : vector<2x32xf32>
    %460 = math.tanh %459 : vector<2x32xf32>
    %461 = arith.mulf %456, %460 : vector<2x32xf32>
    %cst_181 = arith.constant dense<0.000000e+00> : vector<2x128xf32>
    %462 = tpu.matmul %461, %3, %cst_181 {dimension_numbers = #tpu.dot_dimension_numbers<[1], [0], [0], [1], [0, 0, 1, 1], [], []>} : vector<2x32xf32>, vector<32x128xf32>, vector<2x128xf32> -> vector<2x128xf32>
    %463 = arith.addf %462, %9 : vector<2x128xf32>
    %464 = vector.shape_cast %463 : vector<2x128xf32> to vector<2x1x128xf32>
    %c0_182 = arith.constant 0 : index
    %c2_183 = arith.constant 2 : index
    %c0_184 = arith.constant 0 : index
    %465 = vector.load %arg11[%c0_182, %c2_183, %c0_184] : memref<2x8x128xf32, #tpu.memory_space<vmem>>, vector<2x1x128xf32>
    tpu.vector_store %arg11[%c0_182, %c2_183, %c0_184], %464 {strides = array<i32>} : memref<2x8x128xf32, #tpu.memory_space<vmem>>, vector<2x1x128xf32>,
    %c2_185 = arith.constant 2 : index
    %466 = memref.load %arg0[%c2_185] : memref<8xi32, #tpu.memory_space<smem>>
    %c0_i32_186 = arith.constant 0 : i32
    %467 = arith.cmpi eq, %466, %c0_i32_186 : i32
    %468 = arith.extui %467 : i1 to i32
    %c0_i32_187 = arith.constant 0 : i32
    %469 = arith.cmpi ne, %468, %c0_i32_187 : i32
    scf.if %469 {
      %cst_280 = arith.constant dense<0xFF800000> : vector<2xf32>
      %651 = vector.multi_reduction <maximumf>, %463, %cst_280 [1] : vector<2x128xf32> to vector<2xf32>
      %652 = vector.shape_cast %651 : vector<2xf32> to vector<2x1xf32>
      %653 = vector.broadcast %652 : vector<2x1xf32> to vector<2x128xf32>
      %654 = arith.cmpf oeq, %463, %653 : vector<2x128xf32>
      %c128_i32 = arith.constant 128 : i32
      %655 = vector.broadcast %c128_i32 : i32 to vector<2x128xi32>
      %656 = arith.select %654, %10, %655 : vector<2x128xi1>, vector<2x128xi32>
      %cst_281 = arith.constant dense<2147483647> : vector<2xi32>
      %657 = vector.multi_reduction <minsi>, %656, %cst_281 [1] : vector<2x128xi32> to vector<2xi32>
      %658 = vector.shape_cast %657 : vector<2xi32> to vector<2x1xi32>
      %659 = vector.broadcast %658 : vector<2x1xi32> to vector<2x128xi32>
      %660 = arith.cmpi eq, %659, %10 : vector<2x128xi32>
      %661 = arith.extui %660 : vector<2x128xi1> to vector<2x128xi32>
      %662 = arith.sitofp %661 : vector<2x128xi32> to vector<2x128xf32>
      %cst_282 = arith.constant dense<0.000000e+00> : vector<2x128xf32>
      %663 = tpu.matmul %662, %2, %cst_282 {dimension_numbers = #tpu.dot_dimension_numbers<[1], [0], [0], [1], [0, 0, 1, 1], [], []>} : vector<2x128xf32>, vector<128x128xf32>, vector<2x128xf32> -> vector<2x128xf32>
      %664 = arith.addf %663, %6 : vector<2x128xf32>
      %c0_283 = arith.constant 0 : index
      %c0_284 = arith.constant 0 : index
      %665 = vector.load %arg12[%c0_283, %c0_284] : memref<2x128xf32, #tpu.memory_space<vmem>>, vector<2x128xf32>
      tpu.vector_store %arg12[%c0_283, %c0_284], %664 {strides = array<i32>} : memref<2x128xf32, #tpu.memory_space<vmem>>, vector<2x128xf32>,
    } else {
    }
    %c2_188 = arith.constant 2 : index
    %470 = memref.load %arg0[%c2_188] : memref<8xi32, #tpu.memory_space<smem>>
    %c0_i32_189 = arith.constant 0 : i32
    %471 = arith.cmpi ne, %470, %c0_i32_189 : i32
    %472 = arith.extui %471 : i1 to i32
    %c0_i32_190 = arith.constant 0 : i32
    %473 = arith.cmpi ne, %472, %c0_i32_190 : i32
    scf.if %473 {
      %651 = vector.extract_strided_slice %197 {offsets = [4, 0], sizes = [2, 128], strides = [1, 1]} : vector<16x128xf32> to vector<2x128xf32>
      %c0_280 = arith.constant 0 : index
      %c0_281 = arith.constant 0 : index
      %652 = vector.load %arg12[%c0_280, %c0_281] : memref<2x128xf32, #tpu.memory_space<vmem>>, vector<2x128xf32>
      tpu.vector_store %arg12[%c0_280, %c0_281], %651 {strides = array<i32>} : memref<2x128xf32, #tpu.memory_space<vmem>>, vector<2x128xf32>,
    } else {
    }
    %c0_191 = arith.constant 0 : index
    %c0_192 = arith.constant 0 : index
    %474 = vector.load %arg12[%c0_191, %c0_192] : memref<2x128xf32, #tpu.memory_space<vmem>>, vector<2x128xf32>
    %cst_193 = arith.constant dense<0.000000e+00> : vector<2x128xf32>
    %475 = tpu.matmul %461, %1, %cst_193 {dimension_numbers = #tpu.dot_dimension_numbers<[1], [0], [0], [1], [0, 0, 1, 1], [], []>} : vector<2x32xf32>, vector<32x128xf32>, vector<2x128xf32> -> vector<2x128xf32>
    %476 = arith.addf %474, %475 : vector<2x128xf32>
    %477 = math.tanh %476 : vector<2x128xf32>
    %478 = vector.extract_strided_slice %477 {offsets = [0, 0], sizes = [2, 32], strides = [1, 1]} : vector<2x128xf32> to vector<2x32xf32>
    %cst_194 = arith.constant 5.000000e-01 : f32
    %479 = vector.broadcast %cst_194 : f32 to vector<2x32xf32>
    %480 = arith.mulf %479, %478 : vector<2x32xf32>
    %cst_195 = arith.constant 5.000000e-01 : f32
    %481 = vector.broadcast %cst_195 : f32 to vector<2x32xf32>
    %482 = arith.addf %480, %481 : vector<2x32xf32>
    %483 = vector.extract_strided_slice %477 {offsets = [0, 32], sizes = [2, 32], strides = [1, 1]} : vector<2x128xf32> to vector<2x32xf32>
    %cst_196 = arith.constant 5.000000e-01 : f32
    %484 = vector.broadcast %cst_196 : f32 to vector<2x32xf32>
    %485 = arith.mulf %484, %483 : vector<2x32xf32>
    %cst_197 = arith.constant 5.000000e-01 : f32
    %486 = vector.broadcast %cst_197 : f32 to vector<2x32xf32>
    %487 = arith.addf %485, %486 : vector<2x32xf32>
    %488 = vector.extract_strided_slice %477 {offsets = [0, 64], sizes = [2, 32], strides = [1, 1]} : vector<2x128xf32> to vector<2x32xf32>
    %489 = vector.extract_strided_slice %477 {offsets = [0, 96], sizes = [2, 32], strides = [1, 1]} : vector<2x128xf32> to vector<2x32xf32>
    %cst_198 = arith.constant 5.000000e-01 : f32
    %490 = vector.broadcast %cst_198 : f32 to vector<2x32xf32>
    %491 = arith.mulf %490, %489 : vector<2x32xf32>
    %cst_199 = arith.constant 5.000000e-01 : f32
    %492 = vector.broadcast %cst_199 : f32 to vector<2x32xf32>
    %493 = arith.addf %491, %492 : vector<2x32xf32>
    %494 = arith.mulf %487, %459 : vector<2x32xf32>
    %495 = arith.mulf %482, %488 : vector<2x32xf32>
    %496 = arith.addf %494, %495 : vector<2x32xf32>
    %497 = math.tanh %496 : vector<2x32xf32>
    %498 = arith.mulf %493, %497 : vector<2x32xf32>
    %cst_200 = arith.constant dense<0.000000e+00> : vector<2x128xf32>
    %499 = tpu.matmul %498, %3, %cst_200 {dimension_numbers = #tpu.dot_dimension_numbers<[1], [0], [0], [1], [0, 0, 1, 1], [], []>} : vector<2x32xf32>, vector<32x128xf32>, vector<2x128xf32> -> vector<2x128xf32>
    %500 = arith.addf %499, %9 : vector<2x128xf32>
    %501 = vector.shape_cast %500 : vector<2x128xf32> to vector<2x1x128xf32>
    %c0_201 = arith.constant 0 : index
    %c3_202 = arith.constant 3 : index
    %c0_203 = arith.constant 0 : index
    %502 = vector.load %arg11[%c0_201, %c3_202, %c0_203] : memref<2x8x128xf32, #tpu.memory_space<vmem>>, vector<2x1x128xf32>
    tpu.vector_store %arg11[%c0_201, %c3_202, %c0_203], %501 {strides = array<i32>} : memref<2x8x128xf32, #tpu.memory_space<vmem>>, vector<2x1x128xf32>,
    %c3_204 = arith.constant 3 : index
    %503 = memref.load %arg0[%c3_204] : memref<8xi32, #tpu.memory_space<smem>>
    %c0_i32_205 = arith.constant 0 : i32
    %504 = arith.cmpi eq, %503, %c0_i32_205 : i32
    %505 = arith.extui %504 : i1 to i32
    %c0_i32_206 = arith.constant 0 : i32
    %506 = arith.cmpi ne, %505, %c0_i32_206 : i32
    scf.if %506 {
      %cst_280 = arith.constant dense<0xFF800000> : vector<2xf32>
      %651 = vector.multi_reduction <maximumf>, %500, %cst_280 [1] : vector<2x128xf32> to vector<2xf32>
      %652 = vector.shape_cast %651 : vector<2xf32> to vector<2x1xf32>
      %653 = vector.broadcast %652 : vector<2x1xf32> to vector<2x128xf32>
      %654 = arith.cmpf oeq, %500, %653 : vector<2x128xf32>
      %c128_i32 = arith.constant 128 : i32
      %655 = vector.broadcast %c128_i32 : i32 to vector<2x128xi32>
      %656 = arith.select %654, %10, %655 : vector<2x128xi1>, vector<2x128xi32>
      %cst_281 = arith.constant dense<2147483647> : vector<2xi32>
      %657 = vector.multi_reduction <minsi>, %656, %cst_281 [1] : vector<2x128xi32> to vector<2xi32>
      %658 = vector.shape_cast %657 : vector<2xi32> to vector<2x1xi32>
      %659 = vector.broadcast %658 : vector<2x1xi32> to vector<2x128xi32>
      %660 = arith.cmpi eq, %659, %10 : vector<2x128xi32>
      %661 = arith.extui %660 : vector<2x128xi1> to vector<2x128xi32>
      %662 = arith.sitofp %661 : vector<2x128xi32> to vector<2x128xf32>
      %cst_282 = arith.constant dense<0.000000e+00> : vector<2x128xf32>
      %663 = tpu.matmul %662, %2, %cst_282 {dimension_numbers = #tpu.dot_dimension_numbers<[1], [0], [0], [1], [0, 0, 1, 1], [], []>} : vector<2x128xf32>, vector<128x128xf32>, vector<2x128xf32> -> vector<2x128xf32>
      %664 = arith.addf %663, %6 : vector<2x128xf32>
      %c0_283 = arith.constant 0 : index
      %c0_284 = arith.constant 0 : index
      %665 = vector.load %arg12[%c0_283, %c0_284] : memref<2x128xf32, #tpu.memory_space<vmem>>, vector<2x128xf32>
      tpu.vector_store %arg12[%c0_283, %c0_284], %664 {strides = array<i32>} : memref<2x128xf32, #tpu.memory_space<vmem>>, vector<2x128xf32>,
    } else {
    }
    %c3_207 = arith.constant 3 : index
    %507 = memref.load %arg0[%c3_207] : memref<8xi32, #tpu.memory_space<smem>>
    %c0_i32_208 = arith.constant 0 : i32
    %508 = arith.cmpi ne, %507, %c0_i32_208 : i32
    %509 = arith.extui %508 : i1 to i32
    %c0_i32_209 = arith.constant 0 : i32
    %510 = arith.cmpi ne, %509, %c0_i32_209 : i32
    scf.if %510 {
      %651 = vector.extract_strided_slice %197 {offsets = [6, 0], sizes = [2, 128], strides = [1, 1]} : vector<16x128xf32> to vector<2x128xf32>
      %c0_280 = arith.constant 0 : index
      %c0_281 = arith.constant 0 : index
      %652 = vector.load %arg12[%c0_280, %c0_281] : memref<2x128xf32, #tpu.memory_space<vmem>>, vector<2x128xf32>
      tpu.vector_store %arg12[%c0_280, %c0_281], %651 {strides = array<i32>} : memref<2x128xf32, #tpu.memory_space<vmem>>, vector<2x128xf32>,
    } else {
    }
    %c0_210 = arith.constant 0 : index
    %c0_211 = arith.constant 0 : index
    %511 = vector.load %arg12[%c0_210, %c0_211] : memref<2x128xf32, #tpu.memory_space<vmem>>, vector<2x128xf32>
    %cst_212 = arith.constant dense<0.000000e+00> : vector<2x128xf32>
    %512 = tpu.matmul %498, %1, %cst_212 {dimension_numbers = #tpu.dot_dimension_numbers<[1], [0], [0], [1], [0, 0, 1, 1], [], []>} : vector<2x32xf32>, vector<32x128xf32>, vector<2x128xf32> -> vector<2x128xf32>
    %513 = arith.addf %511, %512 : vector<2x128xf32>
    %514 = math.tanh %513 : vector<2x128xf32>
    %515 = vector.extract_strided_slice %514 {offsets = [0, 0], sizes = [2, 32], strides = [1, 1]} : vector<2x128xf32> to vector<2x32xf32>
    %cst_213 = arith.constant 5.000000e-01 : f32
    %516 = vector.broadcast %cst_213 : f32 to vector<2x32xf32>
    %517 = arith.mulf %516, %515 : vector<2x32xf32>
    %cst_214 = arith.constant 5.000000e-01 : f32
    %518 = vector.broadcast %cst_214 : f32 to vector<2x32xf32>
    %519 = arith.addf %517, %518 : vector<2x32xf32>
    %520 = vector.extract_strided_slice %514 {offsets = [0, 32], sizes = [2, 32], strides = [1, 1]} : vector<2x128xf32> to vector<2x32xf32>
    %cst_215 = arith.constant 5.000000e-01 : f32
    %521 = vector.broadcast %cst_215 : f32 to vector<2x32xf32>
    %522 = arith.mulf %521, %520 : vector<2x32xf32>
    %cst_216 = arith.constant 5.000000e-01 : f32
    %523 = vector.broadcast %cst_216 : f32 to vector<2x32xf32>
    %524 = arith.addf %522, %523 : vector<2x32xf32>
    %525 = vector.extract_strided_slice %514 {offsets = [0, 64], sizes = [2, 32], strides = [1, 1]} : vector<2x128xf32> to vector<2x32xf32>
    %526 = vector.extract_strided_slice %514 {offsets = [0, 96], sizes = [2, 32], strides = [1, 1]} : vector<2x128xf32> to vector<2x32xf32>
    %cst_217 = arith.constant 5.000000e-01 : f32
    %527 = vector.broadcast %cst_217 : f32 to vector<2x32xf32>
    %528 = arith.mulf %527, %526 : vector<2x32xf32>
    %cst_218 = arith.constant 5.000000e-01 : f32
    %529 = vector.broadcast %cst_218 : f32 to vector<2x32xf32>
    %530 = arith.addf %528, %529 : vector<2x32xf32>
    %531 = arith.mulf %524, %496 : vector<2x32xf32>
    %532 = arith.mulf %519, %525 : vector<2x32xf32>
    %533 = arith.addf %531, %532 : vector<2x32xf32>
    %534 = math.tanh %533 : vector<2x32xf32>
    %535 = arith.mulf %530, %534 : vector<2x32xf32>
    %cst_219 = arith.constant dense<0.000000e+00> : vector<2x128xf32>
    %536 = tpu.matmul %535, %3, %cst_219 {dimension_numbers = #tpu.dot_dimension_numbers<[1], [0], [0], [1], [0, 0, 1, 1], [], []>} : vector<2x32xf32>, vector<32x128xf32>, vector<2x128xf32> -> vector<2x128xf32>
    %537 = arith.addf %536, %9 : vector<2x128xf32>
    %538 = vector.shape_cast %537 : vector<2x128xf32> to vector<2x1x128xf32>
    %c0_220 = arith.constant 0 : index
    %c4_221 = arith.constant 4 : index
    %c0_222 = arith.constant 0 : index
    %539 = vector.load %arg11[%c0_220, %c4_221, %c0_222] : memref<2x8x128xf32, #tpu.memory_space<vmem>>, vector<2x1x128xf32>
    tpu.vector_store %arg11[%c0_220, %c4_221, %c0_222], %538 {strides = array<i32>} : memref<2x8x128xf32, #tpu.memory_space<vmem>>, vector<2x1x128xf32>,
    %c4_223 = arith.constant 4 : index
    %540 = memref.load %arg0[%c4_223] : memref<8xi32, #tpu.memory_space<smem>>
    %c0_i32_224 = arith.constant 0 : i32
    %541 = arith.cmpi eq, %540, %c0_i32_224 : i32
    %542 = arith.extui %541 : i1 to i32
    %c0_i32_225 = arith.constant 0 : i32
    %543 = arith.cmpi ne, %542, %c0_i32_225 : i32
    scf.if %543 {
      %cst_280 = arith.constant dense<0xFF800000> : vector<2xf32>
      %651 = vector.multi_reduction <maximumf>, %537, %cst_280 [1] : vector<2x128xf32> to vector<2xf32>
      %652 = vector.shape_cast %651 : vector<2xf32> to vector<2x1xf32>
      %653 = vector.broadcast %652 : vector<2x1xf32> to vector<2x128xf32>
      %654 = arith.cmpf oeq, %537, %653 : vector<2x128xf32>
      %c128_i32 = arith.constant 128 : i32
      %655 = vector.broadcast %c128_i32 : i32 to vector<2x128xi32>
      %656 = arith.select %654, %10, %655 : vector<2x128xi1>, vector<2x128xi32>
      %cst_281 = arith.constant dense<2147483647> : vector<2xi32>
      %657 = vector.multi_reduction <minsi>, %656, %cst_281 [1] : vector<2x128xi32> to vector<2xi32>
      %658 = vector.shape_cast %657 : vector<2xi32> to vector<2x1xi32>
      %659 = vector.broadcast %658 : vector<2x1xi32> to vector<2x128xi32>
      %660 = arith.cmpi eq, %659, %10 : vector<2x128xi32>
      %661 = arith.extui %660 : vector<2x128xi1> to vector<2x128xi32>
      %662 = arith.sitofp %661 : vector<2x128xi32> to vector<2x128xf32>
      %cst_282 = arith.constant dense<0.000000e+00> : vector<2x128xf32>
      %663 = tpu.matmul %662, %2, %cst_282 {dimension_numbers = #tpu.dot_dimension_numbers<[1], [0], [0], [1], [0, 0, 1, 1], [], []>} : vector<2x128xf32>, vector<128x128xf32>, vector<2x128xf32> -> vector<2x128xf32>
      %664 = arith.addf %663, %6 : vector<2x128xf32>
      %c0_283 = arith.constant 0 : index
      %c0_284 = arith.constant 0 : index
      %665 = vector.load %arg12[%c0_283, %c0_284] : memref<2x128xf32, #tpu.memory_space<vmem>>, vector<2x128xf32>
      tpu.vector_store %arg12[%c0_283, %c0_284], %664 {strides = array<i32>} : memref<2x128xf32, #tpu.memory_space<vmem>>, vector<2x128xf32>,
    } else {
    }
    %c4_226 = arith.constant 4 : index
    %544 = memref.load %arg0[%c4_226] : memref<8xi32, #tpu.memory_space<smem>>
    %c0_i32_227 = arith.constant 0 : i32
    %545 = arith.cmpi ne, %544, %c0_i32_227 : i32
    %546 = arith.extui %545 : i1 to i32
    %c0_i32_228 = arith.constant 0 : i32
    %547 = arith.cmpi ne, %546, %c0_i32_228 : i32
    scf.if %547 {
      %651 = vector.extract_strided_slice %197 {offsets = [8, 0], sizes = [2, 128], strides = [1, 1]} : vector<16x128xf32> to vector<2x128xf32>
      %c0_280 = arith.constant 0 : index
      %c0_281 = arith.constant 0 : index
      %652 = vector.load %arg12[%c0_280, %c0_281] : memref<2x128xf32, #tpu.memory_space<vmem>>, vector<2x128xf32>
      tpu.vector_store %arg12[%c0_280, %c0_281], %651 {strides = array<i32>} : memref<2x128xf32, #tpu.memory_space<vmem>>, vector<2x128xf32>,
    } else {
    }
    %c0_229 = arith.constant 0 : index
    %c0_230 = arith.constant 0 : index
    %548 = vector.load %arg12[%c0_229, %c0_230] : memref<2x128xf32, #tpu.memory_space<vmem>>, vector<2x128xf32>
    %cst_231 = arith.constant dense<0.000000e+00> : vector<2x128xf32>
    %549 = tpu.matmul %535, %1, %cst_231 {dimension_numbers = #tpu.dot_dimension_numbers<[1], [0], [0], [1], [0, 0, 1, 1], [], []>} : vector<2x32xf32>, vector<32x128xf32>, vector<2x128xf32> -> vector<2x128xf32>
    %550 = arith.addf %548, %549 : vector<2x128xf32>
    %551 = math.tanh %550 : vector<2x128xf32>
    %552 = vector.extract_strided_slice %551 {offsets = [0, 0], sizes = [2, 32], strides = [1, 1]} : vector<2x128xf32> to vector<2x32xf32>
    %cst_232 = arith.constant 5.000000e-01 : f32
    %553 = vector.broadcast %cst_232 : f32 to vector<2x32xf32>
    %554 = arith.mulf %553, %552 : vector<2x32xf32>
    %cst_233 = arith.constant 5.000000e-01 : f32
    %555 = vector.broadcast %cst_233 : f32 to vector<2x32xf32>
    %556 = arith.addf %554, %555 : vector<2x32xf32>
    %557 = vector.extract_strided_slice %551 {offsets = [0, 32], sizes = [2, 32], strides = [1, 1]} : vector<2x128xf32> to vector<2x32xf32>
    %cst_234 = arith.constant 5.000000e-01 : f32
    %558 = vector.broadcast %cst_234 : f32 to vector<2x32xf32>
    %559 = arith.mulf %558, %557 : vector<2x32xf32>
    %cst_235 = arith.constant 5.000000e-01 : f32
    %560 = vector.broadcast %cst_235 : f32 to vector<2x32xf32>
    %561 = arith.addf %559, %560 : vector<2x32xf32>
    %562 = vector.extract_strided_slice %551 {offsets = [0, 64], sizes = [2, 32], strides = [1, 1]} : vector<2x128xf32> to vector<2x32xf32>
    %563 = vector.extract_strided_slice %551 {offsets = [0, 96], sizes = [2, 32], strides = [1, 1]} : vector<2x128xf32> to vector<2x32xf32>
    %cst_236 = arith.constant 5.000000e-01 : f32
    %564 = vector.broadcast %cst_236 : f32 to vector<2x32xf32>
    %565 = arith.mulf %564, %563 : vector<2x32xf32>
    %cst_237 = arith.constant 5.000000e-01 : f32
    %566 = vector.broadcast %cst_237 : f32 to vector<2x32xf32>
    %567 = arith.addf %565, %566 : vector<2x32xf32>
    %568 = arith.mulf %561, %533 : vector<2x32xf32>
    %569 = arith.mulf %556, %562 : vector<2x32xf32>
    %570 = arith.addf %568, %569 : vector<2x32xf32>
    %571 = math.tanh %570 : vector<2x32xf32>
    %572 = arith.mulf %567, %571 : vector<2x32xf32>
    %cst_238 = arith.constant dense<0.000000e+00> : vector<2x128xf32>
    %573 = tpu.matmul %572, %3, %cst_238 {dimension_numbers = #tpu.dot_dimension_numbers<[1], [0], [0], [1], [0, 0, 1, 1], [], []>} : vector<2x32xf32>, vector<32x128xf32>, vector<2x128xf32> -> vector<2x128xf32>
    %574 = arith.addf %573, %9 : vector<2x128xf32>
    %575 = vector.shape_cast %574 : vector<2x128xf32> to vector<2x1x128xf32>
    %c0_239 = arith.constant 0 : index
    %c5_240 = arith.constant 5 : index
    %c0_241 = arith.constant 0 : index
    %576 = vector.load %arg11[%c0_239, %c5_240, %c0_241] : memref<2x8x128xf32, #tpu.memory_space<vmem>>, vector<2x1x128xf32>
    tpu.vector_store %arg11[%c0_239, %c5_240, %c0_241], %575 {strides = array<i32>} : memref<2x8x128xf32, #tpu.memory_space<vmem>>, vector<2x1x128xf32>,
    %c5_242 = arith.constant 5 : index
    %577 = memref.load %arg0[%c5_242] : memref<8xi32, #tpu.memory_space<smem>>
    %c0_i32_243 = arith.constant 0 : i32
    %578 = arith.cmpi eq, %577, %c0_i32_243 : i32
    %579 = arith.extui %578 : i1 to i32
    %c0_i32_244 = arith.constant 0 : i32
    %580 = arith.cmpi ne, %579, %c0_i32_244 : i32
    scf.if %580 {
      %cst_280 = arith.constant dense<0xFF800000> : vector<2xf32>
      %651 = vector.multi_reduction <maximumf>, %574, %cst_280 [1] : vector<2x128xf32> to vector<2xf32>
      %652 = vector.shape_cast %651 : vector<2xf32> to vector<2x1xf32>
      %653 = vector.broadcast %652 : vector<2x1xf32> to vector<2x128xf32>
      %654 = arith.cmpf oeq, %574, %653 : vector<2x128xf32>
      %c128_i32 = arith.constant 128 : i32
      %655 = vector.broadcast %c128_i32 : i32 to vector<2x128xi32>
      %656 = arith.select %654, %10, %655 : vector<2x128xi1>, vector<2x128xi32>
      %cst_281 = arith.constant dense<2147483647> : vector<2xi32>
      %657 = vector.multi_reduction <minsi>, %656, %cst_281 [1] : vector<2x128xi32> to vector<2xi32>
      %658 = vector.shape_cast %657 : vector<2xi32> to vector<2x1xi32>
      %659 = vector.broadcast %658 : vector<2x1xi32> to vector<2x128xi32>
      %660 = arith.cmpi eq, %659, %10 : vector<2x128xi32>
      %661 = arith.extui %660 : vector<2x128xi1> to vector<2x128xi32>
      %662 = arith.sitofp %661 : vector<2x128xi32> to vector<2x128xf32>
      %cst_282 = arith.constant dense<0.000000e+00> : vector<2x128xf32>
      %663 = tpu.matmul %662, %2, %cst_282 {dimension_numbers = #tpu.dot_dimension_numbers<[1], [0], [0], [1], [0, 0, 1, 1], [], []>} : vector<2x128xf32>, vector<128x128xf32>, vector<2x128xf32> -> vector<2x128xf32>
      %664 = arith.addf %663, %6 : vector<2x128xf32>
      %c0_283 = arith.constant 0 : index
      %c0_284 = arith.constant 0 : index
      %665 = vector.load %arg12[%c0_283, %c0_284] : memref<2x128xf32, #tpu.memory_space<vmem>>, vector<2x128xf32>
      tpu.vector_store %arg12[%c0_283, %c0_284], %664 {strides = array<i32>} : memref<2x128xf32, #tpu.memory_space<vmem>>, vector<2x128xf32>,
    } else {
    }
    %c5_245 = arith.constant 5 : index
    %581 = memref.load %arg0[%c5_245] : memref<8xi32, #tpu.memory_space<smem>>
    %c0_i32_246 = arith.constant 0 : i32
    %582 = arith.cmpi ne, %581, %c0_i32_246 : i32
    %583 = arith.extui %582 : i1 to i32
    %c0_i32_247 = arith.constant 0 : i32
    %584 = arith.cmpi ne, %583, %c0_i32_247 : i32
    scf.if %584 {
      %651 = vector.extract_strided_slice %197 {offsets = [10, 0], sizes = [2, 128], strides = [1, 1]} : vector<16x128xf32> to vector<2x128xf32>
      %c0_280 = arith.constant 0 : index
      %c0_281 = arith.constant 0 : index
      %652 = vector.load %arg12[%c0_280, %c0_281] : memref<2x128xf32, #tpu.memory_space<vmem>>, vector<2x128xf32>
      tpu.vector_store %arg12[%c0_280, %c0_281], %651 {strides = array<i32>} : memref<2x128xf32, #tpu.memory_space<vmem>>, vector<2x128xf32>,
    } else {
    }
    %c0_248 = arith.constant 0 : index
    %c0_249 = arith.constant 0 : index
    %585 = vector.load %arg12[%c0_248, %c0_249] : memref<2x128xf32, #tpu.memory_space<vmem>>, vector<2x128xf32>
    %cst_250 = arith.constant dense<0.000000e+00> : vector<2x128xf32>
    %586 = tpu.matmul %572, %1, %cst_250 {dimension_numbers = #tpu.dot_dimension_numbers<[1], [0], [0], [1], [0, 0, 1, 1], [], []>} : vector<2x32xf32>, vector<32x128xf32>, vector<2x128xf32> -> vector<2x128xf32>
    %587 = arith.addf %585, %586 : vector<2x128xf32>
    %588 = math.tanh %587 : vector<2x128xf32>
    %589 = vector.extract_strided_slice %588 {offsets = [0, 0], sizes = [2, 32], strides = [1, 1]} : vector<2x128xf32> to vector<2x32xf32>
    %cst_251 = arith.constant 5.000000e-01 : f32
    %590 = vector.broadcast %cst_251 : f32 to vector<2x32xf32>
    %591 = arith.mulf %590, %589 : vector<2x32xf32>
    %cst_252 = arith.constant 5.000000e-01 : f32
    %592 = vector.broadcast %cst_252 : f32 to vector<2x32xf32>
    %593 = arith.addf %591, %592 : vector<2x32xf32>
    %594 = vector.extract_strided_slice %588 {offsets = [0, 32], sizes = [2, 32], strides = [1, 1]} : vector<2x128xf32> to vector<2x32xf32>
    %cst_253 = arith.constant 5.000000e-01 : f32
    %595 = vector.broadcast %cst_253 : f32 to vector<2x32xf32>
    %596 = arith.mulf %595, %594 : vector<2x32xf32>
    %cst_254 = arith.constant 5.000000e-01 : f32
    %597 = vector.broadcast %cst_254 : f32 to vector<2x32xf32>
    %598 = arith.addf %596, %597 : vector<2x32xf32>
    %599 = vector.extract_strided_slice %588 {offsets = [0, 64], sizes = [2, 32], strides = [1, 1]} : vector<2x128xf32> to vector<2x32xf32>
    %600 = vector.extract_strided_slice %588 {offsets = [0, 96], sizes = [2, 32], strides = [1, 1]} : vector<2x128xf32> to vector<2x32xf32>
    %cst_255 = arith.constant 5.000000e-01 : f32
    %601 = vector.broadcast %cst_255 : f32 to vector<2x32xf32>
    %602 = arith.mulf %601, %600 : vector<2x32xf32>
    %cst_256 = arith.constant 5.000000e-01 : f32
    %603 = vector.broadcast %cst_256 : f32 to vector<2x32xf32>
    %604 = arith.addf %602, %603 : vector<2x32xf32>
    %605 = arith.mulf %598, %570 : vector<2x32xf32>
    %606 = arith.mulf %593, %599 : vector<2x32xf32>
    %607 = arith.addf %605, %606 : vector<2x32xf32>
    %608 = math.tanh %607 : vector<2x32xf32>
    %609 = arith.mulf %604, %608 : vector<2x32xf32>
    %cst_257 = arith.constant dense<0.000000e+00> : vector<2x128xf32>
    %610 = tpu.matmul %609, %3, %cst_257 {dimension_numbers = #tpu.dot_dimension_numbers<[1], [0], [0], [1], [0, 0, 1, 1], [], []>} : vector<2x32xf32>, vector<32x128xf32>, vector<2x128xf32> -> vector<2x128xf32>
    %611 = arith.addf %610, %9 : vector<2x128xf32>
    %612 = vector.shape_cast %611 : vector<2x128xf32> to vector<2x1x128xf32>
    %c0_258 = arith.constant 0 : index
    %c6_259 = arith.constant 6 : index
    %c0_260 = arith.constant 0 : index
    %613 = vector.load %arg11[%c0_258, %c6_259, %c0_260] : memref<2x8x128xf32, #tpu.memory_space<vmem>>, vector<2x1x128xf32>
    tpu.vector_store %arg11[%c0_258, %c6_259, %c0_260], %612 {strides = array<i32>} : memref<2x8x128xf32, #tpu.memory_space<vmem>>, vector<2x1x128xf32>,
    %c6_261 = arith.constant 6 : index
    %614 = memref.load %arg0[%c6_261] : memref<8xi32, #tpu.memory_space<smem>>
    %c0_i32_262 = arith.constant 0 : i32
    %615 = arith.cmpi eq, %614, %c0_i32_262 : i32
    %616 = arith.extui %615 : i1 to i32
    %c0_i32_263 = arith.constant 0 : i32
    %617 = arith.cmpi ne, %616, %c0_i32_263 : i32
    scf.if %617 {
      %cst_280 = arith.constant dense<0xFF800000> : vector<2xf32>
      %651 = vector.multi_reduction <maximumf>, %611, %cst_280 [1] : vector<2x128xf32> to vector<2xf32>
      %652 = vector.shape_cast %651 : vector<2xf32> to vector<2x1xf32>
      %653 = vector.broadcast %652 : vector<2x1xf32> to vector<2x128xf32>
      %654 = arith.cmpf oeq, %611, %653 : vector<2x128xf32>
      %c128_i32 = arith.constant 128 : i32
      %655 = vector.broadcast %c128_i32 : i32 to vector<2x128xi32>
      %656 = arith.select %654, %10, %655 : vector<2x128xi1>, vector<2x128xi32>
      %cst_281 = arith.constant dense<2147483647> : vector<2xi32>
      %657 = vector.multi_reduction <minsi>, %656, %cst_281 [1] : vector<2x128xi32> to vector<2xi32>
      %658 = vector.shape_cast %657 : vector<2xi32> to vector<2x1xi32>
      %659 = vector.broadcast %658 : vector<2x1xi32> to vector<2x128xi32>
      %660 = arith.cmpi eq, %659, %10 : vector<2x128xi32>
      %661 = arith.extui %660 : vector<2x128xi1> to vector<2x128xi32>
      %662 = arith.sitofp %661 : vector<2x128xi32> to vector<2x128xf32>
      %cst_282 = arith.constant dense<0.000000e+00> : vector<2x128xf32>
      %663 = tpu.matmul %662, %2, %cst_282 {dimension_numbers = #tpu.dot_dimension_numbers<[1], [0], [0], [1], [0, 0, 1, 1], [], []>} : vector<2x128xf32>, vector<128x128xf32>, vector<2x128xf32> -> vector<2x128xf32>
      %664 = arith.addf %663, %6 : vector<2x128xf32>
      %c0_283 = arith.constant 0 : index
      %c0_284 = arith.constant 0 : index
      %665 = vector.load %arg12[%c0_283, %c0_284] : memref<2x128xf32, #tpu.memory_space<vmem>>, vector<2x128xf32>
      tpu.vector_store %arg12[%c0_283, %c0_284], %664 {strides = array<i32>} : memref<2x128xf32, #tpu.memory_space<vmem>>, vector<2x128xf32>,
    } else {
    }
    %c6_264 = arith.constant 6 : index
    %618 = memref.load %arg0[%c6_264] : memref<8xi32, #tpu.memory_space<smem>>
    %c0_i32_265 = arith.constant 0 : i32
    %619 = arith.cmpi ne, %618, %c0_i32_265 : i32
    %620 = arith.extui %619 : i1 to i32
    %c0_i32_266 = arith.constant 0 : i32
    %621 = arith.cmpi ne, %620, %c0_i32_266 : i32
    scf.if %621 {
      %651 = vector.extract_strided_slice %197 {offsets = [12, 0], sizes = [2, 128], strides = [1, 1]} : vector<16x128xf32> to vector<2x128xf32>
      %c0_280 = arith.constant 0 : index
      %c0_281 = arith.constant 0 : index
      %652 = vector.load %arg12[%c0_280, %c0_281] : memref<2x128xf32, #tpu.memory_space<vmem>>, vector<2x128xf32>
      tpu.vector_store %arg12[%c0_280, %c0_281], %651 {strides = array<i32>} : memref<2x128xf32, #tpu.memory_space<vmem>>, vector<2x128xf32>,
    } else {
    }
    %c0_267 = arith.constant 0 : index
    %c0_268 = arith.constant 0 : index
    %622 = vector.load %arg12[%c0_267, %c0_268] : memref<2x128xf32, #tpu.memory_space<vmem>>, vector<2x128xf32>
    %cst_269 = arith.constant dense<0.000000e+00> : vector<2x128xf32>
    %623 = tpu.matmul %609, %1, %cst_269 {dimension_numbers = #tpu.dot_dimension_numbers<[1], [0], [0], [1], [0, 0, 1, 1], [], []>} : vector<2x32xf32>, vector<32x128xf32>, vector<2x128xf32> -> vector<2x128xf32>
    %624 = arith.addf %622, %623 : vector<2x128xf32>
    %625 = math.tanh %624 : vector<2x128xf32>
    %626 = vector.extract_strided_slice %625 {offsets = [0, 0], sizes = [2, 32], strides = [1, 1]} : vector<2x128xf32> to vector<2x32xf32>
    %cst_270 = arith.constant 5.000000e-01 : f32
    %627 = vector.broadcast %cst_270 : f32 to vector<2x32xf32>
    %628 = arith.mulf %627, %626 : vector<2x32xf32>
    %cst_271 = arith.constant 5.000000e-01 : f32
    %629 = vector.broadcast %cst_271 : f32 to vector<2x32xf32>
    %630 = arith.addf %628, %629 : vector<2x32xf32>
    %631 = vector.extract_strided_slice %625 {offsets = [0, 32], sizes = [2, 32], strides = [1, 1]} : vector<2x128xf32> to vector<2x32xf32>
    %cst_272 = arith.constant 5.000000e-01 : f32
    %632 = vector.broadcast %cst_272 : f32 to vector<2x32xf32>
    %633 = arith.mulf %632, %631 : vector<2x32xf32>
    %cst_273 = arith.constant 5.000000e-01 : f32
    %634 = vector.broadcast %cst_273 : f32 to vector<2x32xf32>
    %635 = arith.addf %633, %634 : vector<2x32xf32>
    %636 = vector.extract_strided_slice %625 {offsets = [0, 64], sizes = [2, 32], strides = [1, 1]} : vector<2x128xf32> to vector<2x32xf32>
    %637 = vector.extract_strided_slice %625 {offsets = [0, 96], sizes = [2, 32], strides = [1, 1]} : vector<2x128xf32> to vector<2x32xf32>
    %cst_274 = arith.constant 5.000000e-01 : f32
    %638 = vector.broadcast %cst_274 : f32 to vector<2x32xf32>
    %639 = arith.mulf %638, %637 : vector<2x32xf32>
    %cst_275 = arith.constant 5.000000e-01 : f32
    %640 = vector.broadcast %cst_275 : f32 to vector<2x32xf32>
    %641 = arith.addf %639, %640 : vector<2x32xf32>
    %642 = arith.mulf %635, %607 : vector<2x32xf32>
    %643 = arith.mulf %630, %636 : vector<2x32xf32>
    %644 = arith.addf %642, %643 : vector<2x32xf32>
    %645 = math.tanh %644 : vector<2x32xf32>
    %646 = arith.mulf %641, %645 : vector<2x32xf32>
    %cst_276 = arith.constant dense<0.000000e+00> : vector<2x128xf32>
    %647 = tpu.matmul %646, %3, %cst_276 {dimension_numbers = #tpu.dot_dimension_numbers<[1], [0], [0], [1], [0, 0, 1, 1], [], []>} : vector<2x32xf32>, vector<32x128xf32>, vector<2x128xf32> -> vector<2x128xf32>
    %648 = arith.addf %647, %9 : vector<2x128xf32>
    %649 = vector.shape_cast %648 : vector<2x128xf32> to vector<2x1x128xf32>
    %c0_277 = arith.constant 0 : index
    %c7_278 = arith.constant 7 : index
    %c0_279 = arith.constant 0 : index
    %650 = vector.load %arg11[%c0_277, %c7_278, %c0_279] : memref<2x8x128xf32, #tpu.memory_space<vmem>>, vector<2x1x128xf32>
    tpu.vector_store %arg11[%c0_277, %c7_278, %c0_279], %649 {strides = array<i32>} : memref<2x8x128xf32, #tpu.memory_space<vmem>>, vector<2x1x128xf32>,
    return
  }
}

</mosaic_0001>

<llo_original>
// kernel: tpu_custom_call.1
$region0: #{tpu_custom_call.1}
  #allocation0 [shape = 'u32[]', space=smem, size = 0x4, offset = 0x4, fixed_abs, tag = 'smem constant byte address 0x4 - core index']
  #allocation1 [shape = 'u32[144,128]{1,0:T(1,128)}', space=vmem, size = 0x12000, scoped, tag = 'internal scratch']
  #allocation2 [shape = 'f32[2,128]{1,0:T(2,128)}', space=vmem, size = 0x400, scoped, tag = 'scratch operand']
  %s0 = inlined_call_operand.hbm [shape: s32[8], index: 0, kind: input, shape index: {}]
  %s1 = inlined_call_operand.vmem [shape: s32[2,8], index: 1, kind: input, shape index: {}]
  %s2 = inlined_call_operand.hbm [shape: s32[2,8], index: 2, kind: input, shape index: {}]
  %s3 = inlined_call_operand.hbm [shape: f32[64,128], index: 3, kind: input, shape index: {}]
  %s4 = inlined_call_operand.hbm [shape: f32[32,128], index: 4, kind: input, shape index: {}]
  %s5 = inlined_call_operand.hbm [shape: f32[1,128], index: 5, kind: input, shape index: {}]
  %s6 = inlined_call_operand.hbm [shape: f32[128,128], index: 6, kind: input, shape index: {}]
  %s7 = inlined_call_operand.hbm [shape: f32[32,128], index: 7, kind: input, shape index: {}]
  %s8 = inlined_call_operand.hbm [shape: f32[1,128], index: 8, kind: input, shape index: {}]
  %s9 = inlined_call_operand.vmem [shape: f32[32,128], index: 9, kind: input, shape index: {}]
  %s10 = inlined_call_operand.vmem [shape: f32[1,128], index: 10, kind: input, shape index: {}]
  %s11 = inlined_call_operand.hbm [shape: f32[2,8,128], index: 11, kind: output, shape index: {}]
  %s12 = sld [smem:[#allocation0]]
  $region138: #{tpu_custom_call.1} parent=0
    _
  %s14 = ssub.s32 1, %s12
  %s15 = scalar_select 0, %s14, %s12
  $region1: #{tpu_custom_call.1} parent=0
    #allocation3 [shape = 'u8[512]{0}', space=smem, size = 0x200, scoped, tag = 'input window, operand 0, single buffered']
    #allocation4 [shape = 's32[1]{0}', space=sflag, size = 0x4, scoped, tag = 'scoped memory for tpu_custom_call.1']
    #allocation5 [shape = 's32[1]{0}', space=sflag, size = 0x4, scoped, tag = 'scoped memory for tpu_custom_call.1']
    #allocation6 [shape = 's32[1]{0}', space=sflag, size = 0x4, scoped, tag = 'scoped memory for tpu_custom_call.1']
    #allocation7 [shape = 's32[1]{0}', space=sflag, size = 0x4, scoped, tag = 'scoped memory for tpu_custom_call.1']
    #allocation8 [shape = 'u8[1024]{0}', space=smem, size = 0x400, scoped, tag = 'input window, operand 1, single buffered']
    #allocation9 [shape = 'u8[1024]{0}', space=smem, size = 0x400, scoped, tag = 'input window, operand 2, single buffered']
    #allocation10 [shape = 's32[1]{0}', space=sflag, size = 0x4, scoped, tag = 'scoped memory for tpu_custom_call.1']
    #allocation11 [shape = 'u8[32768]{0}', space=vmem, size = 0x8000, scoped, tag = 'input window, operand 3, single buffered']
    #allocation12 [shape = 'u8[16384]{0}', space=vmem, size = 0x4000, scoped, tag = 'input window, operand 4, single buffered']
    #allocation13 [shape = 's32[1]{0}', space=sflag, size = 0x4, scoped, tag = 'scoped memory for tpu_custom_call.1']
    #allocation14 [shape = 'u8[512]{0}', space=vmem, size = 0x400, scoped, tag = 'input window, operand 5, single buffered']
    #allocation15 [shape = 'u8[65536]{0}', space=vmem, size = 0x10000, scoped, tag = 'input window, operand 6, single buffered']
    #allocation16 [shape = 's32[1]{0}', space=sflag, size = 0x4, scoped, tag = 'scoped memory for tpu_custom_call.1']
    #allocation17 [shape = 'u8[16384]{0}', space=vmem, size = 0x4000, scoped, tag = 'input window, operand 7, single buffered']
    #allocation18 [shape = 'u8[512]{0}', space=vmem, size = 0x400, scoped, tag = 'input window, operand 8, single buffered']
    #allocation19 [shape = 's32[1]{0}', space=sflag, size = 0x4, scoped, tag = 'scoped memory for tpu_custom_call.1']
    #allocation20 [shape = 'u8[8192]{0}', space=vmem, size = 0x2000, scoped, tag = 'output window, operand 0, single buffered']
    %16 = vsyncpa [#allocation6], 0
    %17 = vsyncpa [#allocation7], 0
    %18 = vsyncpa [#allocation10], 0
    %19 = vsyncpa [#allocation4], 0
    %20 = vsyncpa [#allocation13], 0
    %21 = vsyncpa [#allocation16], 0
    %22 = vsyncpa [#allocation19], 0
    %23 = vsyncpa [#allocation5], 0
    // Predicated region
    $region2: #{tpu_custom_call.1} parent=1 // pred_check
      _
    $region3: #{tpu_custom_call.1} parent=1 // pred_check_branch
      %25 = sbr.rel (0) target = $region5
    $region4: #{tpu_custom_call.1} parent=1 // pred_region
      %s27 = ssub.s32 16, 16
      %28 = vsyncadd [#allocation6], %s27
      %31 = dma.hbm_to_smem %s0, 16, [#allocation3], [#allocation6]
    $region5: #{tpu_custom_call.1} parent=1 // pred_fallthru
      _
    // Predicated region
    $region6: #{tpu_custom_call.1} parent=1 // pred_check
      _
    $region7: #{tpu_custom_call.1} parent=1 // pred_check_branch
      %33 = sbr.rel (0) target = $region9
    $region8: #{tpu_custom_call.1} parent=1 // pred_region
      %s35 = ssub.s32 32, 32
      %36 = vsyncadd [#allocation7], %s35
      %s38 = sshll.u32 %s1, 4
      %s39 = int_to_ptr.vmem [resolvable:$true] %s38
      %41 = dma.vmem_to_smem %s39, 32, [#allocation8], [#allocation7]
    $region9: #{tpu_custom_call.1} parent=1 // pred_fallthru
      _
    // Predicated region
    $region10: #{tpu_custom_call.1} parent=1 // pred_check
      _
    $region11: #{tpu_custom_call.1} parent=1 // pred_check_branch
      %43 = sbr.rel (0) target = $region13
    $region12: #{tpu_custom_call.1} parent=1 // pred_region
      %s45 = ssub.s32 32, 32
      %46 = vsyncadd [#allocation10], %s45
      %49 = dma.hbm_to_smem %s2, 32, [#allocation9], [#allocation10]
    $region13: #{tpu_custom_call.1} parent=1 // pred_fallthru
      _
    // Predicated region
    $region14: #{tpu_custom_call.1} parent=1 // pred_check
      _
    $region15: #{tpu_custom_call.1} parent=1 // pred_check_branch
      %51 = sbr.rel (0) target = $region17
    $region16: #{tpu_custom_call.1} parent=1 // pred_region
      %s53 = ssub.s32 1024, 1024
      %54 = vsyncadd [#allocation4], %s53
      %s55 = sshll.u32 [#allocation11], 4
      %s56 = int_to_ptr.vmem [resolvable:$true] %s55
      %61 = dma.hbm_to_vmem [thread:$0]  %s3, 1024, %s56, [#allocation4], 128, 128, 8
    $region17: #{tpu_custom_call.1} parent=1 // pred_fallthru
      _
    // Predicated region
    $region18: #{tpu_custom_call.1} parent=1 // pred_check
      _
    $region19: #{tpu_custom_call.1} parent=1 // pred_check_branch
      %63 = sbr.rel (0) target = $region21
    $region20: #{tpu_custom_call.1} parent=1 // pred_region
      %s65 = ssub.s32 512, 512
      %66 = vsyncadd [#allocation13], %s65
      %s67 = sshll.u32 [#allocation12], 4
      %s68 = int_to_ptr.vmem [resolvable:$true] %s67
      %73 = dma.hbm_to_vmem [thread:$0]  %s4, 512, %s68, [#allocation13], 128, 128, 8
    $region21: #{tpu_custom_call.1} parent=1 // pred_fallthru
      _
    // Predicated region
    $region22: #{tpu_custom_call.1} parent=1 // pred_check
      _
    $region23: #{tpu_custom_call.1} parent=1 // pred_check_branch
      %75 = sbr.rel (0) target = $region25
    $region24: #{tpu_custom_call.1} parent=1 // pred_region
      %s77 = ssub.s32 16, 16
      %78 = vsyncadd [#allocation13], %s77
      %s80 = sshll.u32 [#allocation14], 4
      %s81 = int_to_ptr.vmem [resolvable:$true] %s80
      %83 = dma.hbm_to_vmem [thread:$0]  %s5, 16, %s81, [#allocation13]
    $region25: #{tpu_custom_call.1} parent=1 // pred_fallthru
      _
    // Predicated region
    $region26: #{tpu_custom_call.1} parent=1 // pred_check
      _
    $region27: #{tpu_custom_call.1} parent=1 // pred_check_branch
      %85 = sbr.rel (0) target = $region29
    $region28: #{tpu_custom_call.1} parent=1 // pred_region
      %s87 = ssub.s32 2048, 2048
      %88 = vsyncadd [#allocation16], %s87
      %s89 = sshll.u32 [#allocation15], 4
      %s90 = int_to_ptr.vmem [resolvable:$true] %s89
      %95 = dma.hbm_to_vmem [thread:$0]  %s6, 2048, %s90, [#allocation16], 128, 128, 8
    $region29: #{tpu_custom_call.1} parent=1 // pred_fallthru
      _
    // Predicated region
    $region30: #{tpu_custom_call.1} parent=1 // pred_check
      _
    $region31: #{tpu_custom_call.1} parent=1 // pred_check_branch
      %97 = sbr.rel (0) target = $region33
    $region32: #{tpu_custom_call.1} parent=1 // pred_region
      %s99 = ssub.s32 512, 512
      %100 = vsyncadd [#allocation16], %s99
      %s101 = sshll.u32 [#allocation17], 4
      %s102 = int_to_ptr.vmem [resolvable:$true] %s101
      %107 = dma.hbm_to_vmem [thread:$0]  %s7, 512, %s102, [#allocation16], 128, 128, 8
    $region33: #{tpu_custom_call.1} parent=1 // pred_fallthru
      _
    // Predicated region
    $region34: #{tpu_custom_call.1} parent=1 // pred_check
      _
    $region35: #{tpu_custom_call.1} parent=1 // pred_check_branch
      %109 = sbr.rel (0) target = $region37
    $region36: #{tpu_custom_call.1} parent=1 // pred_region
      %s111 = ssub.s32 16, 16
      %112 = vsyncadd [#allocation19], %s111
      %s114 = sshll.u32 [#allocation18], 4
      %s115 = int_to_ptr.vmem [resolvable:$true] %s114
      %117 = dma.hbm_to_vmem [thread:$0]  %s8, 16, %s115, [#allocation19]
    $region37: #{tpu_custom_call.1} parent=1 // pred_fallthru
      _
    // Predicated region
    $region38: #{tpu_custom_call.1} parent=1 // pred_check
      _
    $region39: #{tpu_custom_call.1} parent=1 // pred_check_branch
      %119 = sbr.rel (0) target = $region41
    $region40: #{tpu_custom_call.1} parent=1 // pred_region
      _
    $region41: #{tpu_custom_call.1} parent=1 // pred_fallthru
      _
    // Predicated region
    $region42: #{tpu_custom_call.1} parent=1 // pred_check
      _
    $region43: #{tpu_custom_call.1} parent=1 // pred_check_branch
      %121 = sbr.rel (0) target = $region45
    $region44: #{tpu_custom_call.1} parent=1 // pred_region
      _
    $region45: #{tpu_custom_call.1} parent=1 // pred_fallthru
      _
    // Predicated region
    $region46: #{tpu_custom_call.1} parent=1 // pred_check
      _
    $region47: #{tpu_custom_call.1} parent=1 // pred_check_branch
      %123 = sbr.rel (0) target = $region49
    $region48: #{tpu_custom_call.1} parent=1 // pred_region
      %124 = dma.done [#allocation6], 16
    $region49: #{tpu_custom_call.1} parent=1 // pred_fallthru
      _
    // Predicated region
    $region50: #{tpu_custom_call.1} parent=1 // pred_check
      _
    $region51: #{tpu_custom_call.1} parent=1 // pred_check_branch
      %126 = sbr.rel (0) target = $region53
    $region52: #{tpu_custom_call.1} parent=1 // pred_region
      %127 = dma.done [#allocation7], 32
    $region53: #{tpu_custom_call.1} parent=1 // pred_fallthru
      _
    // Predicated region
    $region54: #{tpu_custom_call.1} parent=1 // pred_check
      _
    $region55: #{tpu_custom_call.1} parent=1 // pred_check_branch
      %129 = sbr.rel (0) target = $region57
    $region56: #{tpu_custom_call.1} parent=1 // pred_region
      %130 = dma.done [#allocation10], 32
    $region57: #{tpu_custom_call.1} parent=1 // pred_fallthru
      _
    // Predicated region
    $region58: #{tpu_custom_call.1} parent=1 // pred_check
      _
    $region59: #{tpu_custom_call.1} parent=1 // pred_check_branch
      %132 = sbr.rel (0) target = $region61
    $region60: #{tpu_custom_call.1} parent=1 // pred_region
      %133 = dma.done [#allocation4], 1024
    $region61: #{tpu_custom_call.1} parent=1 // pred_fallthru
      _
    // Predicated region
    $region62: #{tpu_custom_call.1} parent=1 // pred_check
      _
    $region63: #{tpu_custom_call.1} parent=1 // pred_check_branch
      %135 = sbr.rel (0) target = $region65
    $region64: #{tpu_custom_call.1} parent=1 // pred_region
      %136 = dma.done [#allocation13], 512
    $region65: #{tpu_custom_call.1} parent=1 // pred_fallthru
      _
    // Predicated region
    $region66: #{tpu_custom_call.1} parent=1 // pred_check
      _
    $region67: #{tpu_custom_call.1} parent=1 // pred_check_branch
      %138 = sbr.rel (0) target = $region69
    $region68: #{tpu_custom_call.1} parent=1 // pred_region
      %139 = dma.done [#allocation13], 16
    $region69: #{tpu_custom_call.1} parent=1 // pred_fallthru
      _
    // Predicated region
    $region70: #{tpu_custom_call.1} parent=1 // pred_check
      _
    $region71: #{tpu_custom_call.1} parent=1 // pred_check_branch
      %141 = sbr.rel (0) target = $region73
    $region72: #{tpu_custom_call.1} parent=1 // pred_region
      %142 = dma.done [#allocation16], 2048
    $region73: #{tpu_custom_call.1} parent=1 // pred_fallthru
      _
    // Predicated region
    $region74: #{tpu_custom_call.1} parent=1 // pred_check
      _
    $region75: #{tpu_custom_call.1} parent=1 // pred_check_branch
      %144 = sbr.rel (0) target = $region77
    $region76: #{tpu_custom_call.1} parent=1 // pred_region
      %145 = dma.done [#allocation16], 512
    $region77: #{tpu_custom_call.1} parent=1 // pred_fallthru
      _
    // Predicated region
    $region78: #{tpu_custom_call.1} parent=1 // pred_check
      _
    $region79: #{tpu_custom_call.1} parent=1 // pred_check_branch
      %147 = sbr.rel (0) target = $region81
    $region80: #{tpu_custom_call.1} parent=1 // pred_region
      %148 = dma.done [#allocation19], 16
    $region81: #{tpu_custom_call.1} parent=1 // pred_fallthru
      _
    %149 = sfence
    %v150 = vld [vmem:[#allocation12] sm:$0xff]
    %v151 = vld [vmem:[#allocation12 + $0x8] sm:$0xff]
    %v152 = vld [vmem:[#allocation12 + $0x10] sm:$0xff]
    %v153 = vld [vmem:[#allocation12 + $0x18] sm:$0xff]
    %v154 = vld [vmem:[#allocation17] sm:$0xff]
    %v155 = vld [vmem:[#allocation17 + $0x8] sm:$0xff]
    %v156 = vld [vmem:[#allocation17 + $0x10] sm:$0xff]
    %v157 = vld [vmem:[#allocation17 + $0x18] sm:$0xff]
    %v158 = vld [vmem:[#allocation15] sm:$0xff]
    %v159 = vld [vmem:[#allocation15 + $0x8] sm:$0xff]
    %v160 = vld [vmem:[#allocation15 + $0x10] sm:$0xff]
    %v161 = vld [vmem:[#allocation15 + $0x18] sm:$0xff]
    %v162 = vld [vmem:[#allocation15 + $0x20] sm:$0xff]
    %v163 = vld [vmem:[#allocation15 + $0x28] sm:$0xff]
    %v164 = vld [vmem:[#allocation15 + $0x30] sm:$0xff]
    %v165 = vld [vmem:[#allocation15 + $0x38] sm:$0xff]
    %v166 = vld [vmem:[#allocation15 + $0x40] sm:$0xff]
    %v167 = vld [vmem:[#allocation15 + $0x48] sm:$0xff]
    %v168 = vld [vmem:[#allocation15 + $0x50] sm:$0xff]
    %v169 = vld [vmem:[#allocation15 + $0x58] sm:$0xff]
    %v170 = vld [vmem:[#allocation15 + $0x60] sm:$0xff]
    %v171 = vld [vmem:[#allocation15 + $0x68] sm:$0xff]
    %v172 = vld [vmem:[#allocation15 + $0x70] sm:$0xff]
    %v173 = vld [vmem:[#allocation15 + $0x78] sm:$0xff]
    %v174 = vld [vmem:[%s9] sm:$0xff]
    %v175 = vld [vmem:[%s9 + $0x8] sm:$0xff]
    %v176 = vld [vmem:[%s9 + $0x10] sm:$0xff]
    %v177 = vld [vmem:[%s9 + $0x18] sm:$0xff]
    %v178 = vld [vmem:[#allocation18] sm:$0x1]
    %v180 = vlaneseq
    %v181 = vshrl.u32 %v180, 7
    %v182 = vsub.s32 0, %v181
    %v183 = vrot.slane %v178, %v182
    %v185 = vld [vmem:[%s10] sm:$0x1]
    %v187 = vlaneseq
    %v188 = vshrl.u32 %v187, 7
    %v189 = vsub.s32 0, %v188
    %v190 = vrot.slane %v185, %v189
    %v192 = vlaneseq
    %v193 = vand.u32 %v192, 127
    %194 = vst [vmem:[#allocation20] sm:$0xff] 0.0
    %195 = vst [vmem:[#allocation20 + $0x8] sm:$0xff] 0.0
    %v196 = vlaneseq
    %v197 = vshrl.u32 %v196, 7
    %v198 = vadd.s32 %v197, 8
    %vm199 = vcmp.eq.s32.totalorder %v197, 0
    %vm200 = vcmp.eq.s32.totalorder %v198, 0
    %s201 = sld [smem:[#allocation8]]
    %v202 = vstv %s201
    %v203 = vsel %vm199, %v202, 0
    %v204 = vsel %vm200, %v202, 0
    %vm205 = vcmp.eq.s32.totalorder %v197, 1
    %vm206 = vcmp.eq.s32.totalorder %v198, 1
    %s207 = sld [smem:[#allocation8 + $0x80]]
    %v208 = vstv %s207
    %v209 = vsel %vm205, %v208, %v203
    %v210 = vsel %vm206, %v208, %v204
    %vm211 = vcmp.eq.s32.totalorder %v197, 2
    %vm212 = vcmp.eq.s32.totalorder %v198, 2
    %s213 = sld [smem:[#allocation8 + $0x1]]
    %v214 = vstv %s213
    %v215 = vsel %vm211, %v214, %v209
    %v216 = vsel %vm212, %v214, %v210
    %vm217 = vcmp.eq.s32.totalorder %v197, 3
    %vm218 = vcmp.eq.s32.totalorder %v198, 3
    %s219 = sld [smem:[#allocation8 + $0x81]]
    %v220 = vstv %s219
    %v221 = vsel %vm217, %v220, %v215
    %v222 = vsel %vm218, %v220, %v216
    %vm223 = vcmp.eq.s32.totalorder %v197, 4
    %vm224 = vcmp.eq.s32.totalorder %v198, 4
    %s225 = sld [smem:[#allocation8 + $0x2]]
    %v226 = vstv %s225
    %v227 = vsel %vm223, %v226, %v221
    %v228 = vsel %vm224, %v226, %v222
    %vm229 = vcmp.eq.s32.totalorder %v197, 5
    %vm230 = vcmp.eq.s32.totalorder %v198, 5
    %s231 = sld [smem:[#allocation8 + $0x82]]
    %v232 = vstv %s231
    %v233 = vsel %vm229, %v232, %v227
    %v234 = vsel %vm230, %v232, %v228
    %vm235 = vcmp.eq.s32.totalorder %v197, 6
    %vm236 = vcmp.eq.s32.totalorder %v198, 6
    %s237 = sld [smem:[#allocation8 + $0x3]]
    %v238 = vstv %s237
    %v239 = vsel %vm235, %v238, %v233
    %v240 = vsel %vm236, %v238, %v234
    %vm241 = vcmp.eq.s32.totalorder %v197, 7
    %vm242 = vcmp.eq.s32.totalorder %v198, 7
    %s243 = sld [smem:[#allocation8 + $0x83]]
    %v244 = vstv %s243
    %v245 = vsel %vm241, %v244, %v239
    %v246 = vsel %vm242, %v244, %v240
    %vm247 = vcmp.eq.s32.totalorder %v197, 8
    %vm248 = vcmp.eq.s32.totalorder %v198, 8
    %s249 = sld [smem:[#allocation8 + $0x4]]
    %v250 = vstv %s249
    %v251 = vsel %vm247, %v250, %v245
    %v252 = vsel %vm248, %v250, %v246
    %vm253 = vcmp.eq.s32.totalorder %v197, 9
    %vm254 = vcmp.eq.s32.totalorder %v198, 9
    %s255 = sld [smem:[#allocation8 + $0x84]]
    %v256 = vstv %s255
    %v257 = vsel %vm253, %v256, %v251
    %v258 = vsel %vm254, %v256, %v252
    %vm259 = vcmp.eq.s32.totalorder %v197, 10
    %vm260 = vcmp.eq.s32.totalorder %v198, 10
    %s261 = sld [smem:[#allocation8 + $0x5]]
    %v262 = vstv %s261
    %v263 = vsel %vm259, %v262, %v257
    %v264 = vsel %vm260, %v262, %v258
    %vm265 = vcmp.eq.s32.totalorder %v197, 11
    %vm266 = vcmp.eq.s32.totalorder %v198, 11
    %s267 = sld [smem:[#allocation8 + $0x85]]
    %v268 = vstv %s267
    %v269 = vsel %vm265, %v268, %v263
    %v270 = vsel %vm266, %v268, %v264
    %vm271 = vcmp.eq.s32.totalorder %v197, 12
    %vm272 = vcmp.eq.s32.totalorder %v198, 12
    %s273 = sld [smem:[#allocation8 + $0x6]]
    %v274 = vstv %s273
    %v275 = vsel %vm271, %v274, %v269
    %v276 = vsel %vm272, %v274, %v270
    %vm277 = vcmp.eq.s32.totalorder %v197, 13
    %vm278 = vcmp.eq.s32.totalorder %v198, 13
    %s279 = sld [smem:[#allocation8 + $0x86]]
    %v280 = vstv %s279
    %v281 = vsel %vm277, %v280, %v275
    %v282 = vsel %vm278, %v280, %v276
    %vm283 = vcmp.eq.s32.totalorder %v197, 14
    %vm284 = vcmp.eq.s32.totalorder %v198, 14
    %s285 = sld [smem:[#allocation8 + $0x7]]
    %v286 = vstv %s285
    %v287 = vsel %vm283, %v286, %v281
    %v288 = vsel %vm284, %v286, %v282
    %vm289 = vcmp.eq.s32.totalorder %v197, 15
    %vm290 = vcmp.eq.s32.totalorder %v198, 15
    %s291 = sld [smem:[#allocation8 + $0x87]]
    %v292 = vstv %s291
    %v293 = vsel %vm289, %v292, %v287
    %v294 = vsel %vm290, %v292, %v288
    %vm295 = vcmp.eq.s32.totalorder %v293, %v193
    %vm296 = vcmp.eq.s32.totalorder %v294, %v193
    %v297 = vsel %vm295, 1, 0
    %v298 = vsel %vm296, 1, 0
    %v299 = vcvt.s32.f32 %v297
    %v300 = vcvt.s32.f32 %v298
    %v301 = vld [vmem:[#allocation11] sm:$0xff]
    %v302 = vld [vmem:[#allocation11 + $0x8] sm:$0xff]
    %v303 = vld [vmem:[#allocation11 + $0x10] sm:$0xff]
    %v304 = vld [vmem:[#allocation11 + $0x18] sm:$0xff]
    %v305 = vld [vmem:[#allocation11 + $0x20] sm:$0xff]
    %v306 = vld [vmem:[#allocation11 + $0x28] sm:$0xff]
    %v307 = vld [vmem:[#allocation11 + $0x30] sm:$0xff]
    %v308 = vld [vmem:[#allocation11 + $0x38] sm:$0xff]
    %v309 = vld [vmem:[#allocation14] sm:$0x1]
    %v311 = vlaneseq
    %v312 = vshrl.u32 %v311, 7
    %v313 = vsub.s32 0, %v312
    %v314 = vrot.slane %v309, %v313
    %vm316 = vcmask 523264
    %v318 = vsel %vm316, %v299, 0
    %v321 = vsel %vm316, %v300, 0
    %323 = vmatprep.subr.mxu0 0.0
    %324 = vmatpush1.msra.mxu0 %v301
    %325 = vmatprep.subr.mxu0 0.0
    %326 = vmatpush1.msra.mxu0 %v302
    %327 = vmatprep.subr.mxu0 0.0
    %328 = vmatpush1.msra.mxu0 %v303
    %329 = vmatprep.subr.mxu0 0.0
    %330 = vmatpush1.msra.mxu0 %v304
    %331 = vmatprep.subr.mxu0 0.0
    %332 = vmatpush1.msra.mxu0 %v305
    %333 = vmatprep.subr.mxu0 0.0
    %334 = vmatpush1.msra.mxu0 %v306
    %335 = vmatprep.subr.mxu0 0.0
    %336 = vmatpush1.msra.mxu0 %v307
    %337 = vmatprep.subr.mxu0 0.0
    %338 = vmatpush1.msra.mxu0 %v308
    %339 = vmatprep.subr.mxu0 0.0
    %340 = vmatpush1.msra.mxu0 0.0
    %341 = vmatprep.subr.mxu0 0.0
    %342 = vmatpush1.msra.mxu0 0.0
    %343 = vmatprep.subr.mxu0 0.0
    %344 = vmatpush1.msra.mxu0 0.0
    %345 = vmatprep.subr.mxu0 0.0
    %346 = vmatpush1.msra.mxu0 0.0
    %347 = vmatprep.subr.mxu0 0.0
    %348 = vmatpush1.msra.mxu0 0.0
    %349 = vmatprep.subr.mxu0 0.0
    %350 = vmatpush1.msra.mxu0 0.0
    %351 = vmatprep.subr.mxu0 0.0
    %352 = vmatpush1.msra.mxu0 0.0
    %353 = vmatprep.subr.mxu0 0.0
    %354 = vmatpush1.msra.mxu0 0.0
    %355 = vmatprep.subr.mxu0 0.0
    %356 = vmatpush1.msra.mxu0 0.0
    %357 = vmatprep.subr.mxu0 0.0
    %358 = vmatpush1.msra.mxu0 0.0
    %359 = vmatprep.subr.mxu0 0.0
    %360 = vmatpush1.msra.mxu0 0.0
    %361 = vmatprep.subr.mxu0 0.0
    %362 = vmatpush1.msra.mxu0 0.0
    %363 = vmatprep.subr.mxu0 0.0
    %364 = vmatpush1.msra.mxu0 0.0
    %365 = vmatprep.subr.mxu0 0.0
    %366 = vmatpush1.msra.mxu0 0.0
    %367 = vmatprep.subr.mxu0 0.0
    %368 = vmatpush1.msra.mxu0 0.0
    %369 = vmatprep.subr.mxu0 0.0
    %370 = vmatpush1.msra.mxu0 0.0
    %371 = vmatprep.subr.mxu0 0.0
    %372 = vmatpush1.msra.mxu0 0.0
    %373 = vmatprep.subr.mxu0 0.0
    %374 = vmatpush1.msra.mxu0 0.0
    %375 = vmatprep.subr.mxu0 0.0
    %376 = vmatpush1.msra.mxu0 0.0
    %377 = vmatprep.subr.mxu0 0.0
    %378 = vmatpush1.msra.mxu0 0.0
    %379 = vmatprep.subr.mxu0 0.0
    %380 = vmatpush1.msra.mxu0 0.0
    %381 = vmatprep.subr.mxu0 0.0
    %382 = vmatpush1.msra.mxu0 0.0
    %383 = vmatprep.subr.mxu0 0.0
    %384 = vmatpush1.msra.mxu0 0.0
    %385 = vmatprep.subr.mxu0 0.0
    %386 = vmatpush1.msra.mxu0 0.0
    %387 = vmatprep.mubr.f32.mxu0 0.0
    %388 = vmatmul.mubr.f32.gmra.mrb[0].mxu0 %v318
    %v389 = vpop.f32.mrb[0].mxu0
    %v390 = vadd.f32 %v314, %v389
    %v391 = vpop.f32.mrb[0].mxu0
    %392 = vmatprep.mubr.f32.mxu0 0.0
    %393 = vmatmul.mubr.f32.gmra.mrb[0].mxu0 %v321
    %v394 = vpop.f32.mrb[0].mxu0
    %v395 = vadd.f32 %v314, %v394
    %v396 = vpop.f32.mrb[0].mxu0
    %397 = vdwg.mxu0
    %s398 = sld [smem:[#allocation9]]
    %v399 = vstv %s398
    %v400 = vsel %vm199, %v399, 0
    %v401 = vsel %vm200, %v399, 0
    %s402 = sld [smem:[#allocation9 + $0x80]]
    %v403 = vstv %s402
    %v404 = vsel %vm205, %v403, %v400
    %v405 = vsel %vm206, %v403, %v401
    %s406 = sld [smem:[#allocation9 + $0x1]]
    %v407 = vstv %s406
    %v408 = vsel %vm211, %v407, %v404
    %v409 = vsel %vm212, %v407, %v405
    %s410 = sld [smem:[#allocation9 + $0x81]]
    %v411 = vstv %s410
    %v412 = vsel %vm217, %v411, %v408
    %v413 = vsel %vm218, %v411, %v409
    %s414 = sld [smem:[#allocation9 + $0x2]]
    %v415 = vstv %s414
    %v416 = vsel %vm223, %v415, %v412
    %v417 = vsel %vm224, %v415, %v413
    %s418 = sld [smem:[#allocation9 + $0x82]]
    %v419 = vstv %s418
    %v420 = vsel %vm229, %v419, %v416
    %v421 = vsel %vm230, %v419, %v417
    %s422 = sld [smem:[#allocation9 + $0x3]]
    %v423 = vstv %s422
    %v424 = vsel %vm235, %v423, %v420
    %v425 = vsel %vm236, %v423, %v421
    %s426 = sld [smem:[#allocation9 + $0x83]]
    %v427 = vstv %s426
    %v428 = vsel %vm241, %v427, %v424
    %v429 = vsel %vm242, %v427, %v425
    %s430 = sld [smem:[#allocation9 + $0x4]]
    %v431 = vstv %s430
    %v432 = vsel %vm247, %v431, %v428
    %v433 = vsel %vm248, %v431, %v429
    %s434 = sld [smem:[#allocation9 + $0x84]]
    %v435 = vstv %s434
    %v436 = vsel %vm253, %v435, %v432
    %v437 = vsel %vm254, %v435, %v433
    %s438 = sld [smem:[#allocation9 + $0x5]]
    %v439 = vstv %s438
    %v440 = vsel %vm259, %v439, %v436
    %v441 = vsel %vm260, %v439, %v437
    %s442 = sld [smem:[#allocation9 + $0x85]]
    %v443 = vstv %s442
    %v444 = vsel %vm265, %v443, %v440
    %v445 = vsel %vm266, %v443, %v441
    %s446 = sld [smem:[#allocation9 + $0x6]]
    %v447 = vstv %s446
    %v448 = vsel %vm271, %v447, %v444
    %v449 = vsel %vm272, %v447, %v445
    %s450 = sld [smem:[#allocation9 + $0x86]]
    %v451 = vstv %s450
    %v452 = vsel %vm277, %v451, %v448
    %v453 = vsel %vm278, %v451, %v449
    %s454 = sld [smem:[#allocation9 + $0x7]]
    %v455 = vstv %s454
    %v456 = vsel %vm283, %v455, %v452
    %v457 = vsel %vm284, %v455, %v453
    %s458 = sld [smem:[#allocation9 + $0x87]]
    %v459 = vstv %s458
    %v460 = vsel %vm289, %v459, %v456
    %v461 = vsel %vm290, %v459, %v457
    %vm462 = vcmp.eq.s32.totalorder %v460, %v193
    %vm463 = vcmp.eq.s32.totalorder %v461, %v193
    %v464 = vsel %vm462, 1, 0
    %v465 = vsel %vm463, 1, 0
    %v466 = vcvt.s32.f32 %v464
    %v467 = vcvt.s32.f32 %v465
    %v468 = vld [vmem:[#allocation18] sm:$0x1]
    %v470 = vlaneseq
    %v471 = vshrl.u32 %v470, 7
    %v472 = vsub.s32 0, %v471
    %v473 = vrot.slane %v468, %v472
    %475 = vmatprep.subr.mxu0 0.0
    %476 = vmatpush1.msra.mxu0 %v158
    %477 = vmatprep.subr.mxu0 0.0
    %478 = vmatpush1.msra.mxu0 %v159
    %479 = vmatprep.subr.mxu0 0.0
    %480 = vmatpush1.msra.mxu0 %v160
    %481 = vmatprep.subr.mxu0 0.0
    %482 = vmatpush1.msra.mxu0 %v161
    %483 = vmatprep.subr.mxu0 0.0
    %484 = vmatpush1.msra.mxu0 %v162
    %485 = vmatprep.subr.mxu0 0.0
    %486 = vmatpush1.msra.mxu0 %v163
    %487 = vmatprep.subr.mxu0 0.0
    %488 = vmatpush1.msra.mxu0 %v164
    %489 = vmatprep.subr.mxu0 0.0
    %490 = vmatpush1.msra.mxu0 %v165
    %491 = vmatprep.subr.mxu0 0.0
    %492 = vmatpush1.msra.mxu0 %v166
    %493 = vmatprep.subr.mxu0 0.0
    %494 = vmatpush1.msra.mxu0 %v167
    %495 = vmatprep.subr.mxu0 0.0
    %496 = vmatpush1.msra.mxu0 %v168
    %497 = vmatprep.subr.mxu0 0.0
    %498 = vmatpush1.msra.mxu0 %v169
    %499 = vmatprep.subr.mxu0 0.0
    %500 = vmatpush1.msra.mxu0 %v170
    %501 = vmatprep.subr.mxu0 0.0
    %502 = vmatpush1.msra.mxu0 %v171
    %503 = vmatprep.subr.mxu0 0.0
    %504 = vmatpush1.msra.mxu0 %v172
    %505 = vmatprep.subr.mxu0 0.0
    %506 = vmatpush1.msra.mxu0 %v173
    %507 = vmatprep.subr.mxu0 0.0
    %508 = vmatpush1.msra.mxu0 0.0
    %509 = vmatprep.subr.mxu0 0.0
    %510 = vmatpush1.msra.mxu0 0.0
    %511 = vmatprep.subr.mxu0 0.0
    %512 = vmatpush1.msra.mxu0 0.0
    %513 = vmatprep.subr.mxu0 0.0
    %514 = vmatpush1.msra.mxu0 0.0
    %515 = vmatprep.subr.mxu0 0.0
    %516 = vmatpush1.msra.mxu0 0.0
    %517 = vmatprep.subr.mxu0 0.0
    %518 = vmatpush1.msra.mxu0 0.0
    %519 = vmatprep.subr.mxu0 0.0
    %520 = vmatpush1.msra.mxu0 0.0
    %521 = vmatprep.subr.mxu0 0.0
    %522 = vmatpush1.msra.mxu0 0.0
    %523 = vmatprep.subr.mxu0 0.0
    %524 = vmatpush1.msra.mxu0 0.0
    %525 = vmatprep.subr.mxu0 0.0
    %526 = vmatpush1.msra.mxu0 0.0
    %527 = vmatprep.subr.mxu0 0.0
    %528 = vmatpush1.msra.mxu0 0.0
    %529 = vmatprep.subr.mxu0 0.0
    %530 = vmatpush1.msra.mxu0 0.0
    %531 = vmatprep.subr.mxu0 0.0
    %532 = vmatpush1.msra.mxu0 0.0
    %533 = vmatprep.subr.mxu0 0.0
    %534 = vmatpush1.msra.mxu0 0.0
    %535 = vmatprep.subr.mxu0 0.0
    %536 = vmatpush1.msra.mxu0 0.0
    %537 = vmatprep.subr.mxu0 0.0
    %538 = vmatpush1.msra.mxu0 0.0
    %539 = vmatprep.mubr.f32.mxu0 0.0
    %540 = vmatmul.mubr.f32.gmra.mrb[0].mxu0 %v466
    %v541 = vpop.f32.mrb[0].mxu0
    %v542 = vadd.f32 %v473, %v541
    %v543 = vpop.f32.mrb[0].mxu0
    %544 = vmatprep.mubr.f32.mxu0 0.0
    %545 = vmatmul.mubr.f32.gmra.mrb[0].mxu0 %v467
    %v546 = vpop.f32.mrb[0].mxu0
    %v547 = vadd.f32 %v473, %v546
    %v548 = vpop.f32.mrb[0].mxu0
    %549 = vdwg.mxu0
    %vm550 = vcmask 261120
    %v552 = vsel %vm550, 0.0, 0
    %554 = vmatprep.subr.mxu0 0.0
    %555 = vmatpush1.msra.mxu0 %v150
    %556 = vmatprep.subr.mxu0 0.0
    %557 = vmatpush1.msra.mxu0 %v151
    %558 = vmatprep.subr.mxu0 0.0
    %559 = vmatpush1.msra.mxu0 %v152
    %560 = vmatprep.subr.mxu0 0.0
    %561 = vmatpush1.msra.mxu0 %v153
    %562 = vmatprep.subr.mxu0 0.0
    %563 = vmatpush1.msra.mxu0 0.0
    %564 = vmatprep.subr.mxu0 0.0
    %565 = vmatpush1.msra.mxu0 0.0
    %566 = vmatprep.subr.mxu0 0.0
    %567 = vmatpush1.msra.mxu0 0.0
    %568 = vmatprep.subr.mxu0 0.0
    %569 = vmatpush1.msra.mxu0 0.0
    %570 = vmatprep.subr.mxu0 0.0
    %571 = vmatpush1.msra.mxu0 0.0
    %572 = vmatprep.subr.mxu0 0.0
    %573 = vmatpush1.msra.mxu0 0.0
    %574 = vmatprep.subr.mxu0 0.0
    %575 = vmatpush1.msra.mxu0 0.0
    %576 = vmatprep.subr.mxu0 0.0
    %577 = vmatpush1.msra.mxu0 0.0
    %578 = vmatprep.subr.mxu0 0.0
    %579 = vmatpush1.msra.mxu0 0.0
    %580 = vmatprep.subr.mxu0 0.0
    %581 = vmatpush1.msra.mxu0 0.0
    %582 = vmatprep.subr.mxu0 0.0
    %583 = vmatpush1.msra.mxu0 0.0
    %584 = vmatprep.subr.mxu0 0.0
    %585 = vmatpush1.msra.mxu0 0.0
    %586 = vmatprep.subr.mxu0 0.0
    %587 = vmatpush1.msra.mxu0 0.0
    %588 = vmatprep.subr.mxu0 0.0
    %589 = vmatpush1.msra.mxu0 0.0
    %590 = vmatprep.subr.mxu0 0.0
    %591 = vmatpush1.msra.mxu0 0.0
    %592 = vmatprep.subr.mxu0 0.0
    %593 = vmatpush1.msra.mxu0 0.0
    %594 = vmatprep.subr.mxu0 0.0
    %595 = vmatpush1.msra.mxu0 0.0
    %596 = vmatprep.subr.mxu0 0.0
    %597 = vmatpush1.msra.mxu0 0.0
    %598 = vmatprep.subr.mxu0 0.0
    %599 = vmatpush1.msra.mxu0 0.0
    %600 = vmatprep.subr.mxu0 0.0
    %601 = vmatpush1.msra.mxu0 0.0
    %602 = vmatprep.subr.mxu0 0.0
    %603 = vmatpush1.msra.mxu0 0.0
    %604 = vmatprep.subr.mxu0 0.0
    %605 = vmatpush1.msra.mxu0 0.0
    %606 = vmatprep.subr.mxu0 0.0
    %607 = vmatpush1.msra.mxu0 0.0
    %608 = vmatprep.subr.mxu0 0.0
    %609 = vmatpush1.msra.mxu0 0.0
    %610 = vmatprep.subr.mxu0 0.0
    %611 = vmatpush1.msra.mxu0 0.0
    %612 = vmatprep.subr.mxu0 0.0
    %613 = vmatpush1.msra.mxu0 0.0
    %614 = vmatprep.subr.mxu0 0.0
    %615 = vmatpush1.msra.mxu0 0.0
    %616 = vmatprep.subr.mxu0 0.0
    %617 = vmatpush1.msra.mxu0 0.0
    %618 = vmatprep.mubr.f32.mxu0 0.0
    %619 = vmatmul.mubr.f32.gmra.mrb[0].mxu0 %v552
    %v620 = vpop.f32.mrb[0].mxu0
    %v621 = vadd.f32 0.0, %v620
    %v622 = vpop.f32.mrb[0].mxu0
    %623 = vdwg.mxu0
    %v624 = vadd.f32 %v390, %v621
    %v625 = vtanh.pop %v624
    %v626 = vmul.f32 %v625, 0.5
    %v627 = vadd.f32 %v626, 0.5
    %v628 = vmul.f32 %v627, 0.0
    %630 = vrot.lane.b32.xlu0 %v625, 64
    %v631 = vpop.permute.xlu0 %630
    %v633 = vmul.f32 %v627, %v631
    %635 = vrot.lane.b32.xlu0 %v633, 32
    %v636 = vpop.permute.xlu0 %635
    %v638 = vadd.f32 %v628, %v636
    %v639 = vtanh.pop %v638
    %641 = vrot.lane.b32.xlu0 %v639, 64
    %v642 = vpop.permute.xlu0 %641
    %v644 = vmul.f32 %v627, %v642
    %646 = vrot.lane.b32.xlu0 %v644, 32
    %v647 = vpop.permute.xlu0 %646
    %v648 = vsel %vm550, %v647, 0
    %650 = vmatprep.subr.mxu0 0.0
    %651 = vmatpush1.msra.mxu0 %v150
    %652 = vmatprep.subr.mxu0 0.0
    %653 = vmatpush1.msra.mxu0 %v151
    %654 = vmatprep.subr.mxu0 0.0
    %655 = vmatpush1.msra.mxu0 %v152
    %656 = vmatprep.subr.mxu0 0.0
    %657 = vmatpush1.msra.mxu0 %v153
    %658 = vmatprep.subr.mxu0 0.0
    %659 = vmatpush1.msra.mxu0 0.0
    %660 = vmatprep.subr.mxu0 0.0
    %661 = vmatpush1.msra.mxu0 0.0
    %662 = vmatprep.subr.mxu0 0.0
    %663 = vmatpush1.msra.mxu0 0.0
    %664 = vmatprep.subr.mxu0 0.0
    %665 = vmatpush1.msra.mxu0 0.0
    %666 = vmatprep.subr.mxu0 0.0
    %667 = vmatpush1.msra.mxu0 0.0
    %668 = vmatprep.subr.mxu0 0.0
    %669 = vmatpush1.msra.mxu0 0.0
    %670 = vmatprep.subr.mxu0 0.0
    %671 = vmatpush1.msra.mxu0 0.0
    %672 = vmatprep.subr.mxu0 0.0
    %673 = vmatpush1.msra.mxu0 0.0
    %674 = vmatprep.subr.mxu0 0.0
    %675 = vmatpush1.msra.mxu0 0.0
    %676 = vmatprep.subr.mxu0 0.0
    %677 = vmatpush1.msra.mxu0 0.0
    %678 = vmatprep.subr.mxu0 0.0
    %679 = vmatpush1.msra.mxu0 0.0
    %680 = vmatprep.subr.mxu0 0.0
    %681 = vmatpush1.msra.mxu0 0.0
    %682 = vmatprep.subr.mxu0 0.0
    %683 = vmatpush1.msra.mxu0 0.0
    %684 = vmatprep.subr.mxu0 0.0
    %685 = vmatpush1.msra.mxu0 0.0
    %686 = vmatprep.subr.mxu0 0.0
    %687 = vmatpush1.msra.mxu0 0.0
    %688 = vmatprep.subr.mxu0 0.0
    %689 = vmatpush1.msra.mxu0 0.0
    %690 = vmatprep.subr.mxu0 0.0
    %691 = vmatpush1.msra.mxu0 0.0
    %692 = vmatprep.subr.mxu0 0.0
    %693 = vmatpush1.msra.mxu0 0.0
    %694 = vmatprep.subr.mxu0 0.0
    %695 = vmatpush1.msra.mxu0 0.0
    %696 = vmatprep.subr.mxu0 0.0
    %697 = vmatpush1.msra.mxu0 0.0
    %698 = vmatprep.subr.mxu0 0.0
    %699 = vmatpush1.msra.mxu0 0.0
    %700 = vmatprep.subr.mxu0 0.0
    %701 = vmatpush1.msra.mxu0 0.0
    %702 = vmatprep.subr.mxu0 0.0
    %703 = vmatpush1.msra.mxu0 0.0
    %704 = vmatprep.subr.mxu0 0.0
    %705 = vmatpush1.msra.mxu0 0.0
    %706 = vmatprep.subr.mxu0 0.0
    %707 = vmatpush1.msra.mxu0 0.0
    %708 = vmatprep.subr.mxu0 0.0
    %709 = vmatpush1.msra.mxu0 0.0
    %710 = vmatprep.subr.mxu0 0.0
    %711 = vmatpush1.msra.mxu0 0.0
    %712 = vmatprep.subr.mxu0 0.0
    %713 = vmatpush1.msra.mxu0 0.0
    %714 = vmatprep.mubr.f32.mxu0 0.0
    %715 = vmatmul.mubr.f32.gmra.mrb[0].mxu0 %v648
    %v716 = vpop.f32.mrb[0].mxu0
    %v717 = vadd.f32 0.0, %v716
    %v718 = vpop.f32.mrb[0].mxu0
    %719 = vdwg.mxu0
    %v721 = vrot.slane %v717, 6
    %v723 = vadd.f32 %v390, %v721
    %v724 = vtanh.pop %v723
    %v725 = vmul.f32 %v724, 0.5
    %v726 = vadd.f32 %v725, 0.5
    %v728 = vrot.slane %v638, 6
    %v730 = vmul.f32 %v726, %v728
    %732 = vrot.lane.b32.xlu0 %v724, 64
    %v733 = vpop.permute.xlu0 %732
    %v735 = vmul.f32 %v726, %v733
    %737 = vrot.lane.b32.xlu0 %v735, 32
    %v738 = vpop.permute.xlu0 %737
    %v740 = vadd.f32 %v730, %v738
    %v741 = vtanh.pop %v740
    %743 = vrot.lane.b32.xlu0 %v741, 64
    %v744 = vpop.permute.xlu0 %743
    %v746 = vmul.f32 %v726, %v744
    %v748 = vrot.slane %v746, 2
    %749 = vrot.lane.b32.xlu0 %v748, 32
    %v750 = vpop.permute.xlu0 %749
    %v751 = vsel %vm550, %v750, 0
    %753 = vmatprep.subr.mxu0 0.0
    %754 = vmatpush1.msra.mxu0 %v150
    %755 = vmatprep.subr.mxu0 0.0
    %756 = vmatpush1.msra.mxu0 %v151
    %757 = vmatprep.subr.mxu0 0.0
    %758 = vmatpush1.msra.mxu0 %v152
    %759 = vmatprep.subr.mxu0 0.0
    %760 = vmatpush1.msra.mxu0 %v153
    %761 = vmatprep.subr.mxu0 0.0
    %762 = vmatpush1.msra.mxu0 0.0
    %763 = vmatprep.subr.mxu0 0.0
    %764 = vmatpush1.msra.mxu0 0.0
    %765 = vmatprep.subr.mxu0 0.0
    %766 = vmatpush1.msra.mxu0 0.0
    %767 = vmatprep.subr.mxu0 0.0
    %768 = vmatpush1.msra.mxu0 0.0
    %769 = vmatprep.subr.mxu0 0.0
    %770 = vmatpush1.msra.mxu0 0.0
    %771 = vmatprep.subr.mxu0 0.0
    %772 = vmatpush1.msra.mxu0 0.0
    %773 = vmatprep.subr.mxu0 0.0
    %774 = vmatpush1.msra.mxu0 0.0
    %775 = vmatprep.subr.mxu0 0.0
    %776 = vmatpush1.msra.mxu0 0.0
    %777 = vmatprep.subr.mxu0 0.0
    %778 = vmatpush1.msra.mxu0 0.0
    %779 = vmatprep.subr.mxu0 0.0
    %780 = vmatpush1.msra.mxu0 0.0
    %781 = vmatprep.subr.mxu0 0.0
    %782 = vmatpush1.msra.mxu0 0.0
    %783 = vmatprep.subr.mxu0 0.0
    %784 = vmatpush1.msra.mxu0 0.0
    %785 = vmatprep.subr.mxu0 0.0
    %786 = vmatpush1.msra.mxu0 0.0
    %787 = vmatprep.subr.mxu0 0.0
    %788 = vmatpush1.msra.mxu0 0.0
    %789 = vmatprep.subr.mxu0 0.0
    %790 = vmatpush1.msra.mxu0 0.0
    %791 = vmatprep.subr.mxu0 0.0
    %792 = vmatpush1.msra.mxu0 0.0
    %793 = vmatprep.subr.mxu0 0.0
    %794 = vmatpush1.msra.mxu0 0.0
    %795 = vmatprep.subr.mxu0 0.0
    %796 = vmatpush1.msra.mxu0 0.0
    %797 = vmatprep.subr.mxu0 0.0
    %798 = vmatpush1.msra.mxu0 0.0
    %799 = vmatprep.subr.mxu0 0.0
    %800 = vmatpush1.msra.mxu0 0.0
    %801 = vmatprep.subr.mxu0 0.0
    %802 = vmatpush1.msra.mxu0 0.0
    %803 = vmatprep.subr.mxu0 0.0
    %804 = vmatpush1.msra.mxu0 0.0
    %805 = vmatprep.subr.mxu0 0.0
    %806 = vmatpush1.msra.mxu0 0.0
    %807 = vmatprep.subr.mxu0 0.0
    %808 = vmatpush1.msra.mxu0 0.0
    %809 = vmatprep.subr.mxu0 0.0
    %810 = vmatpush1.msra.mxu0 0.0
    %811 = vmatprep.subr.mxu0 0.0
    %812 = vmatpush1.msra.mxu0 0.0
    %813 = vmatprep.subr.mxu0 0.0
    %814 = vmatpush1.msra.mxu0 0.0
    %815 = vmatprep.subr.mxu0 0.0
    %816 = vmatpush1.msra.mxu0 0.0
    %817 = vmatprep.mubr.f32.mxu0 0.0
    %818 = vmatmul.mubr.f32.gmra.mrb[0].mxu0 %v751
    %v819 = vpop.f32.mrb[0].mxu0
    %v820 = vadd.f32 0.0, %v819
    %v821 = vpop.f32.mrb[0].mxu0
    %822 = vdwg.mxu0
    %v824 = vrot.slane %v820, 4
    %v826 = vadd.f32 %v390, %v824
    %v827 = vtanh.pop %v826
    %v828 = vmul.f32 %v827, 0.5
    %v829 = vadd.f32 %v828, 0.5
    %v831 = vrot.slane %v740, 6
    %v833 = vmul.f32 %v829, %v831
    %835 = vrot.lane.b32.xlu0 %v827, 64
    %v836 = vpop.permute.xlu0 %835
    %v838 = vmul.f32 %v829, %v836
    %840 = vrot.lane.b32.xlu0 %v838, 32
    %v841 = vpop.permute.xlu0 %840
    %v843 = vadd.f32 %v833, %v841
    %v844 = vtanh.pop %v843
    %846 = vrot.lane.b32.xlu0 %v844, 64
    %v847 = vpop.permute.xlu0 %846
    %v849 = vmul.f32 %v829, %v847
    %v851 = vrot.slane %v849, 4
    %852 = vrot.lane.b32.xlu0 %v851, 32
    %v853 = vpop.permute.xlu0 %852
    %v854 = vsel %vm550, %v853, 0
    %856 = vmatprep.subr.mxu0 0.0
    %857 = vmatpush1.msra.mxu0 %v150
    %858 = vmatprep.subr.mxu0 0.0
    %859 = vmatpush1.msra.mxu0 %v151
    %860 = vmatprep.subr.mxu0 0.0
    %861 = vmatpush1.msra.mxu0 %v152
    %862 = vmatprep.subr.mxu0 0.0
    %863 = vmatpush1.msra.mxu0 %v153
    %864 = vmatprep.subr.mxu0 0.0
    %865 = vmatpush1.msra.mxu0 0.0
    %866 = vmatprep.subr.mxu0 0.0
    %867 = vmatpush1.msra.mxu0 0.0
    %868 = vmatprep.subr.mxu0 0.0
    %869 = vmatpush1.msra.mxu0 0.0
    %870 = vmatprep.subr.mxu0 0.0
    %871 = vmatpush1.msra.mxu0 0.0
    %872 = vmatprep.subr.mxu0 0.0
    %873 = vmatpush1.msra.mxu0 0.0
    %874 = vmatprep.subr.mxu0 0.0
    %875 = vmatpush1.msra.mxu0 0.0
    %876 = vmatprep.subr.mxu0 0.0
    %877 = vmatpush1.msra.mxu0 0.0
    %878 = vmatprep.subr.mxu0 0.0
    %879 = vmatpush1.msra.mxu0 0.0
    %880 = vmatprep.subr.mxu0 0.0
    %881 = vmatpush1.msra.mxu0 0.0
    %882 = vmatprep.subr.mxu0 0.0
    %883 = vmatpush1.msra.mxu0 0.0
    %884 = vmatprep.subr.mxu0 0.0
    %885 = vmatpush1.msra.mxu0 0.0
    %886 = vmatprep.subr.mxu0 0.0
    %887 = vmatpush1.msra.mxu0 0.0
    %888 = vmatprep.subr.mxu0 0.0
    %889 = vmatpush1.msra.mxu0 0.0
    %890 = vmatprep.subr.mxu0 0.0
    %891 = vmatpush1.msra.mxu0 0.0
    %892 = vmatprep.subr.mxu0 0.0
    %893 = vmatpush1.msra.mxu0 0.0
    %894 = vmatprep.subr.mxu0 0.0
    %895 = vmatpush1.msra.mxu0 0.0
    %896 = vmatprep.subr.mxu0 0.0
    %897 = vmatpush1.msra.mxu0 0.0
    %898 = vmatprep.subr.mxu0 0.0
    %899 = vmatpush1.msra.mxu0 0.0
    %900 = vmatprep.subr.mxu0 0.0
    %901 = vmatpush1.msra.mxu0 0.0
    %902 = vmatprep.subr.mxu0 0.0
    %903 = vmatpush1.msra.mxu0 0.0
    %904 = vmatprep.subr.mxu0 0.0
    %905 = vmatpush1.msra.mxu0 0.0
    %906 = vmatprep.subr.mxu0 0.0
    %907 = vmatpush1.msra.mxu0 0.0
    %908 = vmatprep.subr.mxu0 0.0
    %909 = vmatpush1.msra.mxu0 0.0
    %910 = vmatprep.subr.mxu0 0.0
    %911 = vmatpush1.msra.mxu0 0.0
    %912 = vmatprep.subr.mxu0 0.0
    %913 = vmatpush1.msra.mxu0 0.0
    %914 = vmatprep.subr.mxu0 0.0
    %915 = vmatpush1.msra.mxu0 0.0
    %916 = vmatprep.subr.mxu0 0.0
    %917 = vmatpush1.msra.mxu0 0.0
    %918 = vmatprep.subr.mxu0 0.0
    %919 = vmatpush1.msra.mxu0 0.0
    %920 = vmatprep.mubr.f32.mxu0 0.0
    %921 = vmatmul.mubr.f32.gmra.mrb[0].mxu0 %v854
    %v922 = vpop.f32.mrb[0].mxu0
    %v923 = vadd.f32 0.0, %v922
    %v924 = vpop.f32.mrb[0].mxu0
    %925 = vdwg.mxu0
    %v927 = vrot.slane %v923, 2
    %v929 = vadd.f32 %v390, %v927
    %v930 = vtanh.pop %v929
    %v931 = vmul.f32 %v930, 0.5
    %v932 = vadd.f32 %v931, 0.5
    %v934 = vrot.slane %v843, 6
    %v936 = vmul.f32 %v932, %v934
    %938 = vrot.lane.b32.xlu0 %v930, 64
    %v939 = vpop.permute.xlu0 %938
    %v941 = vmul.f32 %v932, %v939
    %943 = vrot.lane.b32.xlu0 %v941, 32
    %v944 = vpop.permute.xlu0 %943
    %v946 = vadd.f32 %v936, %v944
    %v947 = vtanh.pop %v946
    %949 = vrot.lane.b32.xlu0 %v947, 64
    %v950 = vpop.permute.xlu0 %949
    %v952 = vmul.f32 %v932, %v950
    %v954 = vrot.slane %v952, 6
    %955 = vrot.lane.b32.xlu0 %v954, 32
    %v956 = vpop.permute.xlu0 %955
    %v957 = vsel %vm550, %v956, 0
    %959 = vmatprep.subr.mxu0 0.0
    %960 = vmatpush1.msra.mxu0 %v150
    %961 = vmatprep.subr.mxu0 0.0
    %962 = vmatpush1.msra.mxu0 %v151
    %963 = vmatprep.subr.mxu0 0.0
    %964 = vmatpush1.msra.mxu0 %v152
    %965 = vmatprep.subr.mxu0 0.0
    %966 = vmatpush1.msra.mxu0 %v153
    %967 = vmatprep.subr.mxu0 0.0
    %968 = vmatpush1.msra.mxu0 0.0
    %969 = vmatprep.subr.mxu0 0.0
    %970 = vmatpush1.msra.mxu0 0.0
    %971 = vmatprep.subr.mxu0 0.0
    %972 = vmatpush1.msra.mxu0 0.0
    %973 = vmatprep.subr.mxu0 0.0
    %974 = vmatpush1.msra.mxu0 0.0
    %975 = vmatprep.subr.mxu0 0.0
    %976 = vmatpush1.msra.mxu0 0.0
    %977 = vmatprep.subr.mxu0 0.0
    %978 = vmatpush1.msra.mxu0 0.0
    %979 = vmatprep.subr.mxu0 0.0
    %980 = vmatpush1.msra.mxu0 0.0
    %981 = vmatprep.subr.mxu0 0.0
    %982 = vmatpush1.msra.mxu0 0.0
    %983 = vmatprep.subr.mxu0 0.0
    %984 = vmatpush1.msra.mxu0 0.0
    %985 = vmatprep.subr.mxu0 0.0
    %986 = vmatpush1.msra.mxu0 0.0
    %987 = vmatprep.subr.mxu0 0.0
    %988 = vmatpush1.msra.mxu0 0.0
    %989 = vmatprep.subr.mxu0 0.0
    %990 = vmatpush1.msra.mxu0 0.0
    %991 = vmatprep.subr.mxu0 0.0
    %992 = vmatpush1.msra.mxu0 0.0
    %993 = vmatprep.subr.mxu0 0.0
    %994 = vmatpush1.msra.mxu0 0.0
    %995 = vmatprep.subr.mxu0 0.0
    %996 = vmatpush1.msra.mxu0 0.0
    %997 = vmatprep.subr.mxu0 0.0
    %998 = vmatpush1.msra.mxu0 0.0
    %999 = vmatprep.subr.mxu0 0.0
    %1000 = vmatpush1.msra.mxu0 0.0
    %1001 = vmatprep.subr.mxu0 0.0
    %1002 = vmatpush1.msra.mxu0 0.0
    %1003 = vmatprep.subr.mxu0 0.0
    %1004 = vmatpush1.msra.mxu0 0.0
    %1005 = vmatprep.subr.mxu0 0.0
    %1006 = vmatpush1.msra.mxu0 0.0
    %1007 = vmatprep.subr.mxu0 0.0
    %1008 = vmatpush1.msra.mxu0 0.0
    %1009 = vmatprep.subr.mxu0 0.0
    %1010 = vmatpush1.msra.mxu0 0.0
    %1011 = vmatprep.subr.mxu0 0.0
    %1012 = vmatpush1.msra.mxu0 0.0
    %1013 = vmatprep.subr.mxu0 0.0
    %1014 = vmatpush1.msra.mxu0 0.0
    %1015 = vmatprep.subr.mxu0 0.0
    %1016 = vmatpush1.msra.mxu0 0.0
    %1017 = vmatprep.subr.mxu0 0.0
    %1018 = vmatpush1.msra.mxu0 0.0
    %1019 = vmatprep.subr.mxu0 0.0
    %1020 = vmatpush1.msra.mxu0 0.0
    %1021 = vmatprep.subr.mxu0 0.0
    %1022 = vmatpush1.msra.mxu0 0.0
    %1023 = vmatprep.mubr.f32.mxu0 0.0
    %1024 = vmatmul.mubr.f32.gmra.mrb[0].mxu0 %v957
    %v1025 = vpop.f32.mrb[0].mxu0
    %v1026 = vadd.f32 0.0, %v1025
    %v1027 = vpop.f32.mrb[0].mxu0
    %1028 = vdwg.mxu0
    %v1029 = vadd.f32 %v395, %v1026
    %v1030 = vtanh.pop %v1029
    %v1031 = vmul.f32 %v1030, 0.5
    %v1032 = vadd.f32 %v1031, 0.5
    %v1034 = vrot.slane %v946, 6
    %v1036 = vmul.f32 %v1032, %v1034
    %1038 = vrot.lane.b32.xlu0 %v1030, 64
    %v1039 = vpop.permute.xlu0 %1038
    %v1041 = vmul.f32 %v1032, %v1039
    %1043 = vrot.lane.b32.xlu0 %v1041, 32
    %v1044 = vpop.permute.xlu0 %1043
    %v1046 = vadd.f32 %v1036, %v1044
    %v1047 = vtanh.pop %v1046
    %1049 = vrot.lane.b32.xlu0 %v1047, 64
    %v1050 = vpop.permute.xlu0 %1049
    %v1052 = vmul.f32 %v1032, %v1050
    %1054 = vrot.lane.b32.xlu0 %v1052, 32
    %v1055 = vpop.permute.xlu0 %1054
    %v1056 = vsel %vm550, %v1055, 0
    %1058 = vmatprep.subr.mxu0 0.0
    %1059 = vmatpush1.msra.mxu0 %v150
    %1060 = vmatprep.subr.mxu0 0.0
    %1061 = vmatpush1.msra.mxu0 %v151
    %1062 = vmatprep.subr.mxu0 0.0
    %1063 = vmatpush1.msra.mxu0 %v152
    %1064 = vmatprep.subr.mxu0 0.0
    %1065 = vmatpush1.msra.mxu0 %v153
    %1066 = vmatprep.subr.mxu0 0.0
    %1067 = vmatpush1.msra.mxu0 0.0
    %1068 = vmatprep.subr.mxu0 0.0
    %1069 = vmatpush1.msra.mxu0 0.0
    %1070 = vmatprep.subr.mxu0 0.0
    %1071 = vmatpush1.msra.mxu0 0.0
    %1072 = vmatprep.subr.mxu0 0.0
    %1073 = vmatpush1.msra.mxu0 0.0
    %1074 = vmatprep.subr.mxu0 0.0
    %1075 = vmatpush1.msra.mxu0 0.0
    %1076 = vmatprep.subr.mxu0 0.0
    %1077 = vmatpush1.msra.mxu0 0.0
    %1078 = vmatprep.subr.mxu0 0.0
    %1079 = vmatpush1.msra.mxu0 0.0
    %1080 = vmatprep.subr.mxu0 0.0
    %1081 = vmatpush1.msra.mxu0 0.0
    %1082 = vmatprep.subr.mxu0 0.0
    %1083 = vmatpush1.msra.mxu0 0.0
    %1084 = vmatprep.subr.mxu0 0.0
    %1085 = vmatpush1.msra.mxu0 0.0
    %1086 = vmatprep.subr.mxu0 0.0
    %1087 = vmatpush1.msra.mxu0 0.0
    %1088 = vmatprep.subr.mxu0 0.0
    %1089 = vmatpush1.msra.mxu0 0.0
    %1090 = vmatprep.subr.mxu0 0.0
    %1091 = vmatpush1.msra.mxu0 0.0
    %1092 = vmatprep.subr.mxu0 0.0
    %1093 = vmatpush1.msra.mxu0 0.0
    %1094 = vmatprep.subr.mxu0 0.0
    %1095 = vmatpush1.msra.mxu0 0.0
    %1096 = vmatprep.subr.mxu0 0.0
    %1097 = vmatpush1.msra.mxu0 0.0
    %1098 = vmatprep.subr.mxu0 0.0
    %1099 = vmatpush1.msra.mxu0 0.0
    %1100 = vmatprep.subr.mxu0 0.0
    %1101 = vmatpush1.msra.mxu0 0.0
    %1102 = vmatprep.subr.mxu0 0.0
    %1103 = vmatpush1.msra.mxu0 0.0
    %1104 = vmatprep.subr.mxu0 0.0
    %1105 = vmatpush1.msra.mxu0 0.0
    %1106 = vmatprep.subr.mxu0 0.0
    %1107 = vmatpush1.msra.mxu0 0.0
    %1108 = vmatprep.subr.mxu0 0.0
    %1109 = vmatpush1.msra.mxu0 0.0
    %1110 = vmatprep.subr.mxu0 0.0
    %1111 = vmatpush1.msra.mxu0 0.0
    %1112 = vmatprep.subr.mxu0 0.0
    %1113 = vmatpush1.msra.mxu0 0.0
    %1114 = vmatprep.subr.mxu0 0.0
    %1115 = vmatpush1.msra.mxu0 0.0
    %1116 = vmatprep.subr.mxu0 0.0
    %1117 = vmatpush1.msra.mxu0 0.0
    %1118 = vmatprep.subr.mxu0 0.0
    %1119 = vmatpush1.msra.mxu0 0.0
    %1120 = vmatprep.subr.mxu0 0.0
    %1121 = vmatpush1.msra.mxu0 0.0
    %1122 = vmatprep.mubr.f32.mxu0 0.0
    %1123 = vmatmul.mubr.f32.gmra.mrb[0].mxu0 %v1056
    %v1124 = vpop.f32.mrb[0].mxu0
    %v1125 = vadd.f32 0.0, %v1124
    %v1126 = vpop.f32.mrb[0].mxu0
    %1127 = vdwg.mxu0
    %v1129 = vrot.slane %v1125, 6
    %v1131 = vadd.f32 %v395, %v1129
    %v1132 = vtanh.pop %v1131
    %v1133 = vmul.f32 %v1132, 0.5
    %v1134 = vadd.f32 %v1133, 0.5
    %v1136 = vrot.slane %v1046, 6
    %v1138 = vmul.f32 %v1134, %v1136
    %1140 = vrot.lane.b32.xlu0 %v1132, 64
    %v1141 = vpop.permute.xlu0 %1140
    %v1143 = vmul.f32 %v1134, %v1141
    %1145 = vrot.lane.b32.xlu0 %v1143, 32
    %v1146 = vpop.permute.xlu0 %1145
    %v1148 = vadd.f32 %v1138, %v1146
    %v1149 = vtanh.pop %v1148
    %1151 = vrot.lane.b32.xlu0 %v1149, 64
    %v1152 = vpop.permute.xlu0 %1151
    %v1154 = vmul.f32 %v1134, %v1152
    %v1156 = vrot.slane %v1154, 2
    %1157 = vrot.lane.b32.xlu0 %v1156, 32
    %v1158 = vpop.permute.xlu0 %1157
    %v1159 = vsel %vm550, %v1158, 0
    %1161 = vmatprep.subr.mxu0 0.0
    %1162 = vmatpush1.msra.mxu0 %v150
    %1163 = vmatprep.subr.mxu0 0.0
    %1164 = vmatpush1.msra.mxu0 %v151
    %1165 = vmatprep.subr.mxu0 0.0
    %1166 = vmatpush1.msra.mxu0 %v152
    %1167 = vmatprep.subr.mxu0 0.0
    %1168 = vmatpush1.msra.mxu0 %v153
    %1169 = vmatprep.subr.mxu0 0.0
    %1170 = vmatpush1.msra.mxu0 0.0
    %1171 = vmatprep.subr.mxu0 0.0
    %1172 = vmatpush1.msra.mxu0 0.0
    %1173 = vmatprep.subr.mxu0 0.0
    %1174 = vmatpush1.msra.mxu0 0.0
    %1175 = vmatprep.subr.mxu0 0.0
    %1176 = vmatpush1.msra.mxu0 0.0
    %1177 = vmatprep.subr.mxu0 0.0
    %1178 = vmatpush1.msra.mxu0 0.0
    %1179 = vmatprep.subr.mxu0 0.0
    %1180 = vmatpush1.msra.mxu0 0.0
    %1181 = vmatprep.subr.mxu0 0.0
    %1182 = vmatpush1.msra.mxu0 0.0
    %1183 = vmatprep.subr.mxu0 0.0
    %1184 = vmatpush1.msra.mxu0 0.0
    %1185 = vmatprep.subr.mxu0 0.0
    %1186 = vmatpush1.msra.mxu0 0.0
    %1187 = vmatprep.subr.mxu0 0.0
    %1188 = vmatpush1.msra.mxu0 0.0
    %1189 = vmatprep.subr.mxu0 0.0
    %1190 = vmatpush1.msra.mxu0 0.0
    %1191 = vmatprep.subr.mxu0 0.0
    %1192 = vmatpush1.msra.mxu0 0.0
    %1193 = vmatprep.subr.mxu0 0.0
    %1194 = vmatpush1.msra.mxu0 0.0
    %1195 = vmatprep.subr.mxu0 0.0
    %1196 = vmatpush1.msra.mxu0 0.0
    %1197 = vmatprep.subr.mxu0 0.0
    %1198 = vmatpush1.msra.mxu0 0.0
    %1199 = vmatprep.subr.mxu0 0.0
    %1200 = vmatpush1.msra.mxu0 0.0
    %1201 = vmatprep.subr.mxu0 0.0
    %1202 = vmatpush1.msra.mxu0 0.0
    %1203 = vmatprep.subr.mxu0 0.0
    %1204 = vmatpush1.msra.mxu0 0.0
    %1205 = vmatprep.subr.mxu0 0.0
    %1206 = vmatpush1.msra.mxu0 0.0
    %1207 = vmatprep.subr.mxu0 0.0
    %1208 = vmatpush1.msra.mxu0 0.0
    %1209 = vmatprep.subr.mxu0 0.0
    %1210 = vmatpush1.msra.mxu0 0.0
    %1211 = vmatprep.subr.mxu0 0.0
    %1212 = vmatpush1.msra.mxu0 0.0
    %1213 = vmatprep.subr.mxu0 0.0
    %1214 = vmatpush1.msra.mxu0 0.0
    %1215 = vmatprep.subr.mxu0 0.0
    %1216 = vmatpush1.msra.mxu0 0.0
    %1217 = vmatprep.subr.mxu0 0.0
    %1218 = vmatpush1.msra.mxu0 0.0
    %1219 = vmatprep.subr.mxu0 0.0
    %1220 = vmatpush1.msra.mxu0 0.0
    %1221 = vmatprep.subr.mxu0 0.0
    %1222 = vmatpush1.msra.mxu0 0.0
    %1223 = vmatprep.subr.mxu0 0.0
    %1224 = vmatpush1.msra.mxu0 0.0
    %1225 = vmatprep.mubr.f32.mxu0 0.0
    %1226 = vmatmul.mubr.f32.gmra.mrb[0].mxu0 %v1159
    %v1227 = vpop.f32.mrb[0].mxu0
    %v1228 = vadd.f32 0.0, %v1227
    %v1229 = vpop.f32.mrb[0].mxu0
    %1230 = vdwg.mxu0
    %v1232 = vrot.slane %v1228, 4
    %v1234 = vadd.f32 %v395, %v1232
    %v1235 = vtanh.pop %v1234
    %v1236 = vmul.f32 %v1235, 0.5
    %v1237 = vadd.f32 %v1236, 0.5
    %v1239 = vrot.slane %v1148, 6
    %v1241 = vmul.f32 %v1237, %v1239
    %1243 = vrot.lane.b32.xlu0 %v1235, 64
    %v1244 = vpop.permute.xlu0 %1243
    %v1246 = vmul.f32 %v1237, %v1244
    %1248 = vrot.lane.b32.xlu0 %v1246, 32
    %v1249 = vpop.permute.xlu0 %1248
    %v1251 = vadd.f32 %v1241, %v1249
    %v1252 = vtanh.pop %v1251
    %1254 = vrot.lane.b32.xlu0 %v1252, 64
    %v1255 = vpop.permute.xlu0 %1254
    %v1257 = vmul.f32 %v1237, %v1255
    %v1259 = vrot.slane %v1257, 4
    %1260 = vrot.lane.b32.xlu0 %v1259, 32
    %v1261 = vpop.permute.xlu0 %1260
    %v1262 = vsel %vm550, %v1261, 0
    %1264 = vmatprep.subr.mxu0 0.0
    %1265 = vmatpush1.msra.mxu0 %v150
    %1266 = vmatprep.subr.mxu0 0.0
    %1267 = vmatpush1.msra.mxu0 %v151
    %1268 = vmatprep.subr.mxu0 0.0
    %1269 = vmatpush1.msra.mxu0 %v152
    %1270 = vmatprep.subr.mxu0 0.0
    %1271 = vmatpush1.msra.mxu0 %v153
    %1272 = vmatprep.subr.mxu0 0.0
    %1273 = vmatpush1.msra.mxu0 0.0
    %1274 = vmatprep.subr.mxu0 0.0
    %1275 = vmatpush1.msra.mxu0 0.0
    %1276 = vmatprep.subr.mxu0 0.0
    %1277 = vmatpush1.msra.mxu0 0.0
    %1278 = vmatprep.subr.mxu0 0.0
    %1279 = vmatpush1.msra.mxu0 0.0
    %1280 = vmatprep.subr.mxu0 0.0
    %1281 = vmatpush1.msra.mxu0 0.0
    %1282 = vmatprep.subr.mxu0 0.0
    %1283 = vmatpush1.msra.mxu0 0.0
    %1284 = vmatprep.subr.mxu0 0.0
    %1285 = vmatpush1.msra.mxu0 0.0
    %1286 = vmatprep.subr.mxu0 0.0
    %1287 = vmatpush1.msra.mxu0 0.0
    %1288 = vmatprep.subr.mxu0 0.0
    %1289 = vmatpush1.msra.mxu0 0.0
    %1290 = vmatprep.subr.mxu0 0.0
    %1291 = vmatpush1.msra.mxu0 0.0
    %1292 = vmatprep.subr.mxu0 0.0
    %1293 = vmatpush1.msra.mxu0 0.0
    %1294 = vmatprep.subr.mxu0 0.0
    %1295 = vmatpush1.msra.mxu0 0.0
    %1296 = vmatprep.subr.mxu0 0.0
    %1297 = vmatpush1.msra.mxu0 0.0
    %1298 = vmatprep.subr.mxu0 0.0
    %1299 = vmatpush1.msra.mxu0 0.0
    %1300 = vmatprep.subr.mxu0 0.0
    %1301 = vmatpush1.msra.mxu0 0.0
    %1302 = vmatprep.subr.mxu0 0.0
    %1303 = vmatpush1.msra.mxu0 0.0
    %1304 = vmatprep.subr.mxu0 0.0
    %1305 = vmatpush1.msra.mxu0 0.0
    %1306 = vmatprep.subr.mxu0 0.0
    %1307 = vmatpush1.msra.mxu0 0.0
    %1308 = vmatprep.subr.mxu0 0.0
    %1309 = vmatpush1.msra.mxu0 0.0
    %1310 = vmatprep.subr.mxu0 0.0
    %1311 = vmatpush1.msra.mxu0 0.0
    %1312 = vmatprep.subr.mxu0 0.0
    %1313 = vmatpush1.msra.mxu0 0.0
    %1314 = vmatprep.subr.mxu0 0.0
    %1315 = vmatpush1.msra.mxu0 0.0
    %1316 = vmatprep.subr.mxu0 0.0
    %1317 = vmatpush1.msra.mxu0 0.0
    %1318 = vmatprep.subr.mxu0 0.0
    %1319 = vmatpush1.msra.mxu0 0.0
    %1320 = vmatprep.subr.mxu0 0.0
    %1321 = vmatpush1.msra.mxu0 0.0
    %1322 = vmatprep.subr.mxu0 0.0
    %1323 = vmatpush1.msra.mxu0 0.0
    %1324 = vmatprep.subr.mxu0 0.0
    %1325 = vmatpush1.msra.mxu0 0.0
    %1326 = vmatprep.subr.mxu0 0.0
    %1327 = vmatpush1.msra.mxu0 0.0
    %1328 = vmatprep.mubr.f32.mxu0 0.0
    %1329 = vmatmul.mubr.f32.gmra.mrb[0].mxu0 %v1262
    %v1330 = vpop.f32.mrb[0].mxu0
    %v1331 = vadd.f32 0.0, %v1330
    %v1332 = vpop.f32.mrb[0].mxu0
    %1333 = vdwg.mxu0
    %v1335 = vrot.slane %v1331, 2
    %v1337 = vadd.f32 %v395, %v1335
    %v1338 = vtanh.pop %v1337
    %v1339 = vmul.f32 %v1338, 0.5
    %v1340 = vadd.f32 %v1339, 0.5
    %v1342 = vrot.slane %v1251, 6
    %v1344 = vmul.f32 %v1340, %v1342
    %1346 = vrot.lane.b32.xlu0 %v1338, 64
    %v1347 = vpop.permute.xlu0 %1346
    %v1349 = vmul.f32 %v1340, %v1347
    %1351 = vrot.lane.b32.xlu0 %v1349, 32
    %v1352 = vpop.permute.xlu0 %1351
    %v1354 = vadd.f32 %v1344, %v1352
    %v1355 = vtanh.pop %v1354
    %1357 = vrot.lane.b32.xlu0 %v1355, 64
    %v1358 = vpop.permute.xlu0 %1357
    %v1360 = vmul.f32 %v1340, %v1358
    %v1362 = vrot.slane %v1360, 6
    %1363 = vrot.lane.b32.xlu0 %v1362, 32
    %v1364 = vpop.permute.xlu0 %1363
    %v1365 = vsel %vm550, %v1364, 0
    %1367 = vmatprep.subr.mxu0 0.0
    %1368 = vmatpush1.msra.mxu0 %v154
    %1369 = vmatprep.subr.mxu0 0.0
    %1370 = vmatpush1.msra.mxu0 %v155
    %1371 = vmatprep.subr.mxu0 0.0
    %1372 = vmatpush1.msra.mxu0 %v156
    %1373 = vmatprep.subr.mxu0 0.0
    %1374 = vmatpush1.msra.mxu0 %v157
    %1375 = vmatprep.subr.mxu0 0.0
    %1376 = vmatpush1.msra.mxu0 0.0
    %1377 = vmatprep.subr.mxu0 0.0
    %1378 = vmatpush1.msra.mxu0 0.0
    %1379 = vmatprep.subr.mxu0 0.0
    %1380 = vmatpush1.msra.mxu0 0.0
    %1381 = vmatprep.subr.mxu0 0.0
    %1382 = vmatpush1.msra.mxu0 0.0
    %1383 = vmatprep.subr.mxu0 0.0
    %1384 = vmatpush1.msra.mxu0 0.0
    %1385 = vmatprep.subr.mxu0 0.0
    %1386 = vmatpush1.msra.mxu0 0.0
    %1387 = vmatprep.subr.mxu0 0.0
    %1388 = vmatpush1.msra.mxu0 0.0
    %1389 = vmatprep.subr.mxu0 0.0
    %1390 = vmatpush1.msra.mxu0 0.0
    %1391 = vmatprep.subr.mxu0 0.0
    %1392 = vmatpush1.msra.mxu0 0.0
    %1393 = vmatprep.subr.mxu0 0.0
    %1394 = vmatpush1.msra.mxu0 0.0
    %1395 = vmatprep.subr.mxu0 0.0
    %1396 = vmatpush1.msra.mxu0 0.0
    %1397 = vmatprep.subr.mxu0 0.0
    %1398 = vmatpush1.msra.mxu0 0.0
    %1399 = vmatprep.subr.mxu0 0.0
    %1400 = vmatpush1.msra.mxu0 0.0
    %1401 = vmatprep.subr.mxu0 0.0
    %1402 = vmatpush1.msra.mxu0 0.0
    %1403 = vmatprep.subr.mxu0 0.0
    %1404 = vmatpush1.msra.mxu0 0.0
    %1405 = vmatprep.subr.mxu0 0.0
    %1406 = vmatpush1.msra.mxu0 0.0
    %1407 = vmatprep.subr.mxu0 0.0
    %1408 = vmatpush1.msra.mxu0 0.0
    %1409 = vmatprep.subr.mxu0 0.0
    %1410 = vmatpush1.msra.mxu0 0.0
    %1411 = vmatprep.subr.mxu0 0.0
    %1412 = vmatpush1.msra.mxu0 0.0
    %1413 = vmatprep.subr.mxu0 0.0
    %1414 = vmatpush1.msra.mxu0 0.0
    %1415 = vmatprep.subr.mxu0 0.0
    %1416 = vmatpush1.msra.mxu0 0.0
    %1417 = vmatprep.subr.mxu0 0.0
    %1418 = vmatpush1.msra.mxu0 0.0
    %1419 = vmatprep.subr.mxu0 0.0
    %1420 = vmatpush1.msra.mxu0 0.0
    %1421 = vmatprep.subr.mxu0 0.0
    %1422 = vmatpush1.msra.mxu0 0.0
    %1423 = vmatprep.subr.mxu0 0.0
    %1424 = vmatpush1.msra.mxu0 0.0
    %1425 = vmatprep.subr.mxu0 0.0
    %1426 = vmatpush1.msra.mxu0 0.0
    %1427 = vmatprep.subr.mxu0 0.0
    %1428 = vmatpush1.msra.mxu0 0.0
    %1429 = vmatprep.subr.mxu0 0.0
    %1430 = vmatpush1.msra.mxu0 0.0
    %1431 = vmatprep.mubr.f32.mxu0 0.0
    %1432 = vmatmul.mubr.f32.gmra.mrb[0].mxu0 %v1365
    %v1433 = vpop.f32.mrb[0].mxu0
    %v1434 = vadd.f32 0.0, %v1433
    %v1435 = vpop.f32.mrb[0].mxu0
    %1436 = vdwg.mxu0
    %v1437 = vadd.f32 %v542, %v1434
    %v1438 = vtanh.pop %v1437
    %v1439 = vmul.f32 %v1438, 0.5
    %v1440 = vadd.f32 %v1439, 0.5
    %v1442 = vrot.slane %v1354, 6
    %v1444 = vmul.f32 %v1440, %v1442
    %1446 = vrot.lane.b32.xlu0 %v1438, 64
    %v1447 = vpop.permute.xlu0 %1446
    %v1449 = vmul.f32 %v1440, %v1447
    %1451 = vrot.lane.b32.xlu0 %v1449, 32
    %v1452 = vpop.permute.xlu0 %1451
    %v1454 = vadd.f32 %v1444, %v1452
    %v1455 = vtanh.pop %v1454
    %1457 = vrot.lane.b32.xlu0 %v1455, 64
    %v1458 = vpop.permute.xlu0 %1457
    %v1460 = vmul.f32 %v1440, %v1458
    %1462 = vrot.lane.b32.xlu0 %v1460, 32
    %v1463 = vpop.permute.xlu0 %1462
    %v1464 = vsel %vm550, %v1463, 0
    %1466 = vmatprep.subr.mxu0 0.0
    %1467 = vmatpush1.msra.mxu0 %v174
    %1468 = vmatprep.subr.mxu0 0.0
    %1469 = vmatpush1.msra.mxu0 %v175
    %1470 = vmatprep.subr.mxu0 0.0
    %1471 = vmatpush1.msra.mxu0 %v176
    %1472 = vmatprep.subr.mxu0 0.0
    %1473 = vmatpush1.msra.mxu0 %v177
    %1474 = vmatprep.subr.mxu0 0.0
    %1475 = vmatpush1.msra.mxu0 0.0
    %1476 = vmatprep.subr.mxu0 0.0
    %1477 = vmatpush1.msra.mxu0 0.0
    %1478 = vmatprep.subr.mxu0 0.0
    %1479 = vmatpush1.msra.mxu0 0.0
    %1480 = vmatprep.subr.mxu0 0.0
    %1481 = vmatpush1.msra.mxu0 0.0
    %1482 = vmatprep.subr.mxu0 0.0
    %1483 = vmatpush1.msra.mxu0 0.0
    %1484 = vmatprep.subr.mxu0 0.0
    %1485 = vmatpush1.msra.mxu0 0.0
    %1486 = vmatprep.subr.mxu0 0.0
    %1487 = vmatpush1.msra.mxu0 0.0
    %1488 = vmatprep.subr.mxu0 0.0
    %1489 = vmatpush1.msra.mxu0 0.0
    %1490 = vmatprep.subr.mxu0 0.0
    %1491 = vmatpush1.msra.mxu0 0.0
    %1492 = vmatprep.subr.mxu0 0.0
    %1493 = vmatpush1.msra.mxu0 0.0
    %1494 = vmatprep.subr.mxu0 0.0
    %1495 = vmatpush1.msra.mxu0 0.0
    %1496 = vmatprep.subr.mxu0 0.0
    %1497 = vmatpush1.msra.mxu0 0.0
    %1498 = vmatprep.subr.mxu0 0.0
    %1499 = vmatpush1.msra.mxu0 0.0
    %1500 = vmatprep.subr.mxu0 0.0
    %1501 = vmatpush1.msra.mxu0 0.0
    %1502 = vmatprep.subr.mxu0 0.0
    %1503 = vmatpush1.msra.mxu0 0.0
    %1504 = vmatprep.subr.mxu0 0.0
    %1505 = vmatpush1.msra.mxu0 0.0
    %1506 = vmatprep.subr.mxu0 0.0
    %1507 = vmatpush1.msra.mxu0 0.0
    %1508 = vmatprep.subr.mxu0 0.0
    %1509 = vmatpush1.msra.mxu0 0.0
    %1510 = vmatprep.subr.mxu0 0.0
    %1511 = vmatpush1.msra.mxu0 0.0
    %1512 = vmatprep.subr.mxu0 0.0
    %1513 = vmatpush1.msra.mxu0 0.0
    %1514 = vmatprep.subr.mxu0 0.0
    %1515 = vmatpush1.msra.mxu0 0.0
    %1516 = vmatprep.subr.mxu0 0.0
    %1517 = vmatpush1.msra.mxu0 0.0
    %1518 = vmatprep.subr.mxu0 0.0
    %1519 = vmatpush1.msra.mxu0 0.0
    %1520 = vmatprep.subr.mxu0 0.0
    %1521 = vmatpush1.msra.mxu0 0.0
    %1522 = vmatprep.subr.mxu0 0.0
    %1523 = vmatpush1.msra.mxu0 0.0
    %1524 = vmatprep.subr.mxu0 0.0
    %1525 = vmatpush1.msra.mxu0 0.0
    %1526 = vmatprep.subr.mxu0 0.0
    %1527 = vmatpush1.msra.mxu0 0.0
    %1528 = vmatprep.subr.mxu0 0.0
    %1529 = vmatpush1.msra.mxu0 0.0
    %1530 = vmatprep.mubr.f32.mxu0 0.0
    %1531 = vmatmul.mubr.f32.gmra.mrb[0].mxu0 %v1464
    %v1532 = vpop.f32.mrb[0].mxu0
    %v1533 = vadd.f32 %v190, %v1532
    %v1534 = vpop.f32.mrb[0].mxu0
    %1535 = vdwg.mxu0
    %v1538 = vunpack.c.l.s4 1966171168
    %v1539 = vunpack.c.0.s8 %v1538
    %v1540 = vlaneseq
    %v1541 = vshrl.u32 %v1540, 7
    %v1542 = vsub.s32 %v1539, %v1541
    %v1543 = vrot.slane %v1533, %v1542
    %v1544 = vcombine.high %v1543, %v1543
    %v1546 = vunpack.c.l.s4 1966171168
    %v1547 = vunpack.c.0.s8 %v1546
    %v1548 = vlaneseq
    %v1549 = vshrl.u32 %v1548, 7
    %v1550 = vsub.s32 %v1547, %v1549
    %v1551 = vrot.slane %v1543, %v1550
    %v1553 = vunpack.c.l.s4 1966171168
    %v1554 = vunpack.c.0.s8 %v1553
    %v1555 = vlaneseq
    %v1556 = vshrl.u32 %v1555, 7
    %v1557 = vsub.s32 %v1554, %v1556
    %v1558 = vrot.slane %v1544, %v1557
    %1561 = vst [vmem:[#allocation20 + $0x1] sm:$0x1] %v1551
    %1562 = vst [vmem:[#allocation20 + $0x9] sm:$0x1] %v1558
    %s1563 = sld [smem:[#allocation3 + $0x1]]
    %p1564 = scmp.eq.s32.totalorder %s1563, 0
    // Predicated region
    $region82: #{tpu_custom_call.1} parent=1 // pred_check
      %p1565 = pneg %p1564
    $region83: #{tpu_custom_call.1} parent=1 // pred_check_branch
      %1567 = sbr.rel (%p1565) target = $region85
    $region84: #{tpu_custom_call.1} parent=1 // pred_region
      %vm1568 = vcmask 1041408
      %v1569 = vsel %vm1568, %v1533, -inf
      %1570 = vmax.xlane.f32.xlu0 %v1569
      %v1571 = vpop.xlane.xlu0 %1570
      %vm1572 = vcmp.eq.f32.partialorder %v1533, %v1571
      %v1573 = vsel %vm1572, %v193, 128
      %v1574 = vsel %vm1568, %v1573, 2147483647
      %v1575 = vand.u32 %v1574, 65535
      %v1576 = vshra.s32 %v1574, 16
      %v1577 = vcvt.s32.f32 %v1575
      %v1578 = vcvt.s32.f32 %v1576
      %1579 = vmin.xlane.f32.xlu0 %v1578
      %v1580 = vpop.xlane.xlu0 %1579
      %vm1581 = vcmp.eq.f32.partialorder %v1578, %v1580
      %v1582 = vsel %vm1581, %v1577, inf
      %1583 = vmin.xlane.f32.xlu0 %v1582
      %v1584 = vpop.xlane.xlu0 %1583
      %v1585 = vcvt.f32.s32 %v1584
      %v1586 = vcvt.f32.s32 %v1580
      %v1587 = vshll.u32 %v1586, 16
      %v1588 = vadd.s32 %v1587, %v1585
      %vm1589 = vcmp.eq.s32.totalorder %v1588, %v193
      %v1590 = vsel %vm1589, 1, 0
      %v1591 = vcvt.s32.f32 %v1590
      %1592 = vmatprep.subr.mxu0 0.0
      %1593 = vmatpush1.msra.mxu0 %v158
      %1594 = vmatprep.subr.mxu0 0.0
      %1595 = vmatpush1.msra.mxu0 %v159
      %1596 = vmatprep.subr.mxu0 0.0
      %1597 = vmatpush1.msra.mxu0 %v160
      %1598 = vmatprep.subr.mxu0 0.0
      %1599 = vmatpush1.msra.mxu0 %v161
      %1600 = vmatprep.subr.mxu0 0.0
      %1601 = vmatpush1.msra.mxu0 %v162
      %1602 = vmatprep.subr.mxu0 0.0
      %1603 = vmatpush1.msra.mxu0 %v163
      %1604 = vmatprep.subr.mxu0 0.0
      %1605 = vmatpush1.msra.mxu0 %v164
      %1606 = vmatprep.subr.mxu0 0.0
      %1607 = vmatpush1.msra.mxu0 %v165
      %1608 = vmatprep.subr.mxu0 0.0
      %1609 = vmatpush1.msra.mxu0 %v166
      %1610 = vmatprep.subr.mxu0 0.0
      %1611 = vmatpush1.msra.mxu0 %v167
      %1612 = vmatprep.subr.mxu0 0.0
      %1613 = vmatpush1.msra.mxu0 %v168
      %1614 = vmatprep.subr.mxu0 0.0
      %1615 = vmatpush1.msra.mxu0 %v169
      %1616 = vmatprep.subr.mxu0 0.0
      %1617 = vmatpush1.msra.mxu0 %v170
      %1618 = vmatprep.subr.mxu0 0.0
      %1619 = vmatpush1.msra.mxu0 %v171
      %1620 = vmatprep.subr.mxu0 0.0
      %1621 = vmatpush1.msra.mxu0 %v172
      %1622 = vmatprep.subr.mxu0 0.0
      %1623 = vmatpush1.msra.mxu0 %v173
      %1624 = vmatprep.subr.mxu0 0.0
      %1625 = vmatpush1.msra.mxu0 0.0
      %1626 = vmatprep.subr.mxu0 0.0
      %1627 = vmatpush1.msra.mxu0 0.0
      %1628 = vmatprep.subr.mxu0 0.0
      %1629 = vmatpush1.msra.mxu0 0.0
      %1630 = vmatprep.subr.mxu0 0.0
      %1631 = vmatpush1.msra.mxu0 0.0
      %1632 = vmatprep.subr.mxu0 0.0
      %1633 = vmatpush1.msra.mxu0 0.0
      %1634 = vmatprep.subr.mxu0 0.0
      %1635 = vmatpush1.msra.mxu0 0.0
      %1636 = vmatprep.subr.mxu0 0.0
      %1637 = vmatpush1.msra.mxu0 0.0
      %1638 = vmatprep.subr.mxu0 0.0
      %1639 = vmatpush1.msra.mxu0 0.0
      %1640 = vmatprep.subr.mxu0 0.0
      %1641 = vmatpush1.msra.mxu0 0.0
      %1642 = vmatprep.subr.mxu0 0.0
      %1643 = vmatpush1.msra.mxu0 0.0
      %1644 = vmatprep.subr.mxu0 0.0
      %1645 = vmatpush1.msra.mxu0 0.0
      %1646 = vmatprep.subr.mxu0 0.0
      %1647 = vmatpush1.msra.mxu0 0.0
      %1648 = vmatprep.subr.mxu0 0.0
      %1649 = vmatpush1.msra.mxu0 0.0
      %1650 = vmatprep.subr.mxu0 0.0
      %1651 = vmatpush1.msra.mxu0 0.0
      %1652 = vmatprep.subr.mxu0 0.0
      %1653 = vmatpush1.msra.mxu0 0.0
      %1654 = vmatprep.subr.mxu0 0.0
      %1655 = vmatpush1.msra.mxu0 0.0
      %1656 = vmatprep.mubr.f32.mxu0 0.0
      %1657 = vmatmul.mubr.f32.gmra.mrb[0].mxu0 %v1591
      %v1658 = vpop.f32.mrb[0].mxu0
      %v1659 = vadd.f32 %v183, %v1658
      %v1660 = vpop.f32.mrb[0].mxu0
      %1661 = vdwg.mxu0
      %1662 = vst [vmem:[#allocation2] sm:$0x3] %v1659
    $region85: #{tpu_custom_call.1} parent=1 // pred_fallthru
      _
    %s1663 = sld [smem:[#allocation3 + $0x1]]
    %p1664 = scmp.ne.s32.totalorder %s1663, 0
    // Predicated region
    $region86: #{tpu_custom_call.1} parent=1 // pred_check
      %p1665 = pneg %p1664
    $region87: #{tpu_custom_call.1} parent=1 // pred_check_branch
      %1667 = sbr.rel (%p1665) target = $region89
    $region88: #{tpu_custom_call.1} parent=1 // pred_region
      %1668 = vst [vmem:[#allocation2 - $0x2] sm:$0xc] %v542
    $region89: #{tpu_custom_call.1} parent=1 // pred_fallthru
      _
    %v1669 = vld [vmem:[#allocation2] sm:$0x3]
    %1670 = vmatprep.subr.mxu0 0.0
    %1671 = vmatpush1.msra.mxu0 %v154
    %1672 = vmatprep.subr.mxu0 0.0
    %1673 = vmatpush1.msra.mxu0 %v155
    %1674 = vmatprep.subr.mxu0 0.0
    %1675 = vmatpush1.msra.mxu0 %v156
    %1676 = vmatprep.subr.mxu0 0.0
    %1677 = vmatpush1.msra.mxu0 %v157
    %1678 = vmatprep.subr.mxu0 0.0
    %1679 = vmatpush1.msra.mxu0 0.0
    %1680 = vmatprep.subr.mxu0 0.0
    %1681 = vmatpush1.msra.mxu0 0.0
    %1682 = vmatprep.subr.mxu0 0.0
    %1683 = vmatpush1.msra.mxu0 0.0
    %1684 = vmatprep.subr.mxu0 0.0
    %1685 = vmatpush1.msra.mxu0 0.0
    %1686 = vmatprep.subr.mxu0 0.0
    %1687 = vmatpush1.msra.mxu0 0.0
    %1688 = vmatprep.subr.mxu0 0.0
    %1689 = vmatpush1.msra.mxu0 0.0
    %1690 = vmatprep.subr.mxu0 0.0
    %1691 = vmatpush1.msra.mxu0 0.0
    %1692 = vmatprep.subr.mxu0 0.0
    %1693 = vmatpush1.msra.mxu0 0.0
    %1694 = vmatprep.subr.mxu0 0.0
    %1695 = vmatpush1.msra.mxu0 0.0
    %1696 = vmatprep.subr.mxu0 0.0
    %1697 = vmatpush1.msra.mxu0 0.0
    %1698 = vmatprep.subr.mxu0 0.0
    %1699 = vmatpush1.msra.mxu0 0.0
    %1700 = vmatprep.subr.mxu0 0.0
    %1701 = vmatpush1.msra.mxu0 0.0
    %1702 = vmatprep.subr.mxu0 0.0
    %1703 = vmatpush1.msra.mxu0 0.0
    %1704 = vmatprep.subr.mxu0 0.0
    %1705 = vmatpush1.msra.mxu0 0.0
    %1706 = vmatprep.subr.mxu0 0.0
    %1707 = vmatpush1.msra.mxu0 0.0
    %1708 = vmatprep.subr.mxu0 0.0
    %1709 = vmatpush1.msra.mxu0 0.0
    %1710 = vmatprep.subr.mxu0 0.0
    %1711 = vmatpush1.msra.mxu0 0.0
    %1712 = vmatprep.subr.mxu0 0.0
    %1713 = vmatpush1.msra.mxu0 0.0
    %1714 = vmatprep.subr.mxu0 0.0
    %1715 = vmatpush1.msra.mxu0 0.0
    %1716 = vmatprep.subr.mxu0 0.0
    %1717 = vmatpush1.msra.mxu0 0.0
    %1718 = vmatprep.subr.mxu0 0.0
    %1719 = vmatpush1.msra.mxu0 0.0
    %1720 = vmatprep.subr.mxu0 0.0
    %1721 = vmatpush1.msra.mxu0 0.0
    %1722 = vmatprep.subr.mxu0 0.0
    %1723 = vmatpush1.msra.mxu0 0.0
    %1724 = vmatprep.subr.mxu0 0.0
    %1725 = vmatpush1.msra.mxu0 0.0
    %1726 = vmatprep.subr.mxu0 0.0
    %1727 = vmatpush1.msra.mxu0 0.0
    %1728 = vmatprep.subr.mxu0 0.0
    %1729 = vmatpush1.msra.mxu0 0.0
    %1730 = vmatprep.subr.mxu0 0.0
    %1731 = vmatpush1.msra.mxu0 0.0
    %1732 = vmatprep.subr.mxu0 0.0
    %1733 = vmatpush1.msra.mxu0 0.0
    %1734 = vmatprep.mubr.f32.mxu0 0.0
    %1735 = vmatmul.mubr.f32.gmra.mrb[0].mxu0 %v1464
    %v1736 = vpop.f32.mrb[0].mxu0
    %v1737 = vadd.f32 0.0, %v1736
    %v1738 = vpop.f32.mrb[0].mxu0
    %1739 = vdwg.mxu0
    %v1740 = vadd.f32 %v1669, %v1737
    %v1741 = vtanh.pop %v1740
    %v1742 = vmul.f32 %v1741, 0.5
    %v1743 = vadd.f32 %v1742, 0.5
    %v1744 = vmul.f32 %v1743, %v1454
    %1746 = vrot.lane.b32.xlu0 %v1741, 64
    %v1747 = vpop.permute.xlu0 %1746
    %v1749 = vmul.f32 %v1743, %v1747
    %1751 = vrot.lane.b32.xlu0 %v1749, 32
    %v1752 = vpop.permute.xlu0 %1751
    %v1754 = vadd.f32 %v1744, %v1752
    %v1755 = vtanh.pop %v1754
    %1757 = vrot.lane.b32.xlu0 %v1755, 64
    %v1758 = vpop.permute.xlu0 %1757
    %v1760 = vmul.f32 %v1743, %v1758
    %1762 = vrot.lane.b32.xlu0 %v1760, 32
    %v1763 = vpop.permute.xlu0 %1762
    %v1764 = vsel %vm550, %v1763, 0
    %1766 = vmatprep.subr.mxu0 0.0
    %1767 = vmatpush1.msra.mxu0 %v174
    %1768 = vmatprep.subr.mxu0 0.0
    %1769 = vmatpush1.msra.mxu0 %v175
    %1770 = vmatprep.subr.mxu0 0.0
    %1771 = vmatpush1.msra.mxu0 %v176
    %1772 = vmatprep.subr.mxu0 0.0
    %1773 = vmatpush1.msra.mxu0 %v177
    %1774 = vmatprep.subr.mxu0 0.0
    %1775 = vmatpush1.msra.mxu0 0.0
    %1776 = vmatprep.subr.mxu0 0.0
    %1777 = vmatpush1.msra.mxu0 0.0
    %1778 = vmatprep.subr.mxu0 0.0
    %1779 = vmatpush1.msra.mxu0 0.0
    %1780 = vmatprep.subr.mxu0 0.0
    %1781 = vmatpush1.msra.mxu0 0.0
    %1782 = vmatprep.subr.mxu0 0.0
    %1783 = vmatpush1.msra.mxu0 0.0
    %1784 = vmatprep.subr.mxu0 0.0
    %1785 = vmatpush1.msra.mxu0 0.0
    %1786 = vmatprep.subr.mxu0 0.0
    %1787 = vmatpush1.msra.mxu0 0.0
    %1788 = vmatprep.subr.mxu0 0.0
    %1789 = vmatpush1.msra.mxu0 0.0
    %1790 = vmatprep.subr.mxu0 0.0
    %1791 = vmatpush1.msra.mxu0 0.0
    %1792 = vmatprep.subr.mxu0 0.0
    %1793 = vmatpush1.msra.mxu0 0.0
    %1794 = vmatprep.subr.mxu0 0.0
    %1795 = vmatpush1.msra.mxu0 0.0
    %1796 = vmatprep.subr.mxu0 0.0
    %1797 = vmatpush1.msra.mxu0 0.0
    %1798 = vmatprep.subr.mxu0 0.0
    %1799 = vmatpush1.msra.mxu0 0.0
    %1800 = vmatprep.subr.mxu0 0.0
    %1801 = vmatpush1.msra.mxu0 0.0
    %1802 = vmatprep.subr.mxu0 0.0
    %1803 = vmatpush1.msra.mxu0 0.0
    %1804 = vmatprep.subr.mxu0 0.0
    %1805 = vmatpush1.msra.mxu0 0.0
    %1806 = vmatprep.subr.mxu0 0.0
    %1807 = vmatpush1.msra.mxu0 0.0
    %1808 = vmatprep.subr.mxu0 0.0
    %1809 = vmatpush1.msra.mxu0 0.0
    %1810 = vmatprep.subr.mxu0 0.0
    %1811 = vmatpush1.msra.mxu0 0.0
    %1812 = vmatprep.subr.mxu0 0.0
    %1813 = vmatpush1.msra.mxu0 0.0
    %1814 = vmatprep.subr.mxu0 0.0
    %1815 = vmatpush1.msra.mxu0 0.0
    %1816 = vmatprep.subr.mxu0 0.0
    %1817 = vmatpush1.msra.mxu0 0.0
    %1818 = vmatprep.subr.mxu0 0.0
    %1819 = vmatpush1.msra.mxu0 0.0
    %1820 = vmatprep.subr.mxu0 0.0
    %1821 = vmatpush1.msra.mxu0 0.0
    %1822 = vmatprep.subr.mxu0 0.0
    %1823 = vmatpush1.msra.mxu0 0.0
    %1824 = vmatprep.subr.mxu0 0.0
    %1825 = vmatpush1.msra.mxu0 0.0
    %1826 = vmatprep.subr.mxu0 0.0
    %1827 = vmatpush1.msra.mxu0 0.0
    %1828 = vmatprep.subr.mxu0 0.0
    %1829 = vmatpush1.msra.mxu0 0.0
    %1830 = vmatprep.mubr.f32.mxu0 0.0
    %1831 = vmatmul.mubr.f32.gmra.mrb[0].mxu0 %v1764
    %v1832 = vpop.f32.mrb[0].mxu0
    %v1833 = vadd.f32 %v190, %v1832
    %v1834 = vpop.f32.mrb[0].mxu0
    %1835 = vdwg.mxu0
    %v1838 = vunpack.c.l.s4 1966171168
    %v1839 = vunpack.c.0.s8 %v1838
    %v1840 = vlaneseq
    %v1841 = vshrl.u32 %v1840, 7
    %v1842 = vsub.s32 %v1839, %v1841
    %v1843 = vrot.slane %v1833, %v1842
    %v1844 = vcombine.high %v1843, %v1843
    %v1846 = vunpack.c.l.s4 1966171168
    %v1847 = vunpack.c.0.s8 %v1846
    %v1848 = vlaneseq
    %v1849 = vshrl.u32 %v1848, 7
    %v1850 = vsub.s32 %v1847, %v1849
    %v1851 = vrot.slane %v1843, %v1850
    %v1853 = vunpack.c.l.s4 1966171168
    %v1854 = vunpack.c.0.s8 %v1853
    %v1855 = vlaneseq
    %v1856 = vshrl.u32 %v1855, 7
    %v1857 = vsub.s32 %v1854, %v1856
    %v1858 = vrot.slane %v1844, %v1857
    %1861 = vst [vmem:[#allocation20 + $0x2] sm:$0x1] %v1851
    %1862 = vst [vmem:[#allocation20 + $0xa] sm:$0x1] %v1858
    %s1863 = sld [smem:[#allocation3 + $0x2]]
    %p1864 = scmp.eq.s32.totalorder %s1863, 0
    // Predicated region
    $region90: #{tpu_custom_call.1} parent=1 // pred_check
      %p1865 = pneg %p1864
    $region91: #{tpu_custom_call.1} parent=1 // pred_check_branch
      %1867 = sbr.rel (%p1865) target = $region93
    $region92: #{tpu_custom_call.1} parent=1 // pred_region
      %vm1868 = vcmask 1041408
      %v1869 = vsel %vm1868, %v1833, -inf
      %1870 = vmax.xlane.f32.xlu0 %v1869
      %v1871 = vpop.xlane.xlu0 %1870
      %vm1872 = vcmp.eq.f32.partialorder %v1833, %v1871
      %v1873 = vsel %vm1872, %v193, 128
      %v1874 = vsel %vm1868, %v1873, 2147483647
      %v1875 = vand.u32 %v1874, 65535
      %v1876 = vshra.s32 %v1874, 16
      %v1877 = vcvt.s32.f32 %v1875
      %v1878 = vcvt.s32.f32 %v1876
      %1879 = vmin.xlane.f32.xlu0 %v1878
      %v1880 = vpop.xlane.xlu0 %1879
      %vm1881 = vcmp.eq.f32.partialorder %v1878, %v1880
      %v1882 = vsel %vm1881, %v1877, inf
      %1883 = vmin.xlane.f32.xlu0 %v1882
      %v1884 = vpop.xlane.xlu0 %1883
      %v1885 = vcvt.f32.s32 %v1884
      %v1886 = vcvt.f32.s32 %v1880
      %v1887 = vshll.u32 %v1886, 16
      %v1888 = vadd.s32 %v1887, %v1885
      %vm1889 = vcmp.eq.s32.totalorder %v1888, %v193
      %v1890 = vsel %vm1889, 1, 0
      %v1891 = vcvt.s32.f32 %v1890
      %1892 = vmatprep.subr.mxu0 0.0
      %1893 = vmatpush1.msra.mxu0 %v158
      %1894 = vmatprep.subr.mxu0 0.0
      %1895 = vmatpush1.msra.mxu0 %v159
      %1896 = vmatprep.subr.mxu0 0.0
      %1897 = vmatpush1.msra.mxu0 %v160
      %1898 = vmatprep.subr.mxu0 0.0
      %1899 = vmatpush1.msra.mxu0 %v161
      %1900 = vmatprep.subr.mxu0 0.0
      %1901 = vmatpush1.msra.mxu0 %v162
      %1902 = vmatprep.subr.mxu0 0.0
      %1903 = vmatpush1.msra.mxu0 %v163
      %1904 = vmatprep.subr.mxu0 0.0
      %1905 = vmatpush1.msra.mxu0 %v164
      %1906 = vmatprep.subr.mxu0 0.0
      %1907 = vmatpush1.msra.mxu0 %v165
      %1908 = vmatprep.subr.mxu0 0.0
      %1909 = vmatpush1.msra.mxu0 %v166
      %1910 = vmatprep.subr.mxu0 0.0
      %1911 = vmatpush1.msra.mxu0 %v167
      %1912 = vmatprep.subr.mxu0 0.0
      %1913 = vmatpush1.msra.mxu0 %v168
      %1914 = vmatprep.subr.mxu0 0.0
      %1915 = vmatpush1.msra.mxu0 %v169
      %1916 = vmatprep.subr.mxu0 0.0
      %1917 = vmatpush1.msra.mxu0 %v170
      %1918 = vmatprep.subr.mxu0 0.0
      %1919 = vmatpush1.msra.mxu0 %v171
      %1920 = vmatprep.subr.mxu0 0.0
      %1921 = vmatpush1.msra.mxu0 %v172
      %1922 = vmatprep.subr.mxu0 0.0
      %1923 = vmatpush1.msra.mxu0 %v173
      %1924 = vmatprep.subr.mxu0 0.0
      %1925 = vmatpush1.msra.mxu0 0.0
      %1926 = vmatprep.subr.mxu0 0.0
      %1927 = vmatpush1.msra.mxu0 0.0
      %1928 = vmatprep.subr.mxu0 0.0
      %1929 = vmatpush1.msra.mxu0 0.0
      %1930 = vmatprep.subr.mxu0 0.0
      %1931 = vmatpush1.msra.mxu0 0.0
      %1932 = vmatprep.subr.mxu0 0.0
      %1933 = vmatpush1.msra.mxu0 0.0
      %1934 = vmatprep.subr.mxu0 0.0
      %1935 = vmatpush1.msra.mxu0 0.0
      %1936 = vmatprep.subr.mxu0 0.0
      %1937 = vmatpush1.msra.mxu0 0.0
      %1938 = vmatprep.subr.mxu0 0.0
      %1939 = vmatpush1.msra.mxu0 0.0
      %1940 = vmatprep.subr.mxu0 0.0
      %1941 = vmatpush1.msra.mxu0 0.0
      %1942 = vmatprep.subr.mxu0 0.0
      %1943 = vmatpush1.msra.mxu0 0.0
      %1944 = vmatprep.subr.mxu0 0.0
      %1945 = vmatpush1.msra.mxu0 0.0
      %1946 = vmatprep.subr.mxu0 0.0
      %1947 = vmatpush1.msra.mxu0 0.0
      %1948 = vmatprep.subr.mxu0 0.0
      %1949 = vmatpush1.msra.mxu0 0.0
      %1950 = vmatprep.subr.mxu0 0.0
      %1951 = vmatpush1.msra.mxu0 0.0
      %1952 = vmatprep.subr.mxu0 0.0
      %1953 = vmatpush1.msra.mxu0 0.0
      %1954 = vmatprep.subr.mxu0 0.0
      %1955 = vmatpush1.msra.mxu0 0.0
      %1956 = vmatprep.mubr.f32.mxu0 0.0
      %1957 = vmatmul.mubr.f32.gmra.mrb[0].mxu0 %v1891
      %v1958 = vpop.f32.mrb[0].mxu0
      %v1959 = vadd.f32 %v183, %v1958
      %v1960 = vpop.f32.mrb[0].mxu0
      %1961 = vdwg.mxu0
      %1962 = vst [vmem:[#allocation2] sm:$0x3] %v1959
    $region93: #{tpu_custom_call.1} parent=1 // pred_fallthru
      _
    %s1963 = sld [smem:[#allocation3 + $0x2]]
    %p1964 = scmp.ne.s32.totalorder %s1963, 0
    // Predicated region
    $region94: #{tpu_custom_call.1} parent=1 // pred_check
      %p1965 = pneg %p1964
    $region95: #{tpu_custom_call.1} parent=1 // pred_check_branch
      %1967 = sbr.rel (%p1965) target = $region97
    $region96: #{tpu_custom_call.1} parent=1 // pred_region
      %1968 = vst [vmem:[#allocation2 - $0x4] sm:$0x30] %v542
    $region97: #{tpu_custom_call.1} parent=1 // pred_fallthru
      _
    %v1969 = vld [vmem:[#allocation2] sm:$0x3]
    %1970 = vmatprep.subr.mxu0 0.0
    %1971 = vmatpush1.msra.mxu0 %v154
    %1972 = vmatprep.subr.mxu0 0.0
    %1973 = vmatpush1.msra.mxu0 %v155
    %1974 = vmatprep.subr.mxu0 0.0
    %1975 = vmatpush1.msra.mxu0 %v156
    %1976 = vmatprep.subr.mxu0 0.0
    %1977 = vmatpush1.msra.mxu0 %v157
    %1978 = vmatprep.subr.mxu0 0.0
    %1979 = vmatpush1.msra.mxu0 0.0
    %1980 = vmatprep.subr.mxu0 0.0
    %1981 = vmatpush1.msra.mxu0 0.0
    %1982 = vmatprep.subr.mxu0 0.0
    %1983 = vmatpush1.msra.mxu0 0.0
    %1984 = vmatprep.subr.mxu0 0.0
    %1985 = vmatpush1.msra.mxu0 0.0
    %1986 = vmatprep.subr.mxu0 0.0
    %1987 = vmatpush1.msra.mxu0 0.0
    %1988 = vmatprep.subr.mxu0 0.0
    %1989 = vmatpush1.msra.mxu0 0.0
    %1990 = vmatprep.subr.mxu0 0.0
    %1991 = vmatpush1.msra.mxu0 0.0
    %1992 = vmatprep.subr.mxu0 0.0
    %1993 = vmatpush1.msra.mxu0 0.0
    %1994 = vmatprep.subr.mxu0 0.0
    %1995 = vmatpush1.msra.mxu0 0.0
    %1996 = vmatprep.subr.mxu0 0.0
    %1997 = vmatpush1.msra.mxu0 0.0
    %1998 = vmatprep.subr.mxu0 0.0
    %1999 = vmatpush1.msra.mxu0 0.0
    %2000 = vmatprep.subr.mxu0 0.0
    %2001 = vmatpush1.msra.mxu0 0.0
    %2002 = vmatprep.subr.mxu0 0.0
    %2003 = vmatpush1.msra.mxu0 0.0
    %2004 = vmatprep.subr.mxu0 0.0
    %2005 = vmatpush1.msra.mxu0 0.0
    %2006 = vmatprep.subr.mxu0 0.0
    %2007 = vmatpush1.msra.mxu0 0.0
    %2008 = vmatprep.subr.mxu0 0.0
    %2009 = vmatpush1.msra.mxu0 0.0
    %2010 = vmatprep.subr.mxu0 0.0
    %2011 = vmatpush1.msra.mxu0 0.0
    %2012 = vmatprep.subr.mxu0 0.0
    %2013 = vmatpush1.msra.mxu0 0.0
    %2014 = vmatprep.subr.mxu0 0.0
    %2015 = vmatpush1.msra.mxu0 0.0
    %2016 = vmatprep.subr.mxu0 0.0
    %2017 = vmatpush1.msra.mxu0 0.0
    %2018 = vmatprep.subr.mxu0 0.0
    %2019 = vmatpush1.msra.mxu0 0.0
    %2020 = vmatprep.subr.mxu0 0.0
    %2021 = vmatpush1.msra.mxu0 0.0
    %2022 = vmatprep.subr.mxu0 0.0
    %2023 = vmatpush1.msra.mxu0 0.0
    %2024 = vmatprep.subr.mxu0 0.0
    %2025 = vmatpush1.msra.mxu0 0.0
    %2026 = vmatprep.subr.mxu0 0.0
    %2027 = vmatpush1.msra.mxu0 0.0
    %2028 = vmatprep.subr.mxu0 0.0
    %2029 = vmatpush1.msra.mxu0 0.0
    %2030 = vmatprep.subr.mxu0 0.0
    %2031 = vmatpush1.msra.mxu0 0.0
    %2032 = vmatprep.subr.mxu0 0.0
    %2033 = vmatpush1.msra.mxu0 0.0
    %2034 = vmatprep.mubr.f32.mxu0 0.0
    %2035 = vmatmul.mubr.f32.gmra.mrb[0].mxu0 %v1764
    %v2036 = vpop.f32.mrb[0].mxu0
    %v2037 = vadd.f32 0.0, %v2036
    %v2038 = vpop.f32.mrb[0].mxu0
    %2039 = vdwg.mxu0
    %v2040 = vadd.f32 %v1969, %v2037
    %v2041 = vtanh.pop %v2040
    %v2042 = vmul.f32 %v2041, 0.5
    %v2043 = vadd.f32 %v2042, 0.5
    %v2044 = vmul.f32 %v2043, %v1754
    %2046 = vrot.lane.b32.xlu0 %v2041, 64
    %v2047 = vpop.permute.xlu0 %2046
    %v2049 = vmul.f32 %v2043, %v2047
    %2051 = vrot.lane.b32.xlu0 %v2049, 32
    %v2052 = vpop.permute.xlu0 %2051
    %v2054 = vadd.f32 %v2044, %v2052
    %v2055 = vtanh.pop %v2054
    %2057 = vrot.lane.b32.xlu0 %v2055, 64
    %v2058 = vpop.permute.xlu0 %2057
    %v2060 = vmul.f32 %v2043, %v2058
    %2062 = vrot.lane.b32.xlu0 %v2060, 32
    %v2063 = vpop.permute.xlu0 %2062
    %v2064 = vsel %vm550, %v2063, 0
    %2066 = vmatprep.subr.mxu0 0.0
    %2067 = vmatpush1.msra.mxu0 %v174
    %2068 = vmatprep.subr.mxu0 0.0
    %2069 = vmatpush1.msra.mxu0 %v175
    %2070 = vmatprep.subr.mxu0 0.0
    %2071 = vmatpush1.msra.mxu0 %v176
    %2072 = vmatprep.subr.mxu0 0.0
    %2073 = vmatpush1.msra.mxu0 %v177
    %2074 = vmatprep.subr.mxu0 0.0
    %2075 = vmatpush1.msra.mxu0 0.0
    %2076 = vmatprep.subr.mxu0 0.0
    %2077 = vmatpush1.msra.mxu0 0.0
    %2078 = vmatprep.subr.mxu0 0.0
    %2079 = vmatpush1.msra.mxu0 0.0
    %2080 = vmatprep.subr.mxu0 0.0
    %2081 = vmatpush1.msra.mxu0 0.0
    %2082 = vmatprep.subr.mxu0 0.0
    %2083 = vmatpush1.msra.mxu0 0.0
    %2084 = vmatprep.subr.mxu0 0.0
    %2085 = vmatpush1.msra.mxu0 0.0
    %2086 = vmatprep.subr.mxu0 0.0
    %2087 = vmatpush1.msra.mxu0 0.0
    %2088 = vmatprep.subr.mxu0 0.0
    %2089 = vmatpush1.msra.mxu0 0.0
    %2090 = vmatprep.subr.mxu0 0.0
    %2091 = vmatpush1.msra.mxu0 0.0
    %2092 = vmatprep.subr.mxu0 0.0
    %2093 = vmatpush1.msra.mxu0 0.0
    %2094 = vmatprep.subr.mxu0 0.0
    %2095 = vmatpush1.msra.mxu0 0.0
    %2096 = vmatprep.subr.mxu0 0.0
    %2097 = vmatpush1.msra.mxu0 0.0
    %2098 = vmatprep.subr.mxu0 0.0
    %2099 = vmatpush1.msra.mxu0 0.0
    %2100 = vmatprep.subr.mxu0 0.0
    %2101 = vmatpush1.msra.mxu0 0.0
    %2102 = vmatprep.subr.mxu0 0.0
    %2103 = vmatpush1.msra.mxu0 0.0
    %2104 = vmatprep.subr.mxu0 0.0
    %2105 = vmatpush1.msra.mxu0 0.0
    %2106 = vmatprep.subr.mxu0 0.0
    %2107 = vmatpush1.msra.mxu0 0.0
    %2108 = vmatprep.subr.mxu0 0.0
    %2109 = vmatpush1.msra.mxu0 0.0
    %2110 = vmatprep.subr.mxu0 0.0
    %2111 = vmatpush1.msra.mxu0 0.0
    %2112 = vmatprep.subr.mxu0 0.0
    %2113 = vmatpush1.msra.mxu0 0.0
    %2114 = vmatprep.subr.mxu0 0.0
    %2115 = vmatpush1.msra.mxu0 0.0
    %2116 = vmatprep.subr.mxu0 0.0
    %2117 = vmatpush1.msra.mxu0 0.0
    %2118 = vmatprep.subr.mxu0 0.0
    %2119 = vmatpush1.msra.mxu0 0.0
    %2120 = vmatprep.subr.mxu0 0.0
    %2121 = vmatpush1.msra.mxu0 0.0
    %2122 = vmatprep.subr.mxu0 0.0
    %2123 = vmatpush1.msra.mxu0 0.0
    %2124 = vmatprep.subr.mxu0 0.0
    %2125 = vmatpush1.msra.mxu0 0.0
    %2126 = vmatprep.subr.mxu0 0.0
    %2127 = vmatpush1.msra.mxu0 0.0
    %2128 = vmatprep.subr.mxu0 0.0
    %2129 = vmatpush1.msra.mxu0 0.0
    %2130 = vmatprep.mubr.f32.mxu0 0.0
    %2131 = vmatmul.mubr.f32.gmra.mrb[0].mxu0 %v2064
    %v2132 = vpop.f32.mrb[0].mxu0
    %v2133 = vadd.f32 %v190, %v2132
    %v2134 = vpop.f32.mrb[0].mxu0
    %2135 = vdwg.mxu0
    %v2138 = vunpack.c.l.s4 1966171168
    %v2139 = vunpack.c.0.s8 %v2138
    %v2140 = vlaneseq
    %v2141 = vshrl.u32 %v2140, 7
    %v2142 = vsub.s32 %v2139, %v2141
    %v2143 = vrot.slane %v2133, %v2142
    %v2144 = vcombine.high %v2143, %v2143
    %v2146 = vunpack.c.l.s4 1966171168
    %v2147 = vunpack.c.0.s8 %v2146
    %v2148 = vlaneseq
    %v2149 = vshrl.u32 %v2148, 7
    %v2150 = vsub.s32 %v2147, %v2149
    %v2151 = vrot.slane %v2143, %v2150
    %v2153 = vunpack.c.l.s4 1966171168
    %v2154 = vunpack.c.0.s8 %v2153
    %v2155 = vlaneseq
    %v2156 = vshrl.u32 %v2155, 7
    %v2157 = vsub.s32 %v2154, %v2156
    %v2158 = vrot.slane %v2144, %v2157
    %2161 = vst [vmem:[#allocation20 + $0x3] sm:$0x1] %v2151
    %2162 = vst [vmem:[#allocation20 + $0xb] sm:$0x1] %v2158
    %s2163 = sld [smem:[#allocation3 + $0x3]]
    %p2164 = scmp.eq.s32.totalorder %s2163, 0
    // Predicated region
    $region98: #{tpu_custom_call.1} parent=1 // pred_check
      %p2165 = pneg %p2164
    $region99: #{tpu_custom_call.1} parent=1 // pred_check_branch
      %2167 = sbr.rel (%p2165) target = $region101
    $region100: #{tpu_custom_call.1} parent=1 // pred_region
      %vm2168 = vcmask 1041408
      %v2169 = vsel %vm2168, %v2133, -inf
      %2170 = vmax.xlane.f32.xlu0 %v2169
      %v2171 = vpop.xlane.xlu0 %2170
      %vm2172 = vcmp.eq.f32.partialorder %v2133, %v2171
      %v2173 = vsel %vm2172, %v193, 128
      %v2174 = vsel %vm2168, %v2173, 2147483647
      %v2175 = vand.u32 %v2174, 65535
      %v2176 = vshra.s32 %v2174, 16
      %v2177 = vcvt.s32.f32 %v2175
      %v2178 = vcvt.s32.f32 %v2176
      %2179 = vmin.xlane.f32.xlu0 %v2178
      %v2180 = vpop.xlane.xlu0 %2179
      %vm2181 = vcmp.eq.f32.partialorder %v2178, %v2180
      %v2182 = vsel %vm2181, %v2177, inf
      %2183 = vmin.xlane.f32.xlu0 %v2182
      %v2184 = vpop.xlane.xlu0 %2183
      %v2185 = vcvt.f32.s32 %v2184
      %v2186 = vcvt.f32.s32 %v2180
      %v2187 = vshll.u32 %v2186, 16
      %v2188 = vadd.s32 %v2187, %v2185
      %vm2189 = vcmp.eq.s32.totalorder %v2188, %v193
      %v2190 = vsel %vm2189, 1, 0
      %v2191 = vcvt.s32.f32 %v2190
      %2192 = vmatprep.subr.mxu0 0.0
      %2193 = vmatpush1.msra.mxu0 %v158
      %2194 = vmatprep.subr.mxu0 0.0
      %2195 = vmatpush1.msra.mxu0 %v159
      %2196 = vmatprep.subr.mxu0 0.0
      %2197 = vmatpush1.msra.mxu0 %v160
      %2198 = vmatprep.subr.mxu0 0.0
      %2199 = vmatpush1.msra.mxu0 %v161
      %2200 = vmatprep.subr.mxu0 0.0
      %2201 = vmatpush1.msra.mxu0 %v162
      %2202 = vmatprep.subr.mxu0 0.0
      %2203 = vmatpush1.msra.mxu0 %v163
      %2204 = vmatprep.subr.mxu0 0.0
      %2205 = vmatpush1.msra.mxu0 %v164
      %2206 = vmatprep.subr.mxu0 0.0
      %2207 = vmatpush1.msra.mxu0 %v165
      %2208 = vmatprep.subr.mxu0 0.0
      %2209 = vmatpush1.msra.mxu0 %v166
      %2210 = vmatprep.subr.mxu0 0.0
      %2211 = vmatpush1.msra.mxu0 %v167
      %2212 = vmatprep.subr.mxu0 0.0
      %2213 = vmatpush1.msra.mxu0 %v168
      %2214 = vmatprep.subr.mxu0 0.0
      %2215 = vmatpush1.msra.mxu0 %v169
      %2216 = vmatprep.subr.mxu0 0.0
      %2217 = vmatpush1.msra.mxu0 %v170
      %2218 = vmatprep.subr.mxu0 0.0
      %2219 = vmatpush1.msra.mxu0 %v171
      %2220 = vmatprep.subr.mxu0 0.0
      %2221 = vmatpush1.msra.mxu0 %v172
      %2222 = vmatprep.subr.mxu0 0.0
      %2223 = vmatpush1.msra.mxu0 %v173
      %2224 = vmatprep.subr.mxu0 0.0
      %2225 = vmatpush1.msra.mxu0 0.0
      %2226 = vmatprep.subr.mxu0 0.0
      %2227 = vmatpush1.msra.mxu0 0.0
      %2228 = vmatprep.subr.mxu0 0.0
      %2229 = vmatpush1.msra.mxu0 0.0
      %2230 = vmatprep.subr.mxu0 0.0
      %2231 = vmatpush1.msra.mxu0 0.0
      %2232 = vmatprep.subr.mxu0 0.0
      %2233 = vmatpush1.msra.mxu0 0.0
      %2234 = vmatprep.subr.mxu0 0.0
      %2235 = vmatpush1.msra.mxu0 0.0
      %2236 = vmatprep.subr.mxu0 0.0
      %2237 = vmatpush1.msra.mxu0 0.0
      %2238 = vmatprep.subr.mxu0 0.0
      %2239 = vmatpush1.msra.mxu0 0.0
      %2240 = vmatprep.subr.mxu0 0.0
      %2241 = vmatpush1.msra.mxu0 0.0
      %2242 = vmatprep.subr.mxu0 0.0
      %2243 = vmatpush1.msra.mxu0 0.0
      %2244 = vmatprep.subr.mxu0 0.0
      %2245 = vmatpush1.msra.mxu0 0.0
      %2246 = vmatprep.subr.mxu0 0.0
      %2247 = vmatpush1.msra.mxu0 0.0
      %2248 = vmatprep.subr.mxu0 0.0
      %2249 = vmatpush1.msra.mxu0 0.0
      %2250 = vmatprep.subr.mxu0 0.0
      %2251 = vmatpush1.msra.mxu0 0.0
      %2252 = vmatprep.subr.mxu0 0.0
      %2253 = vmatpush1.msra.mxu0 0.0
      %2254 = vmatprep.subr.mxu0 0.0
      %2255 = vmatpush1.msra.mxu0 0.0
      %2256 = vmatprep.mubr.f32.mxu0 0.0
      %2257 = vmatmul.mubr.f32.gmra.mrb[0].mxu0 %v2191
      %v2258 = vpop.f32.mrb[0].mxu0
      %v2259 = vadd.f32 %v183, %v2258
      %v2260 = vpop.f32.mrb[0].mxu0
      %2261 = vdwg.mxu0
      %2262 = vst [vmem:[#allocation2] sm:$0x3] %v2259
    $region101: #{tpu_custom_call.1} parent=1 // pred_fallthru
      _
    %s2263 = sld [smem:[#allocation3 + $0x3]]
    %p2264 = scmp.ne.s32.totalorder %s2263, 0
    // Predicated region
    $region102: #{tpu_custom_call.1} parent=1 // pred_check
      %p2265 = pneg %p2264
    $region103: #{tpu_custom_call.1} parent=1 // pred_check_branch
      %2267 = sbr.rel (%p2265) target = $region105
    $region104: #{tpu_custom_call.1} parent=1 // pred_region
      %2268 = vst [vmem:[#allocation2 - $0x6] sm:$0xc0] %v542
    $region105: #{tpu_custom_call.1} parent=1 // pred_fallthru
      _
    %v2269 = vld [vmem:[#allocation2] sm:$0x3]
    %2270 = vmatprep.subr.mxu0 0.0
    %2271 = vmatpush1.msra.mxu0 %v154
    %2272 = vmatprep.subr.mxu0 0.0
    %2273 = vmatpush1.msra.mxu0 %v155
    %2274 = vmatprep.subr.mxu0 0.0
    %2275 = vmatpush1.msra.mxu0 %v156
    %2276 = vmatprep.subr.mxu0 0.0
    %2277 = vmatpush1.msra.mxu0 %v157
    %2278 = vmatprep.subr.mxu0 0.0
    %2279 = vmatpush1.msra.mxu0 0.0
    %2280 = vmatprep.subr.mxu0 0.0
    %2281 = vmatpush1.msra.mxu0 0.0
    %2282 = vmatprep.subr.mxu0 0.0
    %2283 = vmatpush1.msra.mxu0 0.0
    %2284 = vmatprep.subr.mxu0 0.0
    %2285 = vmatpush1.msra.mxu0 0.0
    %2286 = vmatprep.subr.mxu0 0.0
    %2287 = vmatpush1.msra.mxu0 0.0
    %2288 = vmatprep.subr.mxu0 0.0
    %2289 = vmatpush1.msra.mxu0 0.0
    %2290 = vmatprep.subr.mxu0 0.0
    %2291 = vmatpush1.msra.mxu0 0.0
    %2292 = vmatprep.subr.mxu0 0.0
    %2293 = vmatpush1.msra.mxu0 0.0
    %2294 = vmatprep.subr.mxu0 0.0
    %2295 = vmatpush1.msra.mxu0 0.0
    %2296 = vmatprep.subr.mxu0 0.0
    %2297 = vmatpush1.msra.mxu0 0.0
    %2298 = vmatprep.subr.mxu0 0.0
    %2299 = vmatpush1.msra.mxu0 0.0
    %2300 = vmatprep.subr.mxu0 0.0
    %2301 = vmatpush1.msra.mxu0 0.0
    %2302 = vmatprep.subr.mxu0 0.0
    %2303 = vmatpush1.msra.mxu0 0.0
    %2304 = vmatprep.subr.mxu0 0.0
    %2305 = vmatpush1.msra.mxu0 0.0
    %2306 = vmatprep.subr.mxu0 0.0
    %2307 = vmatpush1.msra.mxu0 0.0
    %2308 = vmatprep.subr.mxu0 0.0
    %2309 = vmatpush1.msra.mxu0 0.0
    %2310 = vmatprep.subr.mxu0 0.0
    %2311 = vmatpush1.msra.mxu0 0.0
    %2312 = vmatprep.subr.mxu0 0.0
    %2313 = vmatpush1.msra.mxu0 0.0
    %2314 = vmatprep.subr.mxu0 0.0
    %2315 = vmatpush1.msra.mxu0 0.0
    %2316 = vmatprep.subr.mxu0 0.0
    %2317 = vmatpush1.msra.mxu0 0.0
    %2318 = vmatprep.subr.mxu0 0.0
    %2319 = vmatpush1.msra.mxu0 0.0
    %2320 = vmatprep.subr.mxu0 0.0
    %2321 = vmatpush1.msra.mxu0 0.0
    %2322 = vmatprep.subr.mxu0 0.0
    %2323 = vmatpush1.msra.mxu0 0.0
    %2324 = vmatprep.subr.mxu0 0.0
    %2325 = vmatpush1.msra.mxu0 0.0
    %2326 = vmatprep.subr.mxu0 0.0
    %2327 = vmatpush1.msra.mxu0 0.0
    %2328 = vmatprep.subr.mxu0 0.0
    %2329 = vmatpush1.msra.mxu0 0.0
    %2330 = vmatprep.subr.mxu0 0.0
    %2331 = vmatpush1.msra.mxu0 0.0
    %2332 = vmatprep.subr.mxu0 0.0
    %2333 = vmatpush1.msra.mxu0 0.0
    %2334 = vmatprep.mubr.f32.mxu0 0.0
    %2335 = vmatmul.mubr.f32.gmra.mrb[0].mxu0 %v2064
    %v2336 = vpop.f32.mrb[0].mxu0
    %v2337 = vadd.f32 0.0, %v2336
    %v2338 = vpop.f32.mrb[0].mxu0
    %2339 = vdwg.mxu0
    %v2340 = vadd.f32 %v2269, %v2337
    %v2341 = vtanh.pop %v2340
    %v2342 = vmul.f32 %v2341, 0.5
    %v2343 = vadd.f32 %v2342, 0.5
    %v2344 = vmul.f32 %v2343, %v2054
    %2346 = vrot.lane.b32.xlu0 %v2341, 64
    %v2347 = vpop.permute.xlu0 %2346
    %v2349 = vmul.f32 %v2343, %v2347
    %2351 = vrot.lane.b32.xlu0 %v2349, 32
    %v2352 = vpop.permute.xlu0 %2351
    %v2354 = vadd.f32 %v2344, %v2352
    %v2355 = vtanh.pop %v2354
    %2357 = vrot.lane.b32.xlu0 %v2355, 64
    %v2358 = vpop.permute.xlu0 %2357
    %v2360 = vmul.f32 %v2343, %v2358
    %2362 = vrot.lane.b32.xlu0 %v2360, 32
    %v2363 = vpop.permute.xlu0 %2362
    %v2364 = vsel %vm550, %v2363, 0
    %2366 = vmatprep.subr.mxu0 0.0
    %2367 = vmatpush1.msra.mxu0 %v174
    %2368 = vmatprep.subr.mxu0 0.0
    %2369 = vmatpush1.msra.mxu0 %v175
    %2370 = vmatprep.subr.mxu0 0.0
    %2371 = vmatpush1.msra.mxu0 %v176
    %2372 = vmatprep.subr.mxu0 0.0
    %2373 = vmatpush1.msra.mxu0 %v177
    %2374 = vmatprep.subr.mxu0 0.0
    %2375 = vmatpush1.msra.mxu0 0.0
    %2376 = vmatprep.subr.mxu0 0.0
    %2377 = vmatpush1.msra.mxu0 0.0
    %2378 = vmatprep.subr.mxu0 0.0
    %2379 = vmatpush1.msra.mxu0 0.0
    %2380 = vmatprep.subr.mxu0 0.0
    %2381 = vmatpush1.msra.mxu0 0.0
    %2382 = vmatprep.subr.mxu0 0.0
    %2383 = vmatpush1.msra.mxu0 0.0
    %2384 = vmatprep.subr.mxu0 0.0
    %2385 = vmatpush1.msra.mxu0 0.0
    %2386 = vmatprep.subr.mxu0 0.0
    %2387 = vmatpush1.msra.mxu0 0.0
    %2388 = vmatprep.subr.mxu0 0.0
    %2389 = vmatpush1.msra.mxu0 0.0
    %2390 = vmatprep.subr.mxu0 0.0
    %2391 = vmatpush1.msra.mxu0 0.0
    %2392 = vmatprep.subr.mxu0 0.0
    %2393 = vmatpush1.msra.mxu0 0.0
    %2394 = vmatprep.subr.mxu0 0.0
    %2395 = vmatpush1.msra.mxu0 0.0
    %2396 = vmatprep.subr.mxu0 0.0
    %2397 = vmatpush1.msra.mxu0 0.0
    %2398 = vmatprep.subr.mxu0 0.0
    %2399 = vmatpush1.msra.mxu0 0.0
    %2400 = vmatprep.subr.mxu0 0.0
    %2401 = vmatpush1.msra.mxu0 0.0
    %2402 = vmatprep.subr.mxu0 0.0
    %2403 = vmatpush1.msra.mxu0 0.0
    %2404 = vmatprep.subr.mxu0 0.0
    %2405 = vmatpush1.msra.mxu0 0.0
    %2406 = vmatprep.subr.mxu0 0.0
    %2407 = vmatpush1.msra.mxu0 0.0
    %2408 = vmatprep.subr.mxu0 0.0
    %2409 = vmatpush1.msra.mxu0 0.0
    %2410 = vmatprep.subr.mxu0 0.0
    %2411 = vmatpush1.msra.mxu0 0.0
    %2412 = vmatprep.subr.mxu0 0.0
    %2413 = vmatpush1.msra.mxu0 0.0
    %2414 = vmatprep.subr.mxu0 0.0
    %2415 = vmatpush1.msra.mxu0 0.0
    %2416 = vmatprep.subr.mxu0 0.0
    %2417 = vmatpush1.msra.mxu0 0.0
    %2418 = vmatprep.subr.mxu0 0.0
    %2419 = vmatpush1.msra.mxu0 0.0
    %2420 = vmatprep.subr.mxu0 0.0
    %2421 = vmatpush1.msra.mxu0 0.0
    %2422 = vmatprep.subr.mxu0 0.0
    %2423 = vmatpush1.msra.mxu0 0.0
    %2424 = vmatprep.subr.mxu0 0.0
    %2425 = vmatpush1.msra.mxu0 0.0
    %2426 = vmatprep.subr.mxu0 0.0
    %2427 = vmatpush1.msra.mxu0 0.0
    %2428 = vmatprep.subr.mxu0 0.0
    %2429 = vmatpush1.msra.mxu0 0.0
    %2430 = vmatprep.mubr.f32.mxu0 0.0
    %2431 = vmatmul.mubr.f32.gmra.mrb[0].mxu0 %v2364
    %v2432 = vpop.f32.mrb[0].mxu0
    %v2433 = vadd.f32 %v190, %v2432
    %v2434 = vpop.f32.mrb[0].mxu0
    %2435 = vdwg.mxu0
    %v2438 = vunpack.c.l.s4 1966171168
    %v2439 = vunpack.c.0.s8 %v2438
    %v2440 = vlaneseq
    %v2441 = vshrl.u32 %v2440, 7
    %v2442 = vsub.s32 %v2439, %v2441
    %v2443 = vrot.slane %v2433, %v2442
    %v2444 = vcombine.high %v2443, %v2443
    %v2446 = vunpack.c.l.s4 1966171168
    %v2447 = vunpack.c.0.s8 %v2446
    %v2448 = vlaneseq
    %v2449 = vshrl.u32 %v2448, 7
    %v2450 = vsub.s32 %v2447, %v2449
    %v2451 = vrot.slane %v2443, %v2450
    %v2453 = vunpack.c.l.s4 1966171168
    %v2454 = vunpack.c.0.s8 %v2453
    %v2455 = vlaneseq
    %v2456 = vshrl.u32 %v2455, 7
    %v2457 = vsub.s32 %v2454, %v2456
    %v2458 = vrot.slane %v2444, %v2457
    %2461 = vst [vmem:[#allocation20 + $0x4] sm:$0x1] %v2451
    %2462 = vst [vmem:[#allocation20 + $0xc] sm:$0x1] %v2458
    %s2463 = sld [smem:[#allocation3 + $0x4]]
    %p2464 = scmp.eq.s32.totalorder %s2463, 0
    // Predicated region
    $region106: #{tpu_custom_call.1} parent=1 // pred_check
      %p2465 = pneg %p2464
    $region107: #{tpu_custom_call.1} parent=1 // pred_check_branch
      %2467 = sbr.rel (%p2465) target = $region109
    $region108: #{tpu_custom_call.1} parent=1 // pred_region
      %vm2468 = vcmask 1041408
      %v2469 = vsel %vm2468, %v2433, -inf
      %2470 = vmax.xlane.f32.xlu0 %v2469
      %v2471 = vpop.xlane.xlu0 %2470
      %vm2472 = vcmp.eq.f32.partialorder %v2433, %v2471
      %v2473 = vsel %vm2472, %v193, 128
      %v2474 = vsel %vm2468, %v2473, 2147483647
      %v2475 = vand.u32 %v2474, 65535
      %v2476 = vshra.s32 %v2474, 16
      %v2477 = vcvt.s32.f32 %v2475
      %v2478 = vcvt.s32.f32 %v2476
      %2479 = vmin.xlane.f32.xlu0 %v2478
      %v2480 = vpop.xlane.xlu0 %2479
      %vm2481 = vcmp.eq.f32.partialorder %v2478, %v2480
      %v2482 = vsel %vm2481, %v2477, inf
      %2483 = vmin.xlane.f32.xlu0 %v2482
      %v2484 = vpop.xlane.xlu0 %2483
      %v2485 = vcvt.f32.s32 %v2484
      %v2486 = vcvt.f32.s32 %v2480
      %v2487 = vshll.u32 %v2486, 16
      %v2488 = vadd.s32 %v2487, %v2485
      %vm2489 = vcmp.eq.s32.totalorder %v2488, %v193
      %v2490 = vsel %vm2489, 1, 0
      %v2491 = vcvt.s32.f32 %v2490
      %2492 = vmatprep.subr.mxu0 0.0
      %2493 = vmatpush1.msra.mxu0 %v158
      %2494 = vmatprep.subr.mxu0 0.0
      %2495 = vmatpush1.msra.mxu0 %v159
      %2496 = vmatprep.subr.mxu0 0.0
      %2497 = vmatpush1.msra.mxu0 %v160
      %2498 = vmatprep.subr.mxu0 0.0
      %2499 = vmatpush1.msra.mxu0 %v161
      %2500 = vmatprep.subr.mxu0 0.0
      %2501 = vmatpush1.msra.mxu0 %v162
      %2502 = vmatprep.subr.mxu0 0.0
      %2503 = vmatpush1.msra.mxu0 %v163
      %2504 = vmatprep.subr.mxu0 0.0
      %2505 = vmatpush1.msra.mxu0 %v164
      %2506 = vmatprep.subr.mxu0 0.0
      %2507 = vmatpush1.msra.mxu0 %v165
      %2508 = vmatprep.subr.mxu0 0.0
      %2509 = vmatpush1.msra.mxu0 %v166
      %2510 = vmatprep.subr.mxu0 0.0
      %2511 = vmatpush1.msra.mxu0 %v167
      %2512 = vmatprep.subr.mxu0 0.0
      %2513 = vmatpush1.msra.mxu0 %v168
      %2514 = vmatprep.subr.mxu0 0.0
      %2515 = vmatpush1.msra.mxu0 %v169
      %2516 = vmatprep.subr.mxu0 0.0
      %2517 = vmatpush1.msra.mxu0 %v170
      %2518 = vmatprep.subr.mxu0 0.0
      %2519 = vmatpush1.msra.mxu0 %v171
      %2520 = vmatprep.subr.mxu0 0.0
      %2521 = vmatpush1.msra.mxu0 %v172
      %2522 = vmatprep.subr.mxu0 0.0
      %2523 = vmatpush1.msra.mxu0 %v173
      %2524 = vmatprep.subr.mxu0 0.0
      %2525 = vmatpush1.msra.mxu0 0.0
      %2526 = vmatprep.subr.mxu0 0.0
      %2527 = vmatpush1.msra.mxu0 0.0
      %2528 = vmatprep.subr.mxu0 0.0
      %2529 = vmatpush1.msra.mxu0 0.0
      %2530 = vmatprep.subr.mxu0 0.0
      %2531 = vmatpush1.msra.mxu0 0.0
      %2532 = vmatprep.subr.mxu0 0.0
      %2533 = vmatpush1.msra.mxu0 0.0
      %2534 = vmatprep.subr.mxu0 0.0
      %2535 = vmatpush1.msra.mxu0 0.0
      %2536 = vmatprep.subr.mxu0 0.0
      %2537 = vmatpush1.msra.mxu0 0.0
      %2538 = vmatprep.subr.mxu0 0.0
      %2539 = vmatpush1.msra.mxu0 0.0
      %2540 = vmatprep.subr.mxu0 0.0
      %2541 = vmatpush1.msra.mxu0 0.0
      %2542 = vmatprep.subr.mxu0 0.0
      %2543 = vmatpush1.msra.mxu0 0.0
      %2544 = vmatprep.subr.mxu0 0.0
      %2545 = vmatpush1.msra.mxu0 0.0
      %2546 = vmatprep.subr.mxu0 0.0
      %2547 = vmatpush1.msra.mxu0 0.0
      %2548 = vmatprep.subr.mxu0 0.0
      %2549 = vmatpush1.msra.mxu0 0.0
      %2550 = vmatprep.subr.mxu0 0.0
      %2551 = vmatpush1.msra.mxu0 0.0
      %2552 = vmatprep.subr.mxu0 0.0
      %2553 = vmatpush1.msra.mxu0 0.0
      %2554 = vmatprep.subr.mxu0 0.0
      %2555 = vmatpush1.msra.mxu0 0.0
      %2556 = vmatprep.mubr.f32.mxu0 0.0
      %2557 = vmatmul.mubr.f32.gmra.mrb[0].mxu0 %v2491
      %v2558 = vpop.f32.mrb[0].mxu0
      %v2559 = vadd.f32 %v183, %v2558
      %v2560 = vpop.f32.mrb[0].mxu0
      %2561 = vdwg.mxu0
      %2562 = vst [vmem:[#allocation2] sm:$0x3] %v2559
    $region109: #{tpu_custom_call.1} parent=1 // pred_fallthru
      _
    %s2563 = sld [smem:[#allocation3 + $0x4]]
    %p2564 = scmp.ne.s32.totalorder %s2563, 0
    // Predicated region
    $region110: #{tpu_custom_call.1} parent=1 // pred_check
      %p2565 = pneg %p2564
    $region111: #{tpu_custom_call.1} parent=1 // pred_check_branch
      %2567 = sbr.rel (%p2565) target = $region113
    $region112: #{tpu_custom_call.1} parent=1 // pred_region
      %2568 = vst [vmem:[#allocation2] sm:$0x3] %v547
    $region113: #{tpu_custom_call.1} parent=1 // pred_fallthru
      _
    %v2569 = vld [vmem:[#allocation2] sm:$0x3]
    %2570 = vmatprep.subr.mxu0 0.0
    %2571 = vmatpush1.msra.mxu0 %v154
    %2572 = vmatprep.subr.mxu0 0.0
    %2573 = vmatpush1.msra.mxu0 %v155
    %2574 = vmatprep.subr.mxu0 0.0
    %2575 = vmatpush1.msra.mxu0 %v156
    %2576 = vmatprep.subr.mxu0 0.0
    %2577 = vmatpush1.msra.mxu0 %v157
    %2578 = vmatprep.subr.mxu0 0.0
    %2579 = vmatpush1.msra.mxu0 0.0
    %2580 = vmatprep.subr.mxu0 0.0
    %2581 = vmatpush1.msra.mxu0 0.0
    %2582 = vmatprep.subr.mxu0 0.0
    %2583 = vmatpush1.msra.mxu0 0.0
    %2584 = vmatprep.subr.mxu0 0.0
    %2585 = vmatpush1.msra.mxu0 0.0
    %2586 = vmatprep.subr.mxu0 0.0
    %2587 = vmatpush1.msra.mxu0 0.0
    %2588 = vmatprep.subr.mxu0 0.0
    %2589 = vmatpush1.msra.mxu0 0.0
    %2590 = vmatprep.subr.mxu0 0.0
    %2591 = vmatpush1.msra.mxu0 0.0
    %2592 = vmatprep.subr.mxu0 0.0
    %2593 = vmatpush1.msra.mxu0 0.0
    %2594 = vmatprep.subr.mxu0 0.0
    %2595 = vmatpush1.msra.mxu0 0.0
    %2596 = vmatprep.subr.mxu0 0.0
    %2597 = vmatpush1.msra.mxu0 0.0
    %2598 = vmatprep.subr.mxu0 0.0
    %2599 = vmatpush1.msra.mxu0 0.0
    %2600 = vmatprep.subr.mxu0 0.0
    %2601 = vmatpush1.msra.mxu0 0.0
    %2602 = vmatprep.subr.mxu0 0.0
    %2603 = vmatpush1.msra.mxu0 0.0
    %2604 = vmatprep.subr.mxu0 0.0
    %2605 = vmatpush1.msra.mxu0 0.0
    %2606 = vmatprep.subr.mxu0 0.0
    %2607 = vmatpush1.msra.mxu0 0.0
    %2608 = vmatprep.subr.mxu0 0.0
    %2609 = vmatpush1.msra.mxu0 0.0
    %2610 = vmatprep.subr.mxu0 0.0
    %2611 = vmatpush1.msra.mxu0 0.0
    %2612 = vmatprep.subr.mxu0 0.0
    %2613 = vmatpush1.msra.mxu0 0.0
    %2614 = vmatprep.subr.mxu0 0.0
    %2615 = vmatpush1.msra.mxu0 0.0
    %2616 = vmatprep.subr.mxu0 0.0
    %2617 = vmatpush1.msra.mxu0 0.0
    %2618 = vmatprep.subr.mxu0 0.0
    %2619 = vmatpush1.msra.mxu0 0.0
    %2620 = vmatprep.subr.mxu0 0.0
    %2621 = vmatpush1.msra.mxu0 0.0
    %2622 = vmatprep.subr.mxu0 0.0
    %2623 = vmatpush1.msra.mxu0 0.0
    %2624 = vmatprep.subr.mxu0 0.0
    %2625 = vmatpush1.msra.mxu0 0.0
    %2626 = vmatprep.subr.mxu0 0.0
    %2627 = vmatpush1.msra.mxu0 0.0
    %2628 = vmatprep.subr.mxu0 0.0
    %2629 = vmatpush1.msra.mxu0 0.0
    %2630 = vmatprep.subr.mxu0 0.0
    %2631 = vmatpush1.msra.mxu0 0.0
    %2632 = vmatprep.subr.mxu0 0.0
    %2633 = vmatpush1.msra.mxu0 0.0
    %2634 = vmatprep.mubr.f32.mxu0 0.0
    %2635 = vmatmul.mubr.f32.gmra.mrb[0].mxu0 %v2364
    %v2636 = vpop.f32.mrb[0].mxu0
    %v2637 = vadd.f32 0.0, %v2636
    %v2638 = vpop.f32.mrb[0].mxu0
    %2639 = vdwg.mxu0
    %v2640 = vadd.f32 %v2569, %v2637
    %v2641 = vtanh.pop %v2640
    %v2642 = vmul.f32 %v2641, 0.5
    %v2643 = vadd.f32 %v2642, 0.5
    %v2644 = vmul.f32 %v2643, %v2354
    %2646 = vrot.lane.b32.xlu0 %v2641, 64
    %v2647 = vpop.permute.xlu0 %2646
    %v2649 = vmul.f32 %v2643, %v2647
    %2651 = vrot.lane.b32.xlu0 %v2649, 32
    %v2652 = vpop.permute.xlu0 %2651
    %v2654 = vadd.f32 %v2644, %v2652
    %v2655 = vtanh.pop %v2654
    %2657 = vrot.lane.b32.xlu0 %v2655, 64
    %v2658 = vpop.permute.xlu0 %2657
    %v2660 = vmul.f32 %v2643, %v2658
    %2662 = vrot.lane.b32.xlu0 %v2660, 32
    %v2663 = vpop.permute.xlu0 %2662
    %v2664 = vsel %vm550, %v2663, 0
    %2666 = vmatprep.subr.mxu0 0.0
    %2667 = vmatpush1.msra.mxu0 %v174
    %2668 = vmatprep.subr.mxu0 0.0
    %2669 = vmatpush1.msra.mxu0 %v175
    %2670 = vmatprep.subr.mxu0 0.0
    %2671 = vmatpush1.msra.mxu0 %v176
    %2672 = vmatprep.subr.mxu0 0.0
    %2673 = vmatpush1.msra.mxu0 %v177
    %2674 = vmatprep.subr.mxu0 0.0
    %2675 = vmatpush1.msra.mxu0 0.0
    %2676 = vmatprep.subr.mxu0 0.0
    %2677 = vmatpush1.msra.mxu0 0.0
    %2678 = vmatprep.subr.mxu0 0.0
    %2679 = vmatpush1.msra.mxu0 0.0
    %2680 = vmatprep.subr.mxu0 0.0
    %2681 = vmatpush1.msra.mxu0 0.0
    %2682 = vmatprep.subr.mxu0 0.0
    %2683 = vmatpush1.msra.mxu0 0.0
    %2684 = vmatprep.subr.mxu0 0.0
    %2685 = vmatpush1.msra.mxu0 0.0
    %2686 = vmatprep.subr.mxu0 0.0
    %2687 = vmatpush1.msra.mxu0 0.0
    %2688 = vmatprep.subr.mxu0 0.0
    %2689 = vmatpush1.msra.mxu0 0.0
    %2690 = vmatprep.subr.mxu0 0.0
    %2691 = vmatpush1.msra.mxu0 0.0
    %2692 = vmatprep.subr.mxu0 0.0
    %2693 = vmatpush1.msra.mxu0 0.0
    %2694 = vmatprep.subr.mxu0 0.0
    %2695 = vmatpush1.msra.mxu0 0.0
    %2696 = vmatprep.subr.mxu0 0.0
    %2697 = vmatpush1.msra.mxu0 0.0
    %2698 = vmatprep.subr.mxu0 0.0
    %2699 = vmatpush1.msra.mxu0 0.0
    %2700 = vmatprep.subr.mxu0 0.0
    %2701 = vmatpush1.msra.mxu0 0.0
    %2702 = vmatprep.subr.mxu0 0.0
    %2703 = vmatpush1.msra.mxu0 0.0
    %2704 = vmatprep.subr.mxu0 0.0
    %2705 = vmatpush1.msra.mxu0 0.0
    %2706 = vmatprep.subr.mxu0 0.0
    %2707 = vmatpush1.msra.mxu0 0.0
    %2708 = vmatprep.subr.mxu0 0.0
    %2709 = vmatpush1.msra.mxu0 0.0
    %2710 = vmatprep.subr.mxu0 0.0
    %2711 = vmatpush1.msra.mxu0 0.0
    %2712 = vmatprep.subr.mxu0 0.0
    %2713 = vmatpush1.msra.mxu0 0.0
    %2714 = vmatprep.subr.mxu0 0.0
    %2715 = vmatpush1.msra.mxu0 0.0
    %2716 = vmatprep.subr.mxu0 0.0
    %2717 = vmatpush1.msra.mxu0 0.0
    %2718 = vmatprep.subr.mxu0 0.0
    %2719 = vmatpush1.msra.mxu0 0.0
    %2720 = vmatprep.subr.mxu0 0.0
    %2721 = vmatpush1.msra.mxu0 0.0
    %2722 = vmatprep.subr.mxu0 0.0
    %2723 = vmatpush1.msra.mxu0 0.0
    %2724 = vmatprep.subr.mxu0 0.0
    %2725 = vmatpush1.msra.mxu0 0.0
    %2726 = vmatprep.subr.mxu0 0.0
    %2727 = vmatpush1.msra.mxu0 0.0
    %2728 = vmatprep.subr.mxu0 0.0
    %2729 = vmatpush1.msra.mxu0 0.0
    %2730 = vmatprep.mubr.f32.mxu0 0.0
    %2731 = vmatmul.mubr.f32.gmra.mrb[0].mxu0 %v2664
    %v2732 = vpop.f32.mrb[0].mxu0
    %v2733 = vadd.f32 %v190, %v2732
    %v2734 = vpop.f32.mrb[0].mxu0
    %2735 = vdwg.mxu0
    %v2738 = vunpack.c.l.s4 1966171168
    %v2739 = vunpack.c.0.s8 %v2738
    %v2740 = vlaneseq
    %v2741 = vshrl.u32 %v2740, 7
    %v2742 = vsub.s32 %v2739, %v2741
    %v2743 = vrot.slane %v2733, %v2742
    %v2744 = vcombine.high %v2743, %v2743
    %v2746 = vunpack.c.l.s4 1966171168
    %v2747 = vunpack.c.0.s8 %v2746
    %v2748 = vlaneseq
    %v2749 = vshrl.u32 %v2748, 7
    %v2750 = vsub.s32 %v2747, %v2749
    %v2751 = vrot.slane %v2743, %v2750
    %v2753 = vunpack.c.l.s4 1966171168
    %v2754 = vunpack.c.0.s8 %v2753
    %v2755 = vlaneseq
    %v2756 = vshrl.u32 %v2755, 7
    %v2757 = vsub.s32 %v2754, %v2756
    %v2758 = vrot.slane %v2744, %v2757
    %2761 = vst [vmem:[#allocation20 + $0x5] sm:$0x1] %v2751
    %2762 = vst [vmem:[#allocation20 + $0xd] sm:$0x1] %v2758
    %s2763 = sld [smem:[#allocation3 + $0x5]]
    %p2764 = scmp.eq.s32.totalorder %s2763, 0
    // Predicated region
    $region114: #{tpu_custom_call.1} parent=1 // pred_check
      %p2765 = pneg %p2764
    $region115: #{tpu_custom_call.1} parent=1 // pred_check_branch
      %2767 = sbr.rel (%p2765) target = $region117
    $region116: #{tpu_custom_call.1} parent=1 // pred_region
      %vm2768 = vcmask 1041408
      %v2769 = vsel %vm2768, %v2733, -inf
      %2770 = vmax.xlane.f32.xlu0 %v2769
      %v2771 = vpop.xlane.xlu0 %2770
      %vm2772 = vcmp.eq.f32.partialorder %v2733, %v2771
      %v2773 = vsel %vm2772, %v193, 128
      %v2774 = vsel %vm2768, %v2773, 2147483647
      %v2775 = vand.u32 %v2774, 65535
      %v2776 = vshra.s32 %v2774, 16
      %v2777 = vcvt.s32.f32 %v2775
      %v2778 = vcvt.s32.f32 %v2776
      %2779 = vmin.xlane.f32.xlu0 %v2778
      %v2780 = vpop.xlane.xlu0 %2779
      %vm2781 = vcmp.eq.f32.partialorder %v2778, %v2780
      %v2782 = vsel %vm2781, %v2777, inf
      %2783 = vmin.xlane.f32.xlu0 %v2782
      %v2784 = vpop.xlane.xlu0 %2783
      %v2785 = vcvt.f32.s32 %v2784
      %v2786 = vcvt.f32.s32 %v2780
      %v2787 = vshll.u32 %v2786, 16
      %v2788 = vadd.s32 %v2787, %v2785
      %vm2789 = vcmp.eq.s32.totalorder %v2788, %v193
      %v2790 = vsel %vm2789, 1, 0
      %v2791 = vcvt.s32.f32 %v2790
      %2792 = vmatprep.subr.mxu0 0.0
      %2793 = vmatpush1.msra.mxu0 %v158
      %2794 = vmatprep.subr.mxu0 0.0
      %2795 = vmatpush1.msra.mxu0 %v159
      %2796 = vmatprep.subr.mxu0 0.0
      %2797 = vmatpush1.msra.mxu0 %v160
      %2798 = vmatprep.subr.mxu0 0.0
      %2799 = vmatpush1.msra.mxu0 %v161
      %2800 = vmatprep.subr.mxu0 0.0
      %2801 = vmatpush1.msra.mxu0 %v162
      %2802 = vmatprep.subr.mxu0 0.0
      %2803 = vmatpush1.msra.mxu0 %v163
      %2804 = vmatprep.subr.mxu0 0.0
      %2805 = vmatpush1.msra.mxu0 %v164
      %2806 = vmatprep.subr.mxu0 0.0
      %2807 = vmatpush1.msra.mxu0 %v165
      %2808 = vmatprep.subr.mxu0 0.0
      %2809 = vmatpush1.msra.mxu0 %v166
      %2810 = vmatprep.subr.mxu0 0.0
      %2811 = vmatpush1.msra.mxu0 %v167
      %2812 = vmatprep.subr.mxu0 0.0
      %2813 = vmatpush1.msra.mxu0 %v168
      %2814 = vmatprep.subr.mxu0 0.0
      %2815 = vmatpush1.msra.mxu0 %v169
      %2816 = vmatprep.subr.mxu0 0.0
      %2817 = vmatpush1.msra.mxu0 %v170
      %2818 = vmatprep.subr.mxu0 0.0
      %2819 = vmatpush1.msra.mxu0 %v171
      %2820 = vmatprep.subr.mxu0 0.0
      %2821 = vmatpush1.msra.mxu0 %v172
      %2822 = vmatprep.subr.mxu0 0.0
      %2823 = vmatpush1.msra.mxu0 %v173
      %2824 = vmatprep.subr.mxu0 0.0
      %2825 = vmatpush1.msra.mxu0 0.0
      %2826 = vmatprep.subr.mxu0 0.0
      %2827 = vmatpush1.msra.mxu0 0.0
      %2828 = vmatprep.subr.mxu0 0.0
      %2829 = vmatpush1.msra.mxu0 0.0
      %2830 = vmatprep.subr.mxu0 0.0
      %2831 = vmatpush1.msra.mxu0 0.0
      %2832 = vmatprep.subr.mxu0 0.0
      %2833 = vmatpush1.msra.mxu0 0.0
      %2834 = vmatprep.subr.mxu0 0.0
      %2835 = vmatpush1.msra.mxu0 0.0
      %2836 = vmatprep.subr.mxu0 0.0
      %2837 = vmatpush1.msra.mxu0 0.0
      %2838 = vmatprep.subr.mxu0 0.0
      %2839 = vmatpush1.msra.mxu0 0.0
      %2840 = vmatprep.subr.mxu0 0.0
      %2841 = vmatpush1.msra.mxu0 0.0
      %2842 = vmatprep.subr.mxu0 0.0
      %2843 = vmatpush1.msra.mxu0 0.0
      %2844 = vmatprep.subr.mxu0 0.0
      %2845 = vmatpush1.msra.mxu0 0.0
      %2846 = vmatprep.subr.mxu0 0.0
      %2847 = vmatpush1.msra.mxu0 0.0
      %2848 = vmatprep.subr.mxu0 0.0
      %2849 = vmatpush1.msra.mxu0 0.0
      %2850 = vmatprep.subr.mxu0 0.0
      %2851 = vmatpush1.msra.mxu0 0.0
      %2852 = vmatprep.subr.mxu0 0.0
      %2853 = vmatpush1.msra.mxu0 0.0
      %2854 = vmatprep.subr.mxu0 0.0
      %2855 = vmatpush1.msra.mxu0 0.0
      %2856 = vmatprep.mubr.f32.mxu0 0.0
      %2857 = vmatmul.mubr.f32.gmra.mrb[0].mxu0 %v2791
      %v2858 = vpop.f32.mrb[0].mxu0
      %v2859 = vadd.f32 %v183, %v2858
      %v2860 = vpop.f32.mrb[0].mxu0
      %2861 = vdwg.mxu0
      %2862 = vst [vmem:[#allocation2] sm:$0x3] %v2859
    $region117: #{tpu_custom_call.1} parent=1 // pred_fallthru
      _
    %s2863 = sld [smem:[#allocation3 + $0x5]]
    %p2864 = scmp.ne.s32.totalorder %s2863, 0
    // Predicated region
    $region118: #{tpu_custom_call.1} parent=1 // pred_check
      %p2865 = pneg %p2864
    $region119: #{tpu_custom_call.1} parent=1 // pred_check_branch
      %2867 = sbr.rel (%p2865) target = $region121
    $region120: #{tpu_custom_call.1} parent=1 // pred_region
      %2868 = vst [vmem:[#allocation2 - $0x2] sm:$0xc] %v547
    $region121: #{tpu_custom_call.1} parent=1 // pred_fallthru
      _
    %v2869 = vld [vmem:[#allocation2] sm:$0x3]
    %2870 = vmatprep.subr.mxu0 0.0
    %2871 = vmatpush1.msra.mxu0 %v154
    %2872 = vmatprep.subr.mxu0 0.0
    %2873 = vmatpush1.msra.mxu0 %v155
    %2874 = vmatprep.subr.mxu0 0.0
    %2875 = vmatpush1.msra.mxu0 %v156
    %2876 = vmatprep.subr.mxu0 0.0
    %2877 = vmatpush1.msra.mxu0 %v157
    %2878 = vmatprep.subr.mxu0 0.0
    %2879 = vmatpush1.msra.mxu0 0.0
    %2880 = vmatprep.subr.mxu0 0.0
    %2881 = vmatpush1.msra.mxu0 0.0
    %2882 = vmatprep.subr.mxu0 0.0
    %2883 = vmatpush1.msra.mxu0 0.0
    %2884 = vmatprep.subr.mxu0 0.0
    %2885 = vmatpush1.msra.mxu0 0.0
    %2886 = vmatprep.subr.mxu0 0.0
    %2887 = vmatpush1.msra.mxu0 0.0
    %2888 = vmatprep.subr.mxu0 0.0
    %2889 = vmatpush1.msra.mxu0 0.0
    %2890 = vmatprep.subr.mxu0 0.0
    %2891 = vmatpush1.msra.mxu0 0.0
    %2892 = vmatprep.subr.mxu0 0.0
    %2893 = vmatpush1.msra.mxu0 0.0
    %2894 = vmatprep.subr.mxu0 0.0
    %2895 = vmatpush1.msra.mxu0 0.0
    %2896 = vmatprep.subr.mxu0 0.0
    %2897 = vmatpush1.msra.mxu0 0.0
    %2898 = vmatprep.subr.mxu0 0.0
    %2899 = vmatpush1.msra.mxu0 0.0
    %2900 = vmatprep.subr.mxu0 0.0
    %2901 = vmatpush1.msra.mxu0 0.0
    %2902 = vmatprep.subr.mxu0 0.0
    %2903 = vmatpush1.msra.mxu0 0.0
    %2904 = vmatprep.subr.mxu0 0.0
    %2905 = vmatpush1.msra.mxu0 0.0
    %2906 = vmatprep.subr.mxu0 0.0
    %2907 = vmatpush1.msra.mxu0 0.0
    %2908 = vmatprep.subr.mxu0 0.0
    %2909 = vmatpush1.msra.mxu0 0.0
    %2910 = vmatprep.subr.mxu0 0.0
    %2911 = vmatpush1.msra.mxu0 0.0
    %2912 = vmatprep.subr.mxu0 0.0
    %2913 = vmatpush1.msra.mxu0 0.0
    %2914 = vmatprep.subr.mxu0 0.0
    %2915 = vmatpush1.msra.mxu0 0.0
    %2916 = vmatprep.subr.mxu0 0.0
    %2917 = vmatpush1.msra.mxu0 0.0
    %2918 = vmatprep.subr.mxu0 0.0
    %2919 = vmatpush1.msra.mxu0 0.0
    %2920 = vmatprep.subr.mxu0 0.0
    %2921 = vmatpush1.msra.mxu0 0.0
    %2922 = vmatprep.subr.mxu0 0.0
    %2923 = vmatpush1.msra.mxu0 0.0
    %2924 = vmatprep.subr.mxu0 0.0
    %2925 = vmatpush1.msra.mxu0 0.0
    %2926 = vmatprep.subr.mxu0 0.0
    %2927 = vmatpush1.msra.mxu0 0.0
    %2928 = vmatprep.subr.mxu0 0.0
    %2929 = vmatpush1.msra.mxu0 0.0
    %2930 = vmatprep.subr.mxu0 0.0
    %2931 = vmatpush1.msra.mxu0 0.0
    %2932 = vmatprep.subr.mxu0 0.0
    %2933 = vmatpush1.msra.mxu0 0.0
    %2934 = vmatprep.mubr.f32.mxu0 0.0
    %2935 = vmatmul.mubr.f32.gmra.mrb[0].mxu0 %v2664
    %v2936 = vpop.f32.mrb[0].mxu0
    %v2937 = vadd.f32 0.0, %v2936
    %v2938 = vpop.f32.mrb[0].mxu0
    %2939 = vdwg.mxu0
    %v2940 = vadd.f32 %v2869, %v2937
    %v2941 = vtanh.pop %v2940
    %v2942 = vmul.f32 %v2941, 0.5
    %v2943 = vadd.f32 %v2942, 0.5
    %v2944 = vmul.f32 %v2943, %v2654
    %2946 = vrot.lane.b32.xlu0 %v2941, 64
    %v2947 = vpop.permute.xlu0 %2946
    %v2949 = vmul.f32 %v2943, %v2947
    %2951 = vrot.lane.b32.xlu0 %v2949, 32
    %v2952 = vpop.permute.xlu0 %2951
    %v2954 = vadd.f32 %v2944, %v2952
    %v2955 = vtanh.pop %v2954
    %2957 = vrot.lane.b32.xlu0 %v2955, 64
    %v2958 = vpop.permute.xlu0 %2957
    %v2960 = vmul.f32 %v2943, %v2958
    %2962 = vrot.lane.b32.xlu0 %v2960, 32
    %v2963 = vpop.permute.xlu0 %2962
    %v2964 = vsel %vm550, %v2963, 0
    %2966 = vmatprep.subr.mxu0 0.0
    %2967 = vmatpush1.msra.mxu0 %v174
    %2968 = vmatprep.subr.mxu0 0.0
    %2969 = vmatpush1.msra.mxu0 %v175
    %2970 = vmatprep.subr.mxu0 0.0
    %2971 = vmatpush1.msra.mxu0 %v176
    %2972 = vmatprep.subr.mxu0 0.0
    %2973 = vmatpush1.msra.mxu0 %v177
    %2974 = vmatprep.subr.mxu0 0.0
    %2975 = vmatpush1.msra.mxu0 0.0
    %2976 = vmatprep.subr.mxu0 0.0
    %2977 = vmatpush1.msra.mxu0 0.0
    %2978 = vmatprep.subr.mxu0 0.0
    %2979 = vmatpush1.msra.mxu0 0.0
    %2980 = vmatprep.subr.mxu0 0.0
    %2981 = vmatpush1.msra.mxu0 0.0
    %2982 = vmatprep.subr.mxu0 0.0
    %2983 = vmatpush1.msra.mxu0 0.0
    %2984 = vmatprep.subr.mxu0 0.0
    %2985 = vmatpush1.msra.mxu0 0.0
    %2986 = vmatprep.subr.mxu0 0.0
    %2987 = vmatpush1.msra.mxu0 0.0
    %2988 = vmatprep.subr.mxu0 0.0
    %2989 = vmatpush1.msra.mxu0 0.0
    %2990 = vmatprep.subr.mxu0 0.0
    %2991 = vmatpush1.msra.mxu0 0.0
    %2992 = vmatprep.subr.mxu0 0.0
    %2993 = vmatpush1.msra.mxu0 0.0
    %2994 = vmatprep.subr.mxu0 0.0
    %2995 = vmatpush1.msra.mxu0 0.0
    %2996 = vmatprep.subr.mxu0 0.0
    %2997 = vmatpush1.msra.mxu0 0.0
    %2998 = vmatprep.subr.mxu0 0.0
    %2999 = vmatpush1.msra.mxu0 0.0
    %3000 = vmatprep.subr.mxu0 0.0
    %3001 = vmatpush1.msra.mxu0 0.0
    %3002 = vmatprep.subr.mxu0 0.0
    %3003 = vmatpush1.msra.mxu0 0.0
    %3004 = vmatprep.subr.mxu0 0.0
    %3005 = vmatpush1.msra.mxu0 0.0
    %3006 = vmatprep.subr.mxu0 0.0
    %3007 = vmatpush1.msra.mxu0 0.0
    %3008 = vmatprep.subr.mxu0 0.0
    %3009 = vmatpush1.msra.mxu0 0.0
    %3010 = vmatprep.subr.mxu0 0.0
    %3011 = vmatpush1.msra.mxu0 0.0
    %3012 = vmatprep.subr.mxu0 0.0
    %3013 = vmatpush1.msra.mxu0 0.0
    %3014 = vmatprep.subr.mxu0 0.0
    %3015 = vmatpush1.msra.mxu0 0.0
    %3016 = vmatprep.subr.mxu0 0.0
    %3017 = vmatpush1.msra.mxu0 0.0
    %3018 = vmatprep.subr.mxu0 0.0
    %3019 = vmatpush1.msra.mxu0 0.0
    %3020 = vmatprep.subr.mxu0 0.0
    %3021 = vmatpush1.msra.mxu0 0.0
    %3022 = vmatprep.subr.mxu0 0.0
    %3023 = vmatpush1.msra.mxu0 0.0
    %3024 = vmatprep.subr.mxu0 0.0
    %3025 = vmatpush1.msra.mxu0 0.0
    %3026 = vmatprep.subr.mxu0 0.0
    %3027 = vmatpush1.msra.mxu0 0.0
    %3028 = vmatprep.subr.mxu0 0.0
    %3029 = vmatpush1.msra.mxu0 0.0
    %3030 = vmatprep.mubr.f32.mxu0 0.0
    %3031 = vmatmul.mubr.f32.gmra.mrb[0].mxu0 %v2964
    %v3032 = vpop.f32.mrb[0].mxu0
    %v3033 = vadd.f32 %v190, %v3032
    %v3034 = vpop.f32.mrb[0].mxu0
    %3035 = vdwg.mxu0
    %v3038 = vunpack.c.l.s4 1966171168
    %v3039 = vunpack.c.0.s8 %v3038
    %v3040 = vlaneseq
    %v3041 = vshrl.u32 %v3040, 7
    %v3042 = vsub.s32 %v3039, %v3041
    %v3043 = vrot.slane %v3033, %v3042
    %v3044 = vcombine.high %v3043, %v3043
    %v3046 = vunpack.c.l.s4 1966171168
    %v3047 = vunpack.c.0.s8 %v3046
    %v3048 = vlaneseq
    %v3049 = vshrl.u32 %v3048, 7
    %v3050 = vsub.s32 %v3047, %v3049
    %v3051 = vrot.slane %v3043, %v3050
    %v3053 = vunpack.c.l.s4 1966171168
    %v3054 = vunpack.c.0.s8 %v3053
    %v3055 = vlaneseq
    %v3056 = vshrl.u32 %v3055, 7
    %v3057 = vsub.s32 %v3054, %v3056
    %v3058 = vrot.slane %v3044, %v3057
    %3061 = vst [vmem:[#allocation20 + $0x6] sm:$0x1] %v3051
    %3062 = vst [vmem:[#allocation20 + $0xe] sm:$0x1] %v3058
    %s3063 = sld [smem:[#allocation3 + $0x6]]
    %p3064 = scmp.eq.s32.totalorder %s3063, 0
    // Predicated region
    $region122: #{tpu_custom_call.1} parent=1 // pred_check
      %p3065 = pneg %p3064
    $region123: #{tpu_custom_call.1} parent=1 // pred_check_branch
      %3067 = sbr.rel (%p3065) target = $region125
    $region124: #{tpu_custom_call.1} parent=1 // pred_region
      %vm3068 = vcmask 1041408
      %v3069 = vsel %vm3068, %v3033, -inf
      %3070 = vmax.xlane.f32.xlu0 %v3069
      %v3071 = vpop.xlane.xlu0 %3070
      %vm3072 = vcmp.eq.f32.partialorder %v3033, %v3071
      %v3073 = vsel %vm3072, %v193, 128
      %v3074 = vsel %vm3068, %v3073, 2147483647
      %v3075 = vand.u32 %v3074, 65535
      %v3076 = vshra.s32 %v3074, 16
      %v3077 = vcvt.s32.f32 %v3075
      %v3078 = vcvt.s32.f32 %v3076
      %3079 = vmin.xlane.f32.xlu0 %v3078
      %v3080 = vpop.xlane.xlu0 %3079
      %vm3081 = vcmp.eq.f32.partialorder %v3078, %v3080
      %v3082 = vsel %vm3081, %v3077, inf
      %3083 = vmin.xlane.f32.xlu0 %v3082
      %v3084 = vpop.xlane.xlu0 %3083
      %v3085 = vcvt.f32.s32 %v3084
      %v3086 = vcvt.f32.s32 %v3080
      %v3087 = vshll.u32 %v3086, 16
      %v3088 = vadd.s32 %v3087, %v3085
      %vm3089 = vcmp.eq.s32.totalorder %v3088, %v193
      %v3090 = vsel %vm3089, 1, 0
      %v3091 = vcvt.s32.f32 %v3090
      %3092 = vmatprep.subr.mxu0 0.0
      %3093 = vmatpush1.msra.mxu0 %v158
      %3094 = vmatprep.subr.mxu0 0.0
      %3095 = vmatpush1.msra.mxu0 %v159
      %3096 = vmatprep.subr.mxu0 0.0
      %3097 = vmatpush1.msra.mxu0 %v160
      %3098 = vmatprep.subr.mxu0 0.0
      %3099 = vmatpush1.msra.mxu0 %v161
      %3100 = vmatprep.subr.mxu0 0.0
      %3101 = vmatpush1.msra.mxu0 %v162
      %3102 = vmatprep.subr.mxu0 0.0
      %3103 = vmatpush1.msra.mxu0 %v163
      %3104 = vmatprep.subr.mxu0 0.0
      %3105 = vmatpush1.msra.mxu0 %v164
      %3106 = vmatprep.subr.mxu0 0.0
      %3107 = vmatpush1.msra.mxu0 %v165
      %3108 = vmatprep.subr.mxu0 0.0
      %3109 = vmatpush1.msra.mxu0 %v166
      %3110 = vmatprep.subr.mxu0 0.0
      %3111 = vmatpush1.msra.mxu0 %v167
      %3112 = vmatprep.subr.mxu0 0.0
      %3113 = vmatpush1.msra.mxu0 %v168
      %3114 = vmatprep.subr.mxu0 0.0
      %3115 = vmatpush1.msra.mxu0 %v169
      %3116 = vmatprep.subr.mxu0 0.0
      %3117 = vmatpush1.msra.mxu0 %v170
      %3118 = vmatprep.subr.mxu0 0.0
      %3119 = vmatpush1.msra.mxu0 %v171
      %3120 = vmatprep.subr.mxu0 0.0
      %3121 = vmatpush1.msra.mxu0 %v172
      %3122 = vmatprep.subr.mxu0 0.0
      %3123 = vmatpush1.msra.mxu0 %v173
      %3124 = vmatprep.subr.mxu0 0.0
      %3125 = vmatpush1.msra.mxu0 0.0
      %3126 = vmatprep.subr.mxu0 0.0
      %3127 = vmatpush1.msra.mxu0 0.0
      %3128 = vmatprep.subr.mxu0 0.0
      %3129 = vmatpush1.msra.mxu0 0.0
      %3130 = vmatprep.subr.mxu0 0.0
      %3131 = vmatpush1.msra.mxu0 0.0
      %3132 = vmatprep.subr.mxu0 0.0
      %3133 = vmatpush1.msra.mxu0 0.0
      %3134 = vmatprep.subr.mxu0 0.0
      %3135 = vmatpush1.msra.mxu0 0.0
      %3136 = vmatprep.subr.mxu0 0.0
      %3137 = vmatpush1.msra.mxu0 0.0
      %3138 = vmatprep.subr.mxu0 0.0
      %3139 = vmatpush1.msra.mxu0 0.0
      %3140 = vmatprep.subr.mxu0 0.0
      %3141 = vmatpush1.msra.mxu0 0.0
      %3142 = vmatprep.subr.mxu0 0.0
      %3143 = vmatpush1.msra.mxu0 0.0
      %3144 = vmatprep.subr.mxu0 0.0
      %3145 = vmatpush1.msra.mxu0 0.0
      %3146 = vmatprep.subr.mxu0 0.0
      %3147 = vmatpush1.msra.mxu0 0.0
      %3148 = vmatprep.subr.mxu0 0.0
      %3149 = vmatpush1.msra.mxu0 0.0
      %3150 = vmatprep.subr.mxu0 0.0
      %3151 = vmatpush1.msra.mxu0 0.0
      %3152 = vmatprep.subr.mxu0 0.0
      %3153 = vmatpush1.msra.mxu0 0.0
      %3154 = vmatprep.subr.mxu0 0.0
      %3155 = vmatpush1.msra.mxu0 0.0
      %3156 = vmatprep.mubr.f32.mxu0 0.0
      %3157 = vmatmul.mubr.f32.gmra.mrb[0].mxu0 %v3091
      %v3158 = vpop.f32.mrb[0].mxu0
      %v3159 = vadd.f32 %v183, %v3158
      %v3160 = vpop.f32.mrb[0].mxu0
      %3161 = vdwg.mxu0
      %3162 = vst [vmem:[#allocation2] sm:$0x3] %v3159
    $region125: #{tpu_custom_call.1} parent=1 // pred_fallthru
      _
    %s3163 = sld [smem:[#allocation3 + $0x6]]
    %p3164 = scmp.ne.s32.totalorder %s3163, 0
    // Predicated region
    $region126: #{tpu_custom_call.1} parent=1 // pred_check
      %p3165 = pneg %p3164
    $region127: #{tpu_custom_call.1} parent=1 // pred_check_branch
      %3167 = sbr.rel (%p3165) target = $region129
    $region128: #{tpu_custom_call.1} parent=1 // pred_region
      %3168 = vst [vmem:[#allocation2 - $0x4] sm:$0x30] %v547
    $region129: #{tpu_custom_call.1} parent=1 // pred_fallthru
      _
    %v3169 = vld [vmem:[#allocation2] sm:$0x3]
    %3170 = vmatprep.subr.mxu0 0.0
    %3171 = vmatpush1.msra.mxu0 %v154
    %3172 = vmatprep.subr.mxu0 0.0
    %3173 = vmatpush1.msra.mxu0 %v155
    %3174 = vmatprep.subr.mxu0 0.0
    %3175 = vmatpush1.msra.mxu0 %v156
    %3176 = vmatprep.subr.mxu0 0.0
    %3177 = vmatpush1.msra.mxu0 %v157
    %3178 = vmatprep.subr.mxu0 0.0
    %3179 = vmatpush1.msra.mxu0 0.0
    %3180 = vmatprep.subr.mxu0 0.0
    %3181 = vmatpush1.msra.mxu0 0.0
    %3182 = vmatprep.subr.mxu0 0.0
    %3183 = vmatpush1.msra.mxu0 0.0
    %3184 = vmatprep.subr.mxu0 0.0
    %3185 = vmatpush1.msra.mxu0 0.0
    %3186 = vmatprep.subr.mxu0 0.0
    %3187 = vmatpush1.msra.mxu0 0.0
    %3188 = vmatprep.subr.mxu0 0.0
    %3189 = vmatpush1.msra.mxu0 0.0
    %3190 = vmatprep.subr.mxu0 0.0
    %3191 = vmatpush1.msra.mxu0 0.0
    %3192 = vmatprep.subr.mxu0 0.0
    %3193 = vmatpush1.msra.mxu0 0.0
    %3194 = vmatprep.subr.mxu0 0.0
    %3195 = vmatpush1.msra.mxu0 0.0
    %3196 = vmatprep.subr.mxu0 0.0
    %3197 = vmatpush1.msra.mxu0 0.0
    %3198 = vmatprep.subr.mxu0 0.0
    %3199 = vmatpush1.msra.mxu0 0.0
    %3200 = vmatprep.subr.mxu0 0.0
    %3201 = vmatpush1.msra.mxu0 0.0
    %3202 = vmatprep.subr.mxu0 0.0
    %3203 = vmatpush1.msra.mxu0 0.0
    %3204 = vmatprep.subr.mxu0 0.0
    %3205 = vmatpush1.msra.mxu0 0.0
    %3206 = vmatprep.subr.mxu0 0.0
    %3207 = vmatpush1.msra.mxu0 0.0
    %3208 = vmatprep.subr.mxu0 0.0
    %3209 = vmatpush1.msra.mxu0 0.0
    %3210 = vmatprep.subr.mxu0 0.0
    %3211 = vmatpush1.msra.mxu0 0.0
    %3212 = vmatprep.subr.mxu0 0.0
    %3213 = vmatpush1.msra.mxu0 0.0
    %3214 = vmatprep.subr.mxu0 0.0
    %3215 = vmatpush1.msra.mxu0 0.0
    %3216 = vmatprep.subr.mxu0 0.0
    %3217 = vmatpush1.msra.mxu0 0.0
    %3218 = vmatprep.subr.mxu0 0.0
    %3219 = vmatpush1.msra.mxu0 0.0
    %3220 = vmatprep.subr.mxu0 0.0
    %3221 = vmatpush1.msra.mxu0 0.0
    %3222 = vmatprep.subr.mxu0 0.0
    %3223 = vmatpush1.msra.mxu0 0.0
    %3224 = vmatprep.subr.mxu0 0.0
    %3225 = vmatpush1.msra.mxu0 0.0
    %3226 = vmatprep.subr.mxu0 0.0
    %3227 = vmatpush1.msra.mxu0 0.0
    %3228 = vmatprep.subr.mxu0 0.0
    %3229 = vmatpush1.msra.mxu0 0.0
    %3230 = vmatprep.subr.mxu0 0.0
    %3231 = vmatpush1.msra.mxu0 0.0
    %3232 = vmatprep.subr.mxu0 0.0
    %3233 = vmatpush1.msra.mxu0 0.0
    %3234 = vmatprep.mubr.f32.mxu0 0.0
    %3235 = vmatmul.mubr.f32.gmra.mrb[0].mxu0 %v2964
    %v3236 = vpop.f32.mrb[0].mxu0
    %v3237 = vadd.f32 0.0, %v3236
    %v3238 = vpop.f32.mrb[0].mxu0
    %3239 = vdwg.mxu0
    %v3240 = vadd.f32 %v3169, %v3237
    %v3241 = vtanh.pop %v3240
    %v3242 = vmul.f32 %v3241, 0.5
    %v3243 = vadd.f32 %v3242, 0.5
    %v3244 = vmul.f32 %v3243, %v2954
    %3246 = vrot.lane.b32.xlu0 %v3241, 64
    %v3247 = vpop.permute.xlu0 %3246
    %v3249 = vmul.f32 %v3243, %v3247
    %3251 = vrot.lane.b32.xlu0 %v3249, 32
    %v3252 = vpop.permute.xlu0 %3251
    %v3254 = vadd.f32 %v3244, %v3252
    %v3255 = vtanh.pop %v3254
    %3257 = vrot.lane.b32.xlu0 %v3255, 64
    %v3258 = vpop.permute.xlu0 %3257
    %v3260 = vmul.f32 %v3243, %v3258
    %3262 = vrot.lane.b32.xlu0 %v3260, 32
    %v3263 = vpop.permute.xlu0 %3262
    %v3264 = vsel %vm550, %v3263, 0
    %3266 = vmatprep.subr.mxu0 0.0
    %3267 = vmatpush1.msra.mxu0 %v174
    %3268 = vmatprep.subr.mxu0 0.0
    %3269 = vmatpush1.msra.mxu0 %v175
    %3270 = vmatprep.subr.mxu0 0.0
    %3271 = vmatpush1.msra.mxu0 %v176
    %3272 = vmatprep.subr.mxu0 0.0
    %3273 = vmatpush1.msra.mxu0 %v177
    %3274 = vmatprep.subr.mxu0 0.0
    %3275 = vmatpush1.msra.mxu0 0.0
    %3276 = vmatprep.subr.mxu0 0.0
    %3277 = vmatpush1.msra.mxu0 0.0
    %3278 = vmatprep.subr.mxu0 0.0
    %3279 = vmatpush1.msra.mxu0 0.0
    %3280 = vmatprep.subr.mxu0 0.0
    %3281 = vmatpush1.msra.mxu0 0.0
    %3282 = vmatprep.subr.mxu0 0.0
    %3283 = vmatpush1.msra.mxu0 0.0
    %3284 = vmatprep.subr.mxu0 0.0
    %3285 = vmatpush1.msra.mxu0 0.0
    %3286 = vmatprep.subr.mxu0 0.0
    %3287 = vmatpush1.msra.mxu0 0.0
    %3288 = vmatprep.subr.mxu0 0.0
    %3289 = vmatpush1.msra.mxu0 0.0
    %3290 = vmatprep.subr.mxu0 0.0
    %3291 = vmatpush1.msra.mxu0 0.0
    %3292 = vmatprep.subr.mxu0 0.0
    %3293 = vmatpush1.msra.mxu0 0.0
    %3294 = vmatprep.subr.mxu0 0.0
    %3295 = vmatpush1.msra.mxu0 0.0
    %3296 = vmatprep.subr.mxu0 0.0
    %3297 = vmatpush1.msra.mxu0 0.0
    %3298 = vmatprep.subr.mxu0 0.0
    %3299 = vmatpush1.msra.mxu0 0.0
    %3300 = vmatprep.subr.mxu0 0.0
    %3301 = vmatpush1.msra.mxu0 0.0
    %3302 = vmatprep.subr.mxu0 0.0
    %3303 = vmatpush1.msra.mxu0 0.0
    %3304 = vmatprep.subr.mxu0 0.0
    %3305 = vmatpush1.msra.mxu0 0.0
    %3306 = vmatprep.subr.mxu0 0.0
    %3307 = vmatpush1.msra.mxu0 0.0
    %3308 = vmatprep.subr.mxu0 0.0
    %3309 = vmatpush1.msra.mxu0 0.0
    %3310 = vmatprep.subr.mxu0 0.0
    %3311 = vmatpush1.msra.mxu0 0.0
    %3312 = vmatprep.subr.mxu0 0.0
    %3313 = vmatpush1.msra.mxu0 0.0
    %3314 = vmatprep.subr.mxu0 0.0
    %3315 = vmatpush1.msra.mxu0 0.0
    %3316 = vmatprep.subr.mxu0 0.0
    %3317 = vmatpush1.msra.mxu0 0.0
    %3318 = vmatprep.subr.mxu0 0.0
    %3319 = vmatpush1.msra.mxu0 0.0
    %3320 = vmatprep.subr.mxu0 0.0
    %3321 = vmatpush1.msra.mxu0 0.0
    %3322 = vmatprep.subr.mxu0 0.0
    %3323 = vmatpush1.msra.mxu0 0.0
    %3324 = vmatprep.subr.mxu0 0.0
    %3325 = vmatpush1.msra.mxu0 0.0
    %3326 = vmatprep.subr.mxu0 0.0
    %3327 = vmatpush1.msra.mxu0 0.0
    %3328 = vmatprep.subr.mxu0 0.0
    %3329 = vmatpush1.msra.mxu0 0.0
    %3330 = vmatprep.mubr.f32.mxu0 0.0
    %3331 = vmatmul.mubr.f32.gmra.mrb[0].mxu0 %v3264
    %v3332 = vpop.f32.mrb[0].mxu0
    %v3333 = vadd.f32 %v190, %v3332
    %v3334 = vpop.f32.mrb[0].mxu0
    %3335 = vdwg.mxu0
    %v3338 = vunpack.c.l.s4 1966171168
    %v3339 = vunpack.c.0.s8 %v3338
    %v3340 = vlaneseq
    %v3341 = vshrl.u32 %v3340, 7
    %v3342 = vsub.s32 %v3339, %v3341
    %v3343 = vrot.slane %v3333, %v3342
    %v3344 = vcombine.high %v3343, %v3343
    %v3346 = vunpack.c.l.s4 1966171168
    %v3347 = vunpack.c.0.s8 %v3346
    %v3348 = vlaneseq
    %v3349 = vshrl.u32 %v3348, 7
    %v3350 = vsub.s32 %v3347, %v3349
    %v3351 = vrot.slane %v3343, %v3350
    %v3353 = vunpack.c.l.s4 1966171168
    %v3354 = vunpack.c.0.s8 %v3353
    %v3355 = vlaneseq
    %v3356 = vshrl.u32 %v3355, 7
    %v3357 = vsub.s32 %v3354, %v3356
    %v3358 = vrot.slane %v3344, %v3357
    %3361 = vst [vmem:[#allocation20 + $0x7] sm:$0x1] %v3351
    %3362 = vst [vmem:[#allocation20 + $0xf] sm:$0x1] %v3358
    // Predicated region
    $region130: #{tpu_custom_call.1} parent=1 // pred_check
      _
    $region131: #{tpu_custom_call.1} parent=1 // pred_check_branch
      %3364 = sbr.rel (0) target = $region133
    $region132: #{tpu_custom_call.1} parent=1 // pred_region
      %s3366 = ssub.s32 256, 256
      %3367 = vsyncadd [#allocation5], %s3366
      %s3368 = sshll.u32 [#allocation20], 4
      %s3369 = int_to_ptr.vmem [resolvable:$true] %s3368
      %3374 = dma.vmem_to_hbm [thread:$0]  %s3369, 256, %s11, [#allocation5], 128, 128, 8
    $region133: #{tpu_custom_call.1} parent=1 // pred_fallthru
      _
    // Predicated region
    $region134: #{tpu_custom_call.1} parent=1 // pred_check
      _
    $region135: #{tpu_custom_call.1} parent=1 // pred_check_branch
      %3376 = sbr.rel (0) target = $region137
    $region136: #{tpu_custom_call.1} parent=1 // pred_region
      %3377 = dma.done [#allocation5], 256
    $region137: #{tpu_custom_call.1} parent=1 // pred_fallthru
      _
    %3378 = vsyncpa [#allocation4], 1
    %3379 = vsyncpa [#allocation13], 1
    %3380 = vsyncpa [#allocation16], 1
    %3381 = vsyncpa [#allocation19], 1
    %3382 = vsyncpa [#allocation5], 1
    %3383 = vsyncpa [#allocation6], 1
    %3384 = vsyncpa [#allocation10], 1
    %3385 = vsyncpa [#allocation7], 1

</llo_original>
